<compile_context>
chip_gen: v7x
topology: tpu7x:2x2x1
jax: 0.10.0
libtpu: 0.0.40
codegen_flags: <defaults>
</compile_context>

<pallas_src>
import math

import jax
import jax.numpy as jnp
from jax.experimental import pallas as pl
from jax.experimental.pallas import tpu as pltpu

EXPAND = 1
SHRINK = 5
LEAKY_SLOPE = 0.01  # nn.LeakyReLU default negative_slope


def bmm_kernel(a_ref, b_ref, x_ref):
    # a_ref: (K, n1, r)  b_ref: (K, r, n2)  x_ref: (K, n1, n2)
    # Single batched matmul over k; whole problem fits VMEM on all generations.
    x_ref[...] = jnp.einsum(
        "kir,krj->kij", a_ref[...], b_ref[...],
        preferred_element_type=jnp.float32)


def mlp_kernel(w1_ref, w2_ref, xf_ref, o_ref):
    # xf_ref: (K, TP)  w1_ref: (K, K)  w2_ref: (n3, K)  o_ref: (n3, TP)
    # h[m, p] = sum_k W1[m, k] * xf[k, p]   (== (y @ W1.T) in the permuted layout)
    h = jnp.dot(w1_ref[...], xf_ref[...], preferred_element_type=jnp.float32)
    h = jnp.where(h >= 0, h, LEAKY_SLOPE * h)  # LeakyReLU(0.01)
    # out[n, p] = sum_m W2[n, m] * h[m, p]  (== (h @ W2.T) in the permuted layout)
    o_ref[...] = jnp.dot(w2_ref[...], h, preferred_element_type=jnp.float32)


def _pick_tile_p(P):
    # One lane-dense block when small; 128-multiple tiles once P would blow
    # through double-buffered VMEM on v7x at scaled HLRTF sizes.
    if P <= 4096:
        return P
    for t in (4096, 2048, 1024, 512, 256, 128):
        if P % t == 0:
            return t
    return P  # fall back to a single full block


def y_net_forward(a_hat, b_hat, w1, w2):
    K, n1, r = a_hat.shape
    _, _, n2 = b_hat.shape
    n3 = w2.shape[0]
    P = n1 * n2

    # ---- Stage 1: single-invocation batched matmul  X[k] = A_hat[k] @ B_hat[k] ----
    x = pl.pallas_call(
        bmm_kernel,
        out_shape=jax.ShapeDtypeStruct((K, n1, n2), jnp.float32),
        cost_estimate=pl.CostEstimate(
            flops=2 * K * n1 * r * n2,
            transcendentals=0,
            bytes_accessed=4 * (K * n1 * r + K * r * n2 + K * n1 * n2)),
    )(a_hat, b_hat)

    # glue: contiguous reshape in HBM (free at HLO level); xf[k, i*n2 + j] == x[k, i, j]
    xf = x.reshape(K, P)

    # ---- Stage 2: 2-layer channel MLP, lane-dense over P ----
    tile_p = _pick_tile_p(P)
    out_kp = pl.pallas_call(
        mlp_kernel,
        out_shape=jax.ShapeDtypeStruct((n3, P), jnp.float32),
        grid=(P // tile_p,),
        in_specs=[
            pl.BlockSpec((K, K), lambda p: (0, 0)),        # W1 resident
            pl.BlockSpec((n3, K), lambda p: (0, 0)),       # W2 resident
            pl.BlockSpec((K, tile_p), lambda p: (0, p)),   # xf tile (lane-dense)
        ],
        out_specs=pl.BlockSpec((n3, tile_p), lambda p: (0, p)),
        compiler_params=pltpu.CompilerParams(
            dimension_semantics=("parallel",)),
        cost_estimate=pl.CostEstimate(
            flops=2 * K * K * P + 2 * n3 * K * P,
            transcendentals=0,
            bytes_accessed=4 * (K * K + n3 * K + K * P + n3 * P)),
    )(w1, w2, xf)

    # glue: (n3, n1*n2) -> (n1, n2, n3), matching permute_change(1,2,0) + Linear output
    return out_kp.reshape(n3, n1, n2).transpose(1, 2, 0)


if __name__ == "__main__":
    # Small shapes consistent with the module (expand=1, shrink=5).
    n1, n2, n3 = 16, 40, 32
    K = n3 * EXPAND          # 32
    r = n2 // SHRINK         # 8

    key = jax.random.PRNGKey(0)
    k1, k2, k3, k4 = jax.random.split(key, 4)

    # reset_parameters: uniform(-stdv, stdv), stdv = 1/sqrt(A_hat.size(0)) = 1/sqrt(K)
    stdv = 1.0 / math.sqrt(K)
    a_hat = jax.random.uniform(k1, (K, n1, r), jnp.float32, -stdv, stdv)
    b_hat = jax.random.uniform(k2, (K, r, n2), jnp.float32, -stdv, stdv)

    # nn.Linear default init bound = 1/sqrt(fan_in) = 1/sqrt(K) (deterministic synthetic init)
    bound = 1.0 / math.sqrt(K)
    w1 = jax.random.uniform(k3, (K, K), jnp.float32, -bound, bound)   # Linear(K, K, bias=False)
    w2 = jax.random.uniform(k4, (n3, K), jnp.float32, -bound, bound)  # Linear(K, n3, bias=False)

    out = jax.block_until_ready(jax.jit(y_net_forward)(a_hat, b_hat, w1, w2))
    assert out.shape == (n1, n2, n3), out.shape

    # Pure-JAX reference check
    x_ref = jnp.einsum("kir,krj->kij", a_hat, b_hat)
    y_ref = jnp.transpose(x_ref, (1, 2, 0))
    h_ref = y_ref @ w1.T
    h_ref = jnp.where(h_ref >= 0, h_ref, LEAKY_SLOPE * h_ref)
    ref = h_ref @ w2.T
    assert jnp.allclose(out, ref, atol=1e-4, rtol=1e-4), float(jnp.max(jnp.abs(out - ref)))

    print("KERNEL_OK")
</pallas_src>

<mosaic_0001>
module attributes {stable_mosaic.version = 11 : i64} {
  func.func @bmm_kernel(%arg0: memref<32x16x8xf32, #tpu.memory_space<vmem>>, %arg1: memref<32x8x40xf32, #tpu.memory_space<vmem>>, %arg2: memref<32x16x40xf32, #tpu.memory_space<vmem>>) attributes {dimension_semantics = [], scalar_prefetch = 0 : i64, scratch_operands = 0 : i64, tpu.core_type = #tpu.core_type<tc>} {
    %c0 = arith.constant 0 : index
    %c0_0 = arith.constant 0 : index
    %c0_1 = arith.constant 0 : index
    %0 = vector.load %arg0[%c0, %c0_0, %c0_1] : memref<32x16x8xf32, #tpu.memory_space<vmem>>, vector<32x16x8xf32>
    %c0_2 = arith.constant 0 : index
    %c0_3 = arith.constant 0 : index
    %c0_4 = arith.constant 0 : index
    %1 = vector.load %arg1[%c0_2, %c0_3, %c0_4] : memref<32x8x40xf32, #tpu.memory_space<vmem>>, vector<32x8x40xf32>
    "tpu.trace_start"() <{level = 10 : i32, message = "kir,krj->kij"}> : () -> ()
    %cst = arith.constant dense<0.000000e+00> : vector<32x16x40xf32>
    %2 = tpu.matmul %0, %1, %cst {dimension_numbers = #tpu.dot_dimension_numbers<[2], [1], [1], [2], [0, 0, 0, 1, 1, 2], [0], [0]>} : vector<32x16x8xf32>, vector<32x8x40xf32>, vector<32x16x40xf32> -> vector<32x16x40xf32>
    "tpu.trace_stop"() : () -> ()
    %c0_5 = arith.constant 0 : index
    %c0_6 = arith.constant 0 : index
    %c0_7 = arith.constant 0 : index
    %3 = vector.load %arg2[%c0_5, %c0_6, %c0_7] : memref<32x16x40xf32, #tpu.memory_space<vmem>>, vector<32x16x40xf32>
    tpu.vector_store %arg2[%c0_5, %c0_6, %c0_7], %2 {strides = array<i32>} : memref<32x16x40xf32, #tpu.memory_space<vmem>>, vector<32x16x40xf32>,
    return
  }
}

module attributes {stable_mosaic.version = 11 : i64} {
  func.func @mlp_kernel(%arg0: i32, %arg1: memref<32x32xf32, #tpu.memory_space<vmem>>, %arg2: memref<32x32xf32, #tpu.memory_space<vmem>>, %arg3: memref<32x640xf32, #tpu.memory_space<vmem>>, %arg4: memref<32x640xf32, #tpu.memory_space<vmem>>) attributes {dimension_semantics = [#tpu.dimension_semantics<parallel>], iteration_bounds = array<i64: 1>, scalar_prefetch = 0 : i64, scratch_operands = 0 : i64, tpu.core_type = #tpu.core_type<tc>, window_params = [{pipeline_mode = #tpu.pipeline_mode<synchronous>, transform_indices = @transform_0, window_bounds = array<i64: 32, 32>}, {pipeline_mode = #tpu.pipeline_mode<synchronous>, transform_indices = @transform_1, window_bounds = array<i64: 32, 32>}, {transform_indices = @transform_2, window_bounds = array<i64: 32, 640>}, {transform_indices = @transform_3, window_bounds = array<i64: 32, 640>}]} {
    %c0 = arith.constant 0 : index
    %c0_0 = arith.constant 0 : index
    %0 = vector.load %arg1[%c0, %c0_0] : memref<32x32xf32, #tpu.memory_space<vmem>>, vector<32x32xf32>
    %c0_1 = arith.constant 0 : index
    %c0_2 = arith.constant 0 : index
    %1 = vector.load %arg3[%c0_1, %c0_2] : memref<32x640xf32, #tpu.memory_space<vmem>>, vector<32x640xf32>
    %cst = arith.constant dense<0.000000e+00> : vector<32x640xf32>
    %2 = tpu.matmul %0, %1, %cst {dimension_numbers = #tpu.dot_dimension_numbers<[1], [0], [0], [1], [0, 0, 1, 1], [], []>} : vector<32x32xf32>, vector<32x640xf32>, vector<32x640xf32> -> vector<32x640xf32>
    %cst_3 = arith.constant 0.000000e+00 : f32
    %3 = vector.broadcast %cst_3 : f32 to vector<32x640xf32>
    %4 = arith.cmpf oge, %2, %3 : vector<32x640xf32>
    %cst_4 = arith.constant 0.00999999977 : f32
    %5 = vector.broadcast %cst_4 : f32 to vector<32x640xf32>
    %6 = arith.mulf %5, %2 : vector<32x640xf32>
    %7 = arith.select %4, %2, %6 : vector<32x640xi1>, vector<32x640xf32>
    %c0_5 = arith.constant 0 : index
    %c0_6 = arith.constant 0 : index
    %8 = vector.load %arg2[%c0_5, %c0_6] : memref<32x32xf32, #tpu.memory_space<vmem>>, vector<32x32xf32>
    %cst_7 = arith.constant dense<0.000000e+00> : vector<32x640xf32>
    %9 = tpu.matmul %8, %7, %cst_7 {dimension_numbers = #tpu.dot_dimension_numbers<[1], [0], [0], [1], [0, 0, 1, 1], [], []>} : vector<32x32xf32>, vector<32x640xf32>, vector<32x640xf32> -> vector<32x640xf32>
    %c0_8 = arith.constant 0 : index
    %c0_9 = arith.constant 0 : index
    %10 = vector.load %arg4[%c0_8, %c0_9] : memref<32x640xf32, #tpu.memory_space<vmem>>, vector<32x640xf32>
    tpu.vector_store %arg4[%c0_8, %c0_9], %9 {strides = array<i32>} : memref<32x640xf32, #tpu.memory_space<vmem>>, vector<32x640xf32>,
    return
  }
  func.func @transform_0(%arg0: i32) -> (i32, i32) {
    %c0_i32 = arith.constant 0 : i32
    %c0_i32_0 = arith.constant 0 : i32
    %c0_i32_1 = arith.constant 0 : i32
    return %c0_i32, %c0_i32_0 : i32, i32
  }
  func.func @transform_1(%arg0: i32) -> (i32, i32) {
    %c0_i32 = arith.constant 0 : i32
    %c0_i32_0 = arith.constant 0 : i32
    %c0_i32_1 = arith.constant 0 : i32
    return %c0_i32, %c0_i32_0 : i32, i32
  }
  func.func @transform_2(%arg0: i32) -> (i32, i32) {
    %c0_i32 = arith.constant 0 : i32
    %c0_i32_0 = arith.constant 0 : i32
    return %c0_i32, %arg0 : i32, i32
  }
  func.func @transform_3(%arg0: i32) -> (i32, i32) {
    %c0_i32 = arith.constant 0 : i32
    %c0_i32_0 = arith.constant 0 : i32
    return %c0_i32, %arg0 : i32, i32
  }
}

</mosaic_0001>

<llo_original>
// kernel: y_net_forward.3
$region0: #{y_net_forward.3}
  #allocation0 [shape = 'u32[]', space=smem, size = 0x4, offset = 0x4, fixed_abs, tag = 'smem constant byte address 0x4 - core index']
  #allocation1 [shape = 'u32[144,128]{1,0:T(1,128)}', space=vmem, size = 0x12000, scoped, tag = 'internal scratch']
  %s0 = inlined_call_operand.vmem [shape: f32[32,32], index: 0, kind: input, shape index: {}]
  %s1 = inlined_call_operand.vmem [shape: f32[32,32], index: 1, kind: input, shape index: {}]
  %s2 = inlined_call_operand.vmem [shape: f32[32,640], index: 2, kind: input, shape index: {}]
  %s3 = inlined_call_operand.vmem [shape: f32[32,640], index: 3, kind: output, shape index: {}]
  %s4 = sld [smem:[#allocation0]]
  $region22: #{y_net_forward.3} parent=0
    _
  %s6 = ssub.s32 1, %s4
  %s7 = scalar_select 0, %s6, %s4
  // Predicated region
  $region2: #{y_net_forward.3} parent=0 // pred_check
    _
  $region3: #{y_net_forward.3} parent=0 // pred_check_branch
    %9 = sbr.rel (0) target = $region5
  $region4: #{y_net_forward.3} parent=0 // pred_region
    _
  $region5: #{y_net_forward.3} parent=0 // pred_fallthru
    _
  // Predicated region
  $region6: #{y_net_forward.3} parent=0 // pred_check
    _
  $region7: #{y_net_forward.3} parent=0 // pred_check_branch
    %11 = sbr.rel (0) target = $region9
  $region8: #{y_net_forward.3} parent=0 // pred_region
    _
  $region9: #{y_net_forward.3} parent=0 // pred_fallthru
    _
  // Predicated region
  $region10: #{y_net_forward.3} parent=0 // pred_check
    _
  $region11: #{y_net_forward.3} parent=0 // pred_check_branch
    %13 = sbr.rel (0) target = $region13
  $region12: #{y_net_forward.3} parent=0 // pred_region
    _
  $region13: #{y_net_forward.3} parent=0 // pred_fallthru
    _
  %v14 = vld [vmem:[%s0] sm:$0xff]
  %v15 = vld [vmem:[%s0 + $0x8] sm:$0xff]
  %v16 = vld [vmem:[%s0 + $0x10] sm:$0xff]
  %v17 = vld [vmem:[%s0 + $0x18] sm:$0xff]
  %v18 = vld [vmem:[%s2] sm:$0xff]
  %v19 = vld [vmem:[%s2 + $0x8] sm:$0xff]
  %v20 = vld [vmem:[%s2 + $0x10] sm:$0xff]
  %v21 = vld [vmem:[%s2 + $0x18] sm:$0xff]
  %v22 = vld [vmem:[%s2 + $0x20] sm:$0xff]
  %v23 = vld [vmem:[%s2 + $0x28] sm:$0xff]
  %v24 = vld [vmem:[%s2 + $0x30] sm:$0xff]
  %v25 = vld [vmem:[%s2 + $0x38] sm:$0xff]
  %v26 = vld [vmem:[%s2 + $0x40] sm:$0xff]
  %v27 = vld [vmem:[%s2 + $0x48] sm:$0xff]
  %v28 = vld [vmem:[%s2 + $0x50] sm:$0xff]
  %v29 = vld [vmem:[%s2 + $0x58] sm:$0xff]
  %v30 = vld [vmem:[%s2 + $0x60] sm:$0xff]
  %v31 = vld [vmem:[%s2 + $0x68] sm:$0xff]
  %v32 = vld [vmem:[%s2 + $0x70] sm:$0xff]
  %v33 = vld [vmem:[%s2 + $0x78] sm:$0xff]
  %v34 = vld [vmem:[%s2 + $0x80] sm:$0xff]
  %v35 = vld [vmem:[%s2 + $0x88] sm:$0xff]
  %v36 = vld [vmem:[%s2 + $0x90] sm:$0xff]
  %v37 = vld [vmem:[%s2 + $0x98] sm:$0xff]
  %vm38 = vcmask 261120
  %v40 = vsel %vm38, %v14, 0
  %v43 = vsel %vm38, %v15, 0
  %v46 = vsel %vm38, %v16, 0
  %v49 = vsel %vm38, %v17, 0
  %51 = vmatprep.subr.mxu0 %v19
  %52 = vmatpush1.msra.mxu0 %v18
  %53 = vmatprep.subr.mxu0 %v24
  %54 = vmatpush1.msra.mxu0 %v23
  %55 = vmatprep.subr.mxu0 %v29
  %56 = vmatpush1.msra.mxu0 %v28
  %57 = vmatprep.subr.mxu0 %v34
  %58 = vmatpush1.msra.mxu0 %v33
  %59 = vmatprep.subr.mxu0 0.0
  %60 = vmatpush1.msra.mxu0 0.0
  %61 = vmatprep.subr.mxu0 0.0
  %62 = vmatpush1.msra.mxu0 0.0
  %63 = vmatprep.subr.mxu0 0.0
  %64 = vmatpush1.msra.mxu0 0.0
  %65 = vmatprep.subr.mxu0 0.0
  %66 = vmatpush1.msra.mxu0 0.0
  %67 = vmatprep.subr.mxu0 0.0
  %68 = vmatpush1.msra.mxu0 0.0
  %69 = vmatprep.subr.mxu0 0.0
  %70 = vmatpush1.msra.mxu0 0.0
  %71 = vmatprep.subr.mxu0 0.0
  %72 = vmatpush1.msra.mxu0 0.0
  %73 = vmatprep.subr.mxu0 0.0
  %74 = vmatpush1.msra.mxu0 0.0
  %75 = vmatprep.subr.mxu0 0.0
  %76 = vmatpush1.msra.mxu0 0.0
  %77 = vmatprep.subr.mxu0 0.0
  %78 = vmatpush1.msra.mxu0 0.0
  %79 = vmatprep.subr.mxu0 0.0
  %80 = vmatpush1.msra.mxu0 0.0
  %81 = vmatprep.subr.mxu0 0.0
  %82 = vmatpush1.msra.mxu0 0.0
  %83 = vmatprep.subr.mxu0 0.0
  %84 = vmatpush1.msra.mxu0 0.0
  %85 = vmatprep.subr.mxu0 0.0
  %86 = vmatpush1.msra.mxu0 0.0
  %87 = vmatprep.subr.mxu0 0.0
  %88 = vmatpush1.msra.mxu0 0.0
  %89 = vmatprep.subr.mxu0 0.0
  %90 = vmatpush1.msra.mxu0 0.0
  %91 = vmatprep.subr.mxu0 0.0
  %92 = vmatpush1.msra.mxu0 0.0
  %93 = vmatprep.subr.mxu0 0.0
  %94 = vmatpush1.msra.mxu0 0.0
  %95 = vmatprep.subr.mxu0 0.0
  %96 = vmatpush1.msra.mxu0 0.0
  %97 = vmatprep.subr.mxu0 0.0
  %98 = vmatpush1.msra.mxu0 0.0
  %99 = vmatprep.subr.mxu0 0.0
  %100 = vmatpush1.msra.mxu0 0.0
  %101 = vmatprep.subr.mxu0 0.0
  %102 = vmatpush1.msra.mxu0 0.0
  %103 = vmatprep.subr.mxu0 0.0
  %104 = vmatpush1.msra.mxu0 0.0
  %105 = vmatprep.subr.mxu0 0.0
  %106 = vmatpush1.msra.mxu0 0.0
  %107 = vmatprep.subr.mxu0 0.0
  %108 = vmatpush1.msra.mxu0 0.0
  %109 = vmatprep.subr.mxu0 0.0
  %110 = vmatpush1.msra.mxu0 0.0
  %111 = vmatprep.subr.mxu0 0.0
  %112 = vmatpush1.msra.mxu0 0.0
  %113 = vmatprep.subr.mxu0 0.0
  %114 = vmatpush1.msra.mxu0 0.0
  %115 = vmatprep.mubr.f32.mxu0 0.0
  %116 = vmatmul.mubr.f32.gmra.mrb[0].mxu0 %v40
  %v117 = vpop.f32.mrb[0].mxu0
  %v118 = vadd.f32 0.0, %v117
  %v119 = vpop.f32.mrb[0].mxu0
  %v120 = vadd.f32 0.0, %v119
  %121 = vmatprep.mubr.f32.mxu0 0.0
  %122 = vmatmul.mubr.f32.gmra.mrb[0].mxu0 %v43
  %v123 = vpop.f32.mrb[0].mxu0
  %v124 = vadd.f32 0.0, %v123
  %v125 = vpop.f32.mrb[0].mxu0
  %v126 = vadd.f32 0.0, %v125
  %127 = vmatprep.mubr.f32.mxu0 0.0
  %128 = vmatmul.mubr.f32.gmra.mrb[0].mxu0 %v46
  %v129 = vpop.f32.mrb[0].mxu0
  %v130 = vadd.f32 0.0, %v129
  %v131 = vpop.f32.mrb[0].mxu0
  %v132 = vadd.f32 0.0, %v131
  %133 = vmatprep.mubr.f32.mxu0 0.0
  %134 = vmatmul.mubr.f32.gmra.mrb[0].mxu0 %v49
  %v135 = vpop.f32.mrb[0].mxu0
  %v136 = vadd.f32 0.0, %v135
  %v137 = vpop.f32.mrb[0].mxu0
  %v138 = vadd.f32 0.0, %v137
  %139 = vdwg.mxu0
  %140 = vmatprep.subr.mxu0 %v21
  %141 = vmatpush1.msra.mxu0 %v20
  %142 = vmatprep.subr.mxu0 %v26
  %143 = vmatpush1.msra.mxu0 %v25
  %144 = vmatprep.subr.mxu0 %v31
  %145 = vmatpush1.msra.mxu0 %v30
  %146 = vmatprep.subr.mxu0 %v36
  %147 = vmatpush1.msra.mxu0 %v35
  %148 = vmatprep.subr.mxu0 0.0
  %149 = vmatpush1.msra.mxu0 0.0
  %150 = vmatprep.subr.mxu0 0.0
  %151 = vmatpush1.msra.mxu0 0.0
  %152 = vmatprep.subr.mxu0 0.0
  %153 = vmatpush1.msra.mxu0 0.0
  %154 = vmatprep.subr.mxu0 0.0
  %155 = vmatpush1.msra.mxu0 0.0
  %156 = vmatprep.subr.mxu0 0.0
  %157 = vmatpush1.msra.mxu0 0.0
  %158 = vmatprep.subr.mxu0 0.0
  %159 = vmatpush1.msra.mxu0 0.0
  %160 = vmatprep.subr.mxu0 0.0
  %161 = vmatpush1.msra.mxu0 0.0
  %162 = vmatprep.subr.mxu0 0.0
  %163 = vmatpush1.msra.mxu0 0.0
  %164 = vmatprep.subr.mxu0 0.0
  %165 = vmatpush1.msra.mxu0 0.0
  %166 = vmatprep.subr.mxu0 0.0
  %167 = vmatpush1.msra.mxu0 0.0
  %168 = vmatprep.subr.mxu0 0.0
  %169 = vmatpush1.msra.mxu0 0.0
  %170 = vmatprep.subr.mxu0 0.0
  %171 = vmatpush1.msra.mxu0 0.0
  %172 = vmatprep.subr.mxu0 0.0
  %173 = vmatpush1.msra.mxu0 0.0
  %174 = vmatprep.subr.mxu0 0.0
  %175 = vmatpush1.msra.mxu0 0.0
  %176 = vmatprep.subr.mxu0 0.0
  %177 = vmatpush1.msra.mxu0 0.0
  %178 = vmatprep.subr.mxu0 0.0
  %179 = vmatpush1.msra.mxu0 0.0
  %180 = vmatprep.subr.mxu0 0.0
  %181 = vmatpush1.msra.mxu0 0.0
  %182 = vmatprep.subr.mxu0 0.0
  %183 = vmatpush1.msra.mxu0 0.0
  %184 = vmatprep.subr.mxu0 0.0
  %185 = vmatpush1.msra.mxu0 0.0
  %186 = vmatprep.subr.mxu0 0.0
  %187 = vmatpush1.msra.mxu0 0.0
  %188 = vmatprep.subr.mxu0 0.0
  %189 = vmatpush1.msra.mxu0 0.0
  %190 = vmatprep.subr.mxu0 0.0
  %191 = vmatpush1.msra.mxu0 0.0
  %192 = vmatprep.subr.mxu0 0.0
  %193 = vmatpush1.msra.mxu0 0.0
  %194 = vmatprep.subr.mxu0 0.0
  %195 = vmatpush1.msra.mxu0 0.0
  %196 = vmatprep.subr.mxu0 0.0
  %197 = vmatpush1.msra.mxu0 0.0
  %198 = vmatprep.subr.mxu0 0.0
  %199 = vmatpush1.msra.mxu0 0.0
  %200 = vmatprep.subr.mxu0 0.0
  %201 = vmatpush1.msra.mxu0 0.0
  %202 = vmatprep.subr.mxu0 0.0
  %203 = vmatpush1.msra.mxu0 0.0
  %204 = vmatprep.mubr.f32.mxu0 0.0
  %205 = vmatmul.mubr.f32.gmra.mrb[0].mxu0 %v40
  %v206 = vpop.f32.mrb[0].mxu0
  %v207 = vadd.f32 0.0, %v206
  %v208 = vpop.f32.mrb[0].mxu0
  %v209 = vadd.f32 0.0, %v208
  %210 = vmatprep.mubr.f32.mxu0 0.0
  %211 = vmatmul.mubr.f32.gmra.mrb[0].mxu0 %v43
  %v212 = vpop.f32.mrb[0].mxu0
  %v213 = vadd.f32 0.0, %v212
  %v214 = vpop.f32.mrb[0].mxu0
  %v215 = vadd.f32 0.0, %v214
  %216 = vmatprep.mubr.f32.mxu0 0.0
  %217 = vmatmul.mubr.f32.gmra.mrb[0].mxu0 %v46
  %v218 = vpop.f32.mrb[0].mxu0
  %v219 = vadd.f32 0.0, %v218
  %v220 = vpop.f32.mrb[0].mxu0
  %v221 = vadd.f32 0.0, %v220
  %222 = vmatprep.mubr.f32.mxu0 0.0
  %223 = vmatmul.mubr.f32.gmra.mrb[0].mxu0 %v49
  %v224 = vpop.f32.mrb[0].mxu0
  %v225 = vadd.f32 0.0, %v224
  %v226 = vpop.f32.mrb[0].mxu0
  %v227 = vadd.f32 0.0, %v226
  %228 = vdwg.mxu0
  %229 = vmatprep.subr.mxu0 0.0
  %230 = vmatpush1.msra.mxu0 %v22
  %231 = vmatprep.subr.mxu0 0.0
  %232 = vmatpush1.msra.mxu0 %v27
  %233 = vmatprep.subr.mxu0 0.0
  %234 = vmatpush1.msra.mxu0 %v32
  %235 = vmatprep.subr.mxu0 0.0
  %236 = vmatpush1.msra.mxu0 %v37
  %237 = vmatprep.subr.mxu0 0.0
  %238 = vmatpush1.msra.mxu0 0.0
  %239 = vmatprep.subr.mxu0 0.0
  %240 = vmatpush1.msra.mxu0 0.0
  %241 = vmatprep.subr.mxu0 0.0
  %242 = vmatpush1.msra.mxu0 0.0
  %243 = vmatprep.subr.mxu0 0.0
  %244 = vmatpush1.msra.mxu0 0.0
  %245 = vmatprep.subr.mxu0 0.0
  %246 = vmatpush1.msra.mxu0 0.0
  %247 = vmatprep.subr.mxu0 0.0
  %248 = vmatpush1.msra.mxu0 0.0
  %249 = vmatprep.subr.mxu0 0.0
  %250 = vmatpush1.msra.mxu0 0.0
  %251 = vmatprep.subr.mxu0 0.0
  %252 = vmatpush1.msra.mxu0 0.0
  %253 = vmatprep.subr.mxu0 0.0
  %254 = vmatpush1.msra.mxu0 0.0
  %255 = vmatprep.subr.mxu0 0.0
  %256 = vmatpush1.msra.mxu0 0.0
  %257 = vmatprep.subr.mxu0 0.0
  %258 = vmatpush1.msra.mxu0 0.0
  %259 = vmatprep.subr.mxu0 0.0
  %260 = vmatpush1.msra.mxu0 0.0
  %261 = vmatprep.subr.mxu0 0.0
  %262 = vmatpush1.msra.mxu0 0.0
  %263 = vmatprep.subr.mxu0 0.0
  %264 = vmatpush1.msra.mxu0 0.0
  %265 = vmatprep.subr.mxu0 0.0
  %266 = vmatpush1.msra.mxu0 0.0
  %267 = vmatprep.subr.mxu0 0.0
  %268 = vmatpush1.msra.mxu0 0.0
  %269 = vmatprep.subr.mxu0 0.0
  %270 = vmatpush1.msra.mxu0 0.0
  %271 = vmatprep.subr.mxu0 0.0
  %272 = vmatpush1.msra.mxu0 0.0
  %273 = vmatprep.subr.mxu0 0.0
  %274 = vmatpush1.msra.mxu0 0.0
  %275 = vmatprep.subr.mxu0 0.0
  %276 = vmatpush1.msra.mxu0 0.0
  %277 = vmatprep.subr.mxu0 0.0
  %278 = vmatpush1.msra.mxu0 0.0
  %279 = vmatprep.subr.mxu0 0.0
  %280 = vmatpush1.msra.mxu0 0.0
  %281 = vmatprep.subr.mxu0 0.0
  %282 = vmatpush1.msra.mxu0 0.0
  %283 = vmatprep.subr.mxu0 0.0
  %284 = vmatpush1.msra.mxu0 0.0
  %285 = vmatprep.subr.mxu0 0.0
  %286 = vmatpush1.msra.mxu0 0.0
  %287 = vmatprep.subr.mxu0 0.0
  %288 = vmatpush1.msra.mxu0 0.0
  %289 = vmatprep.subr.mxu0 0.0
  %290 = vmatpush1.msra.mxu0 0.0
  %291 = vmatprep.subr.mxu0 0.0
  %292 = vmatpush1.msra.mxu0 0.0
  %293 = vmatprep.mubr.f32.mxu0 0.0
  %294 = vmatmul.mubr.f32.gmra.mrb[0].mxu0 %v40
  %v295 = vpop.f32.mrb[0].mxu0
  %v296 = vadd.f32 0.0, %v295
  %v297 = vpop.f32.mrb[0].mxu0
  %298 = vmatprep.mubr.f32.mxu0 0.0
  %299 = vmatmul.mubr.f32.gmra.mrb[0].mxu0 %v43
  %v300 = vpop.f32.mrb[0].mxu0
  %v301 = vadd.f32 0.0, %v300
  %v302 = vpop.f32.mrb[0].mxu0
  %303 = vmatprep.mubr.f32.mxu0 0.0
  %304 = vmatmul.mubr.f32.gmra.mrb[0].mxu0 %v46
  %v305 = vpop.f32.mrb[0].mxu0
  %v306 = vadd.f32 0.0, %v305
  %v307 = vpop.f32.mrb[0].mxu0
  %308 = vmatprep.mubr.f32.mxu0 0.0
  %309 = vmatmul.mubr.f32.gmra.mrb[0].mxu0 %v49
  %v310 = vpop.f32.mrb[0].mxu0
  %v311 = vadd.f32 0.0, %v310
  %v312 = vpop.f32.mrb[0].mxu0
  %313 = vdwg.mxu0
  %vm314 = vcmp.ge.f32.partialorder %v118, 0.0
  %vm315 = vcmp.ge.f32.partialorder %v120, 0.0
  %vm316 = vcmp.ge.f32.partialorder %v207, 0.0
  %vm317 = vcmp.ge.f32.partialorder %v209, 0.0
  %vm318 = vcmp.ge.f32.partialorder %v296, 0.0
  %vm319 = vcmp.ge.f32.partialorder %v124, 0.0
  %vm320 = vcmp.ge.f32.partialorder %v126, 0.0
  %vm321 = vcmp.ge.f32.partialorder %v213, 0.0
  %vm322 = vcmp.ge.f32.partialorder %v215, 0.0
  %vm323 = vcmp.ge.f32.partialorder %v301, 0.0
  %vm324 = vcmp.ge.f32.partialorder %v130, 0.0
  %vm325 = vcmp.ge.f32.partialorder %v132, 0.0
  %vm326 = vcmp.ge.f32.partialorder %v219, 0.0
  %vm327 = vcmp.ge.f32.partialorder %v221, 0.0
  %vm328 = vcmp.ge.f32.partialorder %v306, 0.0
  %vm329 = vcmp.ge.f32.partialorder %v136, 0.0
  %vm330 = vcmp.ge.f32.partialorder %v138, 0.0
  %vm331 = vcmp.ge.f32.partialorder %v225, 0.0
  %vm332 = vcmp.ge.f32.partialorder %v227, 0.0
  %vm333 = vcmp.ge.f32.partialorder %v311, 0.0
  %v334 = vmul.f32 %v118, 0.01
  %v335 = vmul.f32 %v120, 0.01
  %v336 = vmul.f32 %v207, 0.01
  %v337 = vmul.f32 %v209, 0.01
  %v338 = vmul.f32 %v296, 0.01
  %v339 = vmul.f32 %v124, 0.01
  %v340 = vmul.f32 %v126, 0.01
  %v341 = vmul.f32 %v213, 0.01
  %v342 = vmul.f32 %v215, 0.01
  %v343 = vmul.f32 %v301, 0.01
  %v344 = vmul.f32 %v130, 0.01
  %v345 = vmul.f32 %v132, 0.01
  %v346 = vmul.f32 %v219, 0.01
  %v347 = vmul.f32 %v221, 0.01
  %v348 = vmul.f32 %v306, 0.01
  %v349 = vmul.f32 %v136, 0.01
  %v350 = vmul.f32 %v138, 0.01
  %v351 = vmul.f32 %v225, 0.01
  %v352 = vmul.f32 %v227, 0.01
  %v353 = vmul.f32 %v311, 0.01
  %v354 = vsel %vm314, %v118, %v334
  %v355 = vsel %vm315, %v120, %v335
  %v356 = vsel %vm316, %v207, %v336
  %v357 = vsel %vm317, %v209, %v337
  %v358 = vsel %vm318, %v296, %v338
  %v359 = vsel %vm319, %v124, %v339
  %v360 = vsel %vm320, %v126, %v340
  %v361 = vsel %vm321, %v213, %v341
  %v362 = vsel %vm322, %v215, %v342
  %v363 = vsel %vm323, %v301, %v343
  %v364 = vsel %vm324, %v130, %v344
  %v365 = vsel %vm325, %v132, %v345
  %v366 = vsel %vm326, %v219, %v346
  %v367 = vsel %vm327, %v221, %v347
  %v368 = vsel %vm328, %v306, %v348
  %v369 = vsel %vm329, %v136, %v349
  %v370 = vsel %vm330, %v138, %v350
  %v371 = vsel %vm331, %v225, %v351
  %v372 = vsel %vm332, %v227, %v352
  %v373 = vsel %vm333, %v311, %v353
  %v374 = vld [vmem:[%s1] sm:$0xff]
  %v375 = vld [vmem:[%s1 + $0x8] sm:$0xff]
  %v376 = vld [vmem:[%s1 + $0x10] sm:$0xff]
  %v377 = vld [vmem:[%s1 + $0x18] sm:$0xff]
  %v379 = vsel %vm38, %v374, 0
  %v382 = vsel %vm38, %v375, 0
  %v385 = vsel %vm38, %v376, 0
  %v388 = vsel %vm38, %v377, 0
  %390 = vmatprep.subr.mxu0 %v355
  %391 = vmatpush1.msra.mxu0 %v354
  %392 = vmatprep.subr.mxu0 %v360
  %393 = vmatpush1.msra.mxu0 %v359
  %394 = vmatprep.subr.mxu0 %v365
  %395 = vmatpush1.msra.mxu0 %v364
  %396 = vmatprep.subr.mxu0 %v370
  %397 = vmatpush1.msra.mxu0 %v369
  %398 = vmatprep.subr.mxu0 0.0
  %399 = vmatpush1.msra.mxu0 0.0
  %400 = vmatprep.subr.mxu0 0.0
  %401 = vmatpush1.msra.mxu0 0.0
  %402 = vmatprep.subr.mxu0 0.0
  %403 = vmatpush1.msra.mxu0 0.0
  %404 = vmatprep.subr.mxu0 0.0
  %405 = vmatpush1.msra.mxu0 0.0
  %406 = vmatprep.subr.mxu0 0.0
  %407 = vmatpush1.msra.mxu0 0.0
  %408 = vmatprep.subr.mxu0 0.0
  %409 = vmatpush1.msra.mxu0 0.0
  %410 = vmatprep.subr.mxu0 0.0
  %411 = vmatpush1.msra.mxu0 0.0
  %412 = vmatprep.subr.mxu0 0.0
  %413 = vmatpush1.msra.mxu0 0.0
  %414 = vmatprep.subr.mxu0 0.0
  %415 = vmatpush1.msra.mxu0 0.0
  %416 = vmatprep.subr.mxu0 0.0
  %417 = vmatpush1.msra.mxu0 0.0
  %418 = vmatprep.subr.mxu0 0.0
  %419 = vmatpush1.msra.mxu0 0.0
  %420 = vmatprep.subr.mxu0 0.0
  %421 = vmatpush1.msra.mxu0 0.0
  %422 = vmatprep.subr.mxu0 0.0
  %423 = vmatpush1.msra.mxu0 0.0
  %424 = vmatprep.subr.mxu0 0.0
  %425 = vmatpush1.msra.mxu0 0.0
  %426 = vmatprep.subr.mxu0 0.0
  %427 = vmatpush1.msra.mxu0 0.0
  %428 = vmatprep.subr.mxu0 0.0
  %429 = vmatpush1.msra.mxu0 0.0
  %430 = vmatprep.subr.mxu0 0.0
  %431 = vmatpush1.msra.mxu0 0.0
  %432 = vmatprep.subr.mxu0 0.0
  %433 = vmatpush1.msra.mxu0 0.0
  %434 = vmatprep.subr.mxu0 0.0
  %435 = vmatpush1.msra.mxu0 0.0
  %436 = vmatprep.subr.mxu0 0.0
  %437 = vmatpush1.msra.mxu0 0.0
  %438 = vmatprep.subr.mxu0 0.0
  %439 = vmatpush1.msra.mxu0 0.0
  %440 = vmatprep.subr.mxu0 0.0
  %441 = vmatpush1.msra.mxu0 0.0
  %442 = vmatprep.subr.mxu0 0.0
  %443 = vmatpush1.msra.mxu0 0.0
  %444 = vmatprep.subr.mxu0 0.0
  %445 = vmatpush1.msra.mxu0 0.0
  %446 = vmatprep.subr.mxu0 0.0
  %447 = vmatpush1.msra.mxu0 0.0
  %448 = vmatprep.subr.mxu0 0.0
  %449 = vmatpush1.msra.mxu0 0.0
  %450 = vmatprep.subr.mxu0 0.0
  %451 = vmatpush1.msra.mxu0 0.0
  %452 = vmatprep.subr.mxu0 0.0
  %453 = vmatpush1.msra.mxu0 0.0
  %454 = vmatprep.mubr.f32.mxu0 0.0
  %455 = vmatmul.mubr.f32.gmra.mrb[0].mxu0 %v379
  %v456 = vpop.f32.mrb[0].mxu0
  %v457 = vadd.f32 0.0, %v456
  %v458 = vpop.f32.mrb[0].mxu0
  %v459 = vadd.f32 0.0, %v458
  %460 = vmatprep.mubr.f32.mxu0 0.0
  %461 = vmatmul.mubr.f32.gmra.mrb[0].mxu0 %v382
  %v462 = vpop.f32.mrb[0].mxu0
  %v463 = vadd.f32 0.0, %v462
  %v464 = vpop.f32.mrb[0].mxu0
  %v465 = vadd.f32 0.0, %v464
  %466 = vmatprep.mubr.f32.mxu0 0.0
  %467 = vmatmul.mubr.f32.gmra.mrb[0].mxu0 %v385
  %v468 = vpop.f32.mrb[0].mxu0
  %v469 = vadd.f32 0.0, %v468
  %v470 = vpop.f32.mrb[0].mxu0
  %v471 = vadd.f32 0.0, %v470
  %472 = vmatprep.mubr.f32.mxu0 0.0
  %473 = vmatmul.mubr.f32.gmra.mrb[0].mxu0 %v388
  %v474 = vpop.f32.mrb[0].mxu0
  %v475 = vadd.f32 0.0, %v474
  %v476 = vpop.f32.mrb[0].mxu0
  %v477 = vadd.f32 0.0, %v476
  %478 = vdwg.mxu0
  %479 = vmatprep.subr.mxu0 %v357
  %480 = vmatpush1.msra.mxu0 %v356
  %481 = vmatprep.subr.mxu0 %v362
  %482 = vmatpush1.msra.mxu0 %v361
  %483 = vmatprep.subr.mxu0 %v367
  %484 = vmatpush1.msra.mxu0 %v366
  %485 = vmatprep.subr.mxu0 %v372
  %486 = vmatpush1.msra.mxu0 %v371
  %487 = vmatprep.subr.mxu0 0.0
  %488 = vmatpush1.msra.mxu0 0.0
  %489 = vmatprep.subr.mxu0 0.0
  %490 = vmatpush1.msra.mxu0 0.0
  %491 = vmatprep.subr.mxu0 0.0
  %492 = vmatpush1.msra.mxu0 0.0
  %493 = vmatprep.subr.mxu0 0.0
  %494 = vmatpush1.msra.mxu0 0.0
  %495 = vmatprep.subr.mxu0 0.0
  %496 = vmatpush1.msra.mxu0 0.0
  %497 = vmatprep.subr.mxu0 0.0
  %498 = vmatpush1.msra.mxu0 0.0
  %499 = vmatprep.subr.mxu0 0.0
  %500 = vmatpush1.msra.mxu0 0.0
  %501 = vmatprep.subr.mxu0 0.0
  %502 = vmatpush1.msra.mxu0 0.0
  %503 = vmatprep.subr.mxu0 0.0
  %504 = vmatpush1.msra.mxu0 0.0
  %505 = vmatprep.subr.mxu0 0.0
  %506 = vmatpush1.msra.mxu0 0.0
  %507 = vmatprep.subr.mxu0 0.0
  %508 = vmatpush1.msra.mxu0 0.0
  %509 = vmatprep.subr.mxu0 0.0
  %510 = vmatpush1.msra.mxu0 0.0
  %511 = vmatprep.subr.mxu0 0.0
  %512 = vmatpush1.msra.mxu0 0.0
  %513 = vmatprep.subr.mxu0 0.0
  %514 = vmatpush1.msra.mxu0 0.0
  %515 = vmatprep.subr.mxu0 0.0
  %516 = vmatpush1.msra.mxu0 0.0
  %517 = vmatprep.subr.mxu0 0.0
  %518 = vmatpush1.msra.mxu0 0.0
  %519 = vmatprep.subr.mxu0 0.0
  %520 = vmatpush1.msra.mxu0 0.0
  %521 = vmatprep.subr.mxu0 0.0
  %522 = vmatpush1.msra.mxu0 0.0
  %523 = vmatprep.subr.mxu0 0.0
  %524 = vmatpush1.msra.mxu0 0.0
  %525 = vmatprep.subr.mxu0 0.0
  %526 = vmatpush1.msra.mxu0 0.0
  %527 = vmatprep.subr.mxu0 0.0
  %528 = vmatpush1.msra.mxu0 0.0
  %529 = vmatprep.subr.mxu0 0.0
  %530 = vmatpush1.msra.mxu0 0.0
  %531 = vmatprep.subr.mxu0 0.0
  %532 = vmatpush1.msra.mxu0 0.0
  %533 = vmatprep.subr.mxu0 0.0
  %534 = vmatpush1.msra.mxu0 0.0
  %535 = vmatprep.subr.mxu0 0.0
  %536 = vmatpush1.msra.mxu0 0.0
  %537 = vmatprep.subr.mxu0 0.0
  %538 = vmatpush1.msra.mxu0 0.0
  %539 = vmatprep.subr.mxu0 0.0
  %540 = vmatpush1.msra.mxu0 0.0
  %541 = vmatprep.subr.mxu0 0.0
  %542 = vmatpush1.msra.mxu0 0.0
  %543 = vmatprep.mubr.f32.mxu0 0.0
  %544 = vmatmul.mubr.f32.gmra.mrb[0].mxu0 %v379
  %v545 = vpop.f32.mrb[0].mxu0
  %v546 = vadd.f32 0.0, %v545
  %v547 = vpop.f32.mrb[0].mxu0
  %v548 = vadd.f32 0.0, %v547
  %549 = vmatprep.mubr.f32.mxu0 0.0
  %550 = vmatmul.mubr.f32.gmra.mrb[0].mxu0 %v382
  %v551 = vpop.f32.mrb[0].mxu0
  %v552 = vadd.f32 0.0, %v551
  %v553 = vpop.f32.mrb[0].mxu0
  %v554 = vadd.f32 0.0, %v553
  %555 = vmatprep.mubr.f32.mxu0 0.0
  %556 = vmatmul.mubr.f32.gmra.mrb[0].mxu0 %v385
  %v557 = vpop.f32.mrb[0].mxu0
  %v558 = vadd.f32 0.0, %v557
  %v559 = vpop.f32.mrb[0].mxu0
  %v560 = vadd.f32 0.0, %v559
  %561 = vmatprep.mubr.f32.mxu0 0.0
  %562 = vmatmul.mubr.f32.gmra.mrb[0].mxu0 %v388
  %v563 = vpop.f32.mrb[0].mxu0
  %v564 = vadd.f32 0.0, %v563
  %v565 = vpop.f32.mrb[0].mxu0
  %v566 = vadd.f32 0.0, %v565
  %567 = vdwg.mxu0
  %568 = vmatprep.subr.mxu0 0.0
  %569 = vmatpush1.msra.mxu0 %v358
  %570 = vmatprep.subr.mxu0 0.0
  %571 = vmatpush1.msra.mxu0 %v363
  %572 = vmatprep.subr.mxu0 0.0
  %573 = vmatpush1.msra.mxu0 %v368
  %574 = vmatprep.subr.mxu0 0.0
  %575 = vmatpush1.msra.mxu0 %v373
  %576 = vmatprep.subr.mxu0 0.0
  %577 = vmatpush1.msra.mxu0 0.0
  %578 = vmatprep.subr.mxu0 0.0
  %579 = vmatpush1.msra.mxu0 0.0
  %580 = vmatprep.subr.mxu0 0.0
  %581 = vmatpush1.msra.mxu0 0.0
  %582 = vmatprep.subr.mxu0 0.0
  %583 = vmatpush1.msra.mxu0 0.0
  %584 = vmatprep.subr.mxu0 0.0
  %585 = vmatpush1.msra.mxu0 0.0
  %586 = vmatprep.subr.mxu0 0.0
  %587 = vmatpush1.msra.mxu0 0.0
  %588 = vmatprep.subr.mxu0 0.0
  %589 = vmatpush1.msra.mxu0 0.0
  %590 = vmatprep.subr.mxu0 0.0
  %591 = vmatpush1.msra.mxu0 0.0
  %592 = vmatprep.subr.mxu0 0.0
  %593 = vmatpush1.msra.mxu0 0.0
  %594 = vmatprep.subr.mxu0 0.0
  %595 = vmatpush1.msra.mxu0 0.0
  %596 = vmatprep.subr.mxu0 0.0
  %597 = vmatpush1.msra.mxu0 0.0
  %598 = vmatprep.subr.mxu0 0.0
  %599 = vmatpush1.msra.mxu0 0.0
  %600 = vmatprep.subr.mxu0 0.0
  %601 = vmatpush1.msra.mxu0 0.0
  %602 = vmatprep.subr.mxu0 0.0
  %603 = vmatpush1.msra.mxu0 0.0
  %604 = vmatprep.subr.mxu0 0.0
  %605 = vmatpush1.msra.mxu0 0.0
  %606 = vmatprep.subr.mxu0 0.0
  %607 = vmatpush1.msra.mxu0 0.0
  %608 = vmatprep.subr.mxu0 0.0
  %609 = vmatpush1.msra.mxu0 0.0
  %610 = vmatprep.subr.mxu0 0.0
  %611 = vmatpush1.msra.mxu0 0.0
  %612 = vmatprep.subr.mxu0 0.0
  %613 = vmatpush1.msra.mxu0 0.0
  %614 = vmatprep.subr.mxu0 0.0
  %615 = vmatpush1.msra.mxu0 0.0
  %616 = vmatprep.subr.mxu0 0.0
  %617 = vmatpush1.msra.mxu0 0.0
  %618 = vmatprep.subr.mxu0 0.0
  %619 = vmatpush1.msra.mxu0 0.0
  %620 = vmatprep.subr.mxu0 0.0
  %621 = vmatpush1.msra.mxu0 0.0
  %622 = vmatprep.subr.mxu0 0.0
  %623 = vmatpush1.msra.mxu0 0.0
  %624 = vmatprep.subr.mxu0 0.0
  %625 = vmatpush1.msra.mxu0 0.0
  %626 = vmatprep.subr.mxu0 0.0
  %627 = vmatpush1.msra.mxu0 0.0
  %628 = vmatprep.subr.mxu0 0.0
  %629 = vmatpush1.msra.mxu0 0.0
  %630 = vmatprep.subr.mxu0 0.0
  %631 = vmatpush1.msra.mxu0 0.0
  %632 = vmatprep.mubr.f32.mxu0 0.0
  %633 = vmatmul.mubr.f32.gmra.mrb[0].mxu0 %v379
  %v634 = vpop.f32.mrb[0].mxu0
  %v635 = vadd.f32 0.0, %v634
  %v636 = vpop.f32.mrb[0].mxu0
  %637 = vmatprep.mubr.f32.mxu0 0.0
  %638 = vmatmul.mubr.f32.gmra.mrb[0].mxu0 %v382
  %v639 = vpop.f32.mrb[0].mxu0
  %v640 = vadd.f32 0.0, %v639
  %v641 = vpop.f32.mrb[0].mxu0
  %642 = vmatprep.mubr.f32.mxu0 0.0
  %643 = vmatmul.mubr.f32.gmra.mrb[0].mxu0 %v385
  %v644 = vpop.f32.mrb[0].mxu0
  %v645 = vadd.f32 0.0, %v644
  %v646 = vpop.f32.mrb[0].mxu0
  %647 = vmatprep.mubr.f32.mxu0 0.0
  %648 = vmatmul.mubr.f32.gmra.mrb[0].mxu0 %v388
  %v649 = vpop.f32.mrb[0].mxu0
  %v650 = vadd.f32 0.0, %v649
  %v651 = vpop.f32.mrb[0].mxu0
  %652 = vdwg.mxu0
  %653 = vst [vmem:[%s3] sm:$0xff] %v457
  %654 = vst [vmem:[%s3 + $0x8] sm:$0xff] %v459
  %655 = vst [vmem:[%s3 + $0x10] sm:$0xff] %v546
  %656 = vst [vmem:[%s3 + $0x18] sm:$0xff] %v548
  %657 = vst [vmem:[%s3 + $0x20] sm:$0xff] %v635
  %658 = vst [vmem:[%s3 + $0x28] sm:$0xff] %v463
  %659 = vst [vmem:[%s3 + $0x30] sm:$0xff] %v465
  %660 = vst [vmem:[%s3 + $0x38] sm:$0xff] %v552
  %661 = vst [vmem:[%s3 + $0x40] sm:$0xff] %v554
  %662 = vst [vmem:[%s3 + $0x48] sm:$0xff] %v640
  %663 = vst [vmem:[%s3 + $0x50] sm:$0xff] %v469
  %664 = vst [vmem:[%s3 + $0x58] sm:$0xff] %v471
  %665 = vst [vmem:[%s3 + $0x60] sm:$0xff] %v558
  %666 = vst [vmem:[%s3 + $0x68] sm:$0xff] %v560
  %667 = vst [vmem:[%s3 + $0x70] sm:$0xff] %v645
  %668 = vst [vmem:[%s3 + $0x78] sm:$0xff] %v475
  %669 = vst [vmem:[%s3 + $0x80] sm:$0xff] %v477
  %670 = vst [vmem:[%s3 + $0x88] sm:$0xff] %v564
  %671 = vst [vmem:[%s3 + $0x90] sm:$0xff] %v566
  %672 = vst [vmem:[%s3 + $0x98] sm:$0xff] %v650
  // Predicated region
  $region14: #{y_net_forward.3} parent=0 // pred_check
    _
  $region15: #{y_net_forward.3} parent=0 // pred_check_branch
    %674 = sbr.rel (0) target = $region17
  $region16: #{y_net_forward.3} parent=0 // pred_region
    _
  $region17: #{y_net_forward.3} parent=0 // pred_fallthru
    _
  // Predicated region
  $region18: #{y_net_forward.3} parent=0 // pred_check
    _
  $region19: #{y_net_forward.3} parent=0 // pred_check_branch
    %676 = sbr.rel (0) target = $region21
  $region20: #{y_net_forward.3} parent=0 // pred_region
    _
  $region21: #{y_net_forward.3} parent=0 // pred_fallthru
    _

// kernel: y_net_forward.2
$region0: #{y_net_forward.2}
  #allocation0 [shape = 'u32[]', space=smem, size = 0x4, offset = 0x4, fixed_abs, tag = 'smem constant byte address 0x4 - core index']
  #allocation1 [shape = 'u32[144,128]{1,0:T(1,128)}', space=vmem, size = 0x12000, scoped, tag = 'internal scratch']
  %s0 = inlined_call_operand.vmem [shape: f32[32,16,8], index: 0, kind: input, shape index: {}]
  %s1 = inlined_call_operand.vmem [shape: f32[32,8,40], index: 1, kind: input, shape index: {}]
  %s2 = inlined_call_operand.vmem [shape: f32[32,16,40], index: 2, kind: output, shape index: {}]
  %s3 = sld [smem:[#allocation0]]
  $region18: #{y_net_forward.2} parent=0
    _
  %s5 = ssub.s32 1, %s3
  %s6 = scalar_select 0, %s5, %s3
  // Predicated region
  $region2: #{y_net_forward.2} parent=0 // pred_check
    _
  $region3: #{y_net_forward.2} parent=0 // pred_check_branch
    %8 = sbr.rel (0) target = $region5
  $region4: #{y_net_forward.2} parent=0 // pred_region
    _
  $region5: #{y_net_forward.2} parent=0 // pred_fallthru
    _
  // Predicated region
  $region6: #{y_net_forward.2} parent=0 // pred_check
    _
  $region7: #{y_net_forward.2} parent=0 // pred_check_branch
    %10 = sbr.rel (0) target = $region9
  $region8: #{y_net_forward.2} parent=0 // pred_region
    _
  $region9: #{y_net_forward.2} parent=0 // pred_fallthru
    _
  %v11 = vld [vmem:[%s0] sm:$0xff]
  %v12 = vld [vmem:[%s0 + $0x8] sm:$0xff]
  %v13 = vld [vmem:[%s0 + $0x10] sm:$0xff]
  %v14 = vld [vmem:[%s0 + $0x18] sm:$0xff]
  %v15 = vld [vmem:[%s0 + $0x20] sm:$0xff]
  %v16 = vld [vmem:[%s0 + $0x28] sm:$0xff]
  %v17 = vld [vmem:[%s0 + $0x30] sm:$0xff]
  %v18 = vld [vmem:[%s0 + $0x38] sm:$0xff]
  %v19 = vld [vmem:[%s0 + $0x40] sm:$0xff]
  %v20 = vld [vmem:[%s0 + $0x48] sm:$0xff]
  %v21 = vld [vmem:[%s0 + $0x50] sm:$0xff]
  %v22 = vld [vmem:[%s0 + $0x58] sm:$0xff]
  %v23 = vld [vmem:[%s0 + $0x60] sm:$0xff]
  %v24 = vld [vmem:[%s0 + $0x68] sm:$0xff]
  %v25 = vld [vmem:[%s0 + $0x70] sm:$0xff]
  %v26 = vld [vmem:[%s0 + $0x78] sm:$0xff]
  %v27 = vld [vmem:[%s0 + $0x80] sm:$0xff]
  %v28 = vld [vmem:[%s0 + $0x88] sm:$0xff]
  %v29 = vld [vmem:[%s0 + $0x90] sm:$0xff]
  %v30 = vld [vmem:[%s0 + $0x98] sm:$0xff]
  %v31 = vld [vmem:[%s0 + $0xa0] sm:$0xff]
  %v32 = vld [vmem:[%s0 + $0xa8] sm:$0xff]
  %v33 = vld [vmem:[%s0 + $0xb0] sm:$0xff]
  %v34 = vld [vmem:[%s0 + $0xb8] sm:$0xff]
  %v35 = vld [vmem:[%s0 + $0xc0] sm:$0xff]
  %v36 = vld [vmem:[%s0 + $0xc8] sm:$0xff]
  %v37 = vld [vmem:[%s0 + $0xd0] sm:$0xff]
  %v38 = vld [vmem:[%s0 + $0xd8] sm:$0xff]
  %v39 = vld [vmem:[%s0 + $0xe0] sm:$0xff]
  %v40 = vld [vmem:[%s0 + $0xe8] sm:$0xff]
  %v41 = vld [vmem:[%s0 + $0xf0] sm:$0xff]
  %v42 = vld [vmem:[%s0 + $0xf8] sm:$0xff]
  %v43 = vld [vmem:[%s0 + $0x100] sm:$0xff]
  %v44 = vld [vmem:[%s0 + $0x108] sm:$0xff]
  %v45 = vld [vmem:[%s0 + $0x110] sm:$0xff]
  %v46 = vld [vmem:[%s0 + $0x118] sm:$0xff]
  %v47 = vld [vmem:[%s0 + $0x120] sm:$0xff]
  %v48 = vld [vmem:[%s0 + $0x128] sm:$0xff]
  %v49 = vld [vmem:[%s0 + $0x130] sm:$0xff]
  %v50 = vld [vmem:[%s0 + $0x138] sm:$0xff]
  %v51 = vld [vmem:[%s0 + $0x140] sm:$0xff]
  %v52 = vld [vmem:[%s0 + $0x148] sm:$0xff]
  %v53 = vld [vmem:[%s0 + $0x150] sm:$0xff]
  %v54 = vld [vmem:[%s0 + $0x158] sm:$0xff]
  %v55 = vld [vmem:[%s0 + $0x160] sm:$0xff]
  %v56 = vld [vmem:[%s0 + $0x168] sm:$0xff]
  %v57 = vld [vmem:[%s0 + $0x170] sm:$0xff]
  %v58 = vld [vmem:[%s0 + $0x178] sm:$0xff]
  %v59 = vld [vmem:[%s0 + $0x180] sm:$0xff]
  %v60 = vld [vmem:[%s0 + $0x188] sm:$0xff]
  %v61 = vld [vmem:[%s0 + $0x190] sm:$0xff]
  %v62 = vld [vmem:[%s0 + $0x198] sm:$0xff]
  %v63 = vld [vmem:[%s0 + $0x1a0] sm:$0xff]
  %v64 = vld [vmem:[%s0 + $0x1a8] sm:$0xff]
  %v65 = vld [vmem:[%s0 + $0x1b0] sm:$0xff]
  %v66 = vld [vmem:[%s0 + $0x1b8] sm:$0xff]
  %v67 = vld [vmem:[%s0 + $0x1c0] sm:$0xff]
  %v68 = vld [vmem:[%s0 + $0x1c8] sm:$0xff]
  %v69 = vld [vmem:[%s0 + $0x1d0] sm:$0xff]
  %v70 = vld [vmem:[%s0 + $0x1d8] sm:$0xff]
  %v71 = vld [vmem:[%s0 + $0x1e0] sm:$0xff]
  %v72 = vld [vmem:[%s0 + $0x1e8] sm:$0xff]
  %v73 = vld [vmem:[%s0 + $0x1f0] sm:$0xff]
  %v74 = vld [vmem:[%s0 + $0x1f8] sm:$0xff]
  %v75 = vld [vmem:[%s1] sm:$0xff]
  %v76 = vld [vmem:[%s1 + $0x8] sm:$0xff]
  %v77 = vld [vmem:[%s1 + $0x10] sm:$0xff]
  %v78 = vld [vmem:[%s1 + $0x18] sm:$0xff]
  %v79 = vld [vmem:[%s1 + $0x20] sm:$0xff]
  %v80 = vld [vmem:[%s1 + $0x28] sm:$0xff]
  %v81 = vld [vmem:[%s1 + $0x30] sm:$0xff]
  %v82 = vld [vmem:[%s1 + $0x38] sm:$0xff]
  %v83 = vld [vmem:[%s1 + $0x40] sm:$0xff]
  %v84 = vld [vmem:[%s1 + $0x48] sm:$0xff]
  %v85 = vld [vmem:[%s1 + $0x50] sm:$0xff]
  %v86 = vld [vmem:[%s1 + $0x58] sm:$0xff]
  %v87 = vld [vmem:[%s1 + $0x60] sm:$0xff]
  %v88 = vld [vmem:[%s1 + $0x68] sm:$0xff]
  %v89 = vld [vmem:[%s1 + $0x70] sm:$0xff]
  %v90 = vld [vmem:[%s1 + $0x78] sm:$0xff]
  %v91 = vld [vmem:[%s1 + $0x80] sm:$0xff]
  %v92 = vld [vmem:[%s1 + $0x88] sm:$0xff]
  %v93 = vld [vmem:[%s1 + $0x90] sm:$0xff]
  %v94 = vld [vmem:[%s1 + $0x98] sm:$0xff]
  %v95 = vld [vmem:[%s1 + $0xa0] sm:$0xff]
  %v96 = vld [vmem:[%s1 + $0xa8] sm:$0xff]
  %v97 = vld [vmem:[%s1 + $0xb0] sm:$0xff]
  %v98 = vld [vmem:[%s1 + $0xb8] sm:$0xff]
  %v99 = vld [vmem:[%s1 + $0xc0] sm:$0xff]
  %v100 = vld [vmem:[%s1 + $0xc8] sm:$0xff]
  %v101 = vld [vmem:[%s1 + $0xd0] sm:$0xff]
  %v102 = vld [vmem:[%s1 + $0xd8] sm:$0xff]
  %v103 = vld [vmem:[%s1 + $0xe0] sm:$0xff]
  %v104 = vld [vmem:[%s1 + $0xe8] sm:$0xff]
  %v105 = vld [vmem:[%s1 + $0xf0] sm:$0xff]
  %v106 = vld [vmem:[%s1 + $0xf8] sm:$0xff]
  %vm107 = vcmask 64512
  %v109 = vsel %vm107, %v11, 0
  %v112 = vsel %vm107, %v12, 0
  %114 = vmatprep.subr.mxu0 0.0
  %115 = vmatpush1.msra.mxu0 %v75
  %116 = vmatprep.subr.mxu0 0.0
  %117 = vmatpush1.msra.mxu0 0.0
  %118 = vmatprep.subr.mxu0 0.0
  %119 = vmatpush1.msra.mxu0 0.0
  %120 = vmatprep.subr.mxu0 0.0
  %121 = vmatpush1.msra.mxu0 0.0
  %122 = vmatprep.subr.mxu0 0.0
  %123 = vmatpush1.msra.mxu0 0.0
  %124 = vmatprep.subr.mxu0 0.0
  %125 = vmatpush1.msra.mxu0 0.0
  %126 = vmatprep.subr.mxu0 0.0
  %127 = vmatpush1.msra.mxu0 0.0
  %128 = vmatprep.subr.mxu0 0.0
  %129 = vmatpush1.msra.mxu0 0.0
  %130 = vmatprep.subr.mxu0 0.0
  %131 = vmatpush1.msra.mxu0 0.0
  %132 = vmatprep.subr.mxu0 0.0
  %133 = vmatpush1.msra.mxu0 0.0
  %134 = vmatprep.subr.mxu0 0.0
  %135 = vmatpush1.msra.mxu0 0.0
  %136 = vmatprep.subr.mxu0 0.0
  %137 = vmatpush1.msra.mxu0 0.0
  %138 = vmatprep.subr.mxu0 0.0
  %139 = vmatpush1.msra.mxu0 0.0
  %140 = vmatprep.subr.mxu0 0.0
  %141 = vmatpush1.msra.mxu0 0.0
  %142 = vmatprep.subr.mxu0 0.0
  %143 = vmatpush1.msra.mxu0 0.0
  %144 = vmatprep.subr.mxu0 0.0
  %145 = vmatpush1.msra.mxu0 0.0
  %146 = vmatprep.subr.mxu0 0.0
  %147 = vmatpush1.msra.mxu0 0.0
  %148 = vmatprep.subr.mxu0 0.0
  %149 = vmatpush1.msra.mxu0 0.0
  %150 = vmatprep.subr.mxu0 0.0
  %151 = vmatpush1.msra.mxu0 0.0
  %152 = vmatprep.subr.mxu0 0.0
  %153 = vmatpush1.msra.mxu0 0.0
  %154 = vmatprep.subr.mxu0 0.0
  %155 = vmatpush1.msra.mxu0 0.0
  %156 = vmatprep.subr.mxu0 0.0
  %157 = vmatpush1.msra.mxu0 0.0
  %158 = vmatprep.subr.mxu0 0.0
  %159 = vmatpush1.msra.mxu0 0.0
  %160 = vmatprep.subr.mxu0 0.0
  %161 = vmatpush1.msra.mxu0 0.0
  %162 = vmatprep.subr.mxu0 0.0
  %163 = vmatpush1.msra.mxu0 0.0
  %164 = vmatprep.subr.mxu0 0.0
  %165 = vmatpush1.msra.mxu0 0.0
  %166 = vmatprep.subr.mxu0 0.0
  %167 = vmatpush1.msra.mxu0 0.0
  %168 = vmatprep.subr.mxu0 0.0
  %169 = vmatpush1.msra.mxu0 0.0
  %170 = vmatprep.subr.mxu0 0.0
  %171 = vmatpush1.msra.mxu0 0.0
  %172 = vmatprep.subr.mxu0 0.0
  %173 = vmatpush1.msra.mxu0 0.0
  %174 = vmatprep.subr.mxu0 0.0
  %175 = vmatpush1.msra.mxu0 0.0
  %176 = vmatprep.subr.mxu0 0.0
  %177 = vmatpush1.msra.mxu0 0.0
  %178 = vmatprep.mubr.f32.mxu0 0.0
  %179 = vmatmul.mubr.f32.gmra.mrb[0].mxu0 %v109
  %v180 = vpop.f32.mrb[0].mxu0
  %v181 = vadd.f32 0.0, %v180
  %v182 = vpop.f32.mrb[0].mxu0
  %183 = vmatprep.mubr.f32.mxu0 0.0
  %184 = vmatmul.mubr.f32.gmra.mrb[0].mxu0 %v112
  %v185 = vpop.f32.mrb[0].mxu0
  %v186 = vadd.f32 0.0, %v185
  %v187 = vpop.f32.mrb[0].mxu0
  %188 = vdwg.mxu0
  %v190 = vsel %vm107, %v13, 0
  %v193 = vsel %vm107, %v14, 0
  %195 = vmatprep.subr.mxu0 0.0
  %196 = vmatpush1.msra.mxu0 %v76
  %197 = vmatprep.subr.mxu0 0.0
  %198 = vmatpush1.msra.mxu0 0.0
  %199 = vmatprep.subr.mxu0 0.0
  %200 = vmatpush1.msra.mxu0 0.0
  %201 = vmatprep.subr.mxu0 0.0
  %202 = vmatpush1.msra.mxu0 0.0
  %203 = vmatprep.subr.mxu0 0.0
  %204 = vmatpush1.msra.mxu0 0.0
  %205 = vmatprep.subr.mxu0 0.0
  %206 = vmatpush1.msra.mxu0 0.0
  %207 = vmatprep.subr.mxu0 0.0
  %208 = vmatpush1.msra.mxu0 0.0
  %209 = vmatprep.subr.mxu0 0.0
  %210 = vmatpush1.msra.mxu0 0.0
  %211 = vmatprep.subr.mxu0 0.0
  %212 = vmatpush1.msra.mxu0 0.0
  %213 = vmatprep.subr.mxu0 0.0
  %214 = vmatpush1.msra.mxu0 0.0
  %215 = vmatprep.subr.mxu0 0.0
  %216 = vmatpush1.msra.mxu0 0.0
  %217 = vmatprep.subr.mxu0 0.0
  %218 = vmatpush1.msra.mxu0 0.0
  %219 = vmatprep.subr.mxu0 0.0
  %220 = vmatpush1.msra.mxu0 0.0
  %221 = vmatprep.subr.mxu0 0.0
  %222 = vmatpush1.msra.mxu0 0.0
  %223 = vmatprep.subr.mxu0 0.0
  %224 = vmatpush1.msra.mxu0 0.0
  %225 = vmatprep.subr.mxu0 0.0
  %226 = vmatpush1.msra.mxu0 0.0
  %227 = vmatprep.subr.mxu0 0.0
  %228 = vmatpush1.msra.mxu0 0.0
  %229 = vmatprep.subr.mxu0 0.0
  %230 = vmatpush1.msra.mxu0 0.0
  %231 = vmatprep.subr.mxu0 0.0
  %232 = vmatpush1.msra.mxu0 0.0
  %233 = vmatprep.subr.mxu0 0.0
  %234 = vmatpush1.msra.mxu0 0.0
  %235 = vmatprep.subr.mxu0 0.0
  %236 = vmatpush1.msra.mxu0 0.0
  %237 = vmatprep.subr.mxu0 0.0
  %238 = vmatpush1.msra.mxu0 0.0
  %239 = vmatprep.subr.mxu0 0.0
  %240 = vmatpush1.msra.mxu0 0.0
  %241 = vmatprep.subr.mxu0 0.0
  %242 = vmatpush1.msra.mxu0 0.0
  %243 = vmatprep.subr.mxu0 0.0
  %244 = vmatpush1.msra.mxu0 0.0
  %245 = vmatprep.subr.mxu0 0.0
  %246 = vmatpush1.msra.mxu0 0.0
  %247 = vmatprep.subr.mxu0 0.0
  %248 = vmatpush1.msra.mxu0 0.0
  %249 = vmatprep.subr.mxu0 0.0
  %250 = vmatpush1.msra.mxu0 0.0
  %251 = vmatprep.subr.mxu0 0.0
  %252 = vmatpush1.msra.mxu0 0.0
  %253 = vmatprep.subr.mxu0 0.0
  %254 = vmatpush1.msra.mxu0 0.0
  %255 = vmatprep.subr.mxu0 0.0
  %256 = vmatpush1.msra.mxu0 0.0
  %257 = vmatprep.subr.mxu0 0.0
  %258 = vmatpush1.msra.mxu0 0.0
  %259 = vmatprep.mubr.f32.mxu0 0.0
  %260 = vmatmul.mubr.f32.gmra.mrb[0].mxu0 %v190
  %v261 = vpop.f32.mrb[0].mxu0
  %v262 = vadd.f32 0.0, %v261
  %v263 = vpop.f32.mrb[0].mxu0
  %264 = vmatprep.mubr.f32.mxu0 0.0
  %265 = vmatmul.mubr.f32.gmra.mrb[0].mxu0 %v193
  %v266 = vpop.f32.mrb[0].mxu0
  %v267 = vadd.f32 0.0, %v266
  %v268 = vpop.f32.mrb[0].mxu0
  %269 = vdwg.mxu0
  %v271 = vsel %vm107, %v15, 0
  %v274 = vsel %vm107, %v16, 0
  %276 = vmatprep.subr.mxu0 0.0
  %277 = vmatpush1.msra.mxu0 %v77
  %278 = vmatprep.subr.mxu0 0.0
  %279 = vmatpush1.msra.mxu0 0.0
  %280 = vmatprep.subr.mxu0 0.0
  %281 = vmatpush1.msra.mxu0 0.0
  %282 = vmatprep.subr.mxu0 0.0
  %283 = vmatpush1.msra.mxu0 0.0
  %284 = vmatprep.subr.mxu0 0.0
  %285 = vmatpush1.msra.mxu0 0.0
  %286 = vmatprep.subr.mxu0 0.0
  %287 = vmatpush1.msra.mxu0 0.0
  %288 = vmatprep.subr.mxu0 0.0
  %289 = vmatpush1.msra.mxu0 0.0
  %290 = vmatprep.subr.mxu0 0.0
  %291 = vmatpush1.msra.mxu0 0.0
  %292 = vmatprep.subr.mxu0 0.0
  %293 = vmatpush1.msra.mxu0 0.0
  %294 = vmatprep.subr.mxu0 0.0
  %295 = vmatpush1.msra.mxu0 0.0
  %296 = vmatprep.subr.mxu0 0.0
  %297 = vmatpush1.msra.mxu0 0.0
  %298 = vmatprep.subr.mxu0 0.0
  %299 = vmatpush1.msra.mxu0 0.0
  %300 = vmatprep.subr.mxu0 0.0
  %301 = vmatpush1.msra.mxu0 0.0
  %302 = vmatprep.subr.mxu0 0.0
  %303 = vmatpush1.msra.mxu0 0.0
  %304 = vmatprep.subr.mxu0 0.0
  %305 = vmatpush1.msra.mxu0 0.0
  %306 = vmatprep.subr.mxu0 0.0
  %307 = vmatpush1.msra.mxu0 0.0
  %308 = vmatprep.subr.mxu0 0.0
  %309 = vmatpush1.msra.mxu0 0.0
  %310 = vmatprep.subr.mxu0 0.0
  %311 = vmatpush1.msra.mxu0 0.0
  %312 = vmatprep.subr.mxu0 0.0
  %313 = vmatpush1.msra.mxu0 0.0
  %314 = vmatprep.subr.mxu0 0.0
  %315 = vmatpush1.msra.mxu0 0.0
  %316 = vmatprep.subr.mxu0 0.0
  %317 = vmatpush1.msra.mxu0 0.0
  %318 = vmatprep.subr.mxu0 0.0
  %319 = vmatpush1.msra.mxu0 0.0
  %320 = vmatprep.subr.mxu0 0.0
  %321 = vmatpush1.msra.mxu0 0.0
  %322 = vmatprep.subr.mxu0 0.0
  %323 = vmatpush1.msra.mxu0 0.0
  %324 = vmatprep.subr.mxu0 0.0
  %325 = vmatpush1.msra.mxu0 0.0
  %326 = vmatprep.subr.mxu0 0.0
  %327 = vmatpush1.msra.mxu0 0.0
  %328 = vmatprep.subr.mxu0 0.0
  %329 = vmatpush1.msra.mxu0 0.0
  %330 = vmatprep.subr.mxu0 0.0
  %331 = vmatpush1.msra.mxu0 0.0
  %332 = vmatprep.subr.mxu0 0.0
  %333 = vmatpush1.msra.mxu0 0.0
  %334 = vmatprep.subr.mxu0 0.0
  %335 = vmatpush1.msra.mxu0 0.0
  %336 = vmatprep.subr.mxu0 0.0
  %337 = vmatpush1.msra.mxu0 0.0
  %338 = vmatprep.subr.mxu0 0.0
  %339 = vmatpush1.msra.mxu0 0.0
  %340 = vmatprep.mubr.f32.mxu0 0.0
  %341 = vmatmul.mubr.f32.gmra.mrb[0].mxu0 %v271
  %v342 = vpop.f32.mrb[0].mxu0
  %v343 = vadd.f32 0.0, %v342
  %v344 = vpop.f32.mrb[0].mxu0
  %345 = vmatprep.mubr.f32.mxu0 0.0
  %346 = vmatmul.mubr.f32.gmra.mrb[0].mxu0 %v274
  %v347 = vpop.f32.mrb[0].mxu0
  %v348 = vadd.f32 0.0, %v347
  %v349 = vpop.f32.mrb[0].mxu0
  %350 = vdwg.mxu0
  %v352 = vsel %vm107, %v17, 0
  %v355 = vsel %vm107, %v18, 0
  %357 = vmatprep.subr.mxu0 0.0
  %358 = vmatpush1.msra.mxu0 %v78
  %359 = vmatprep.subr.mxu0 0.0
  %360 = vmatpush1.msra.mxu0 0.0
  %361 = vmatprep.subr.mxu0 0.0
  %362 = vmatpush1.msra.mxu0 0.0
  %363 = vmatprep.subr.mxu0 0.0
  %364 = vmatpush1.msra.mxu0 0.0
  %365 = vmatprep.subr.mxu0 0.0
  %366 = vmatpush1.msra.mxu0 0.0
  %367 = vmatprep.subr.mxu0 0.0
  %368 = vmatpush1.msra.mxu0 0.0
  %369 = vmatprep.subr.mxu0 0.0
  %370 = vmatpush1.msra.mxu0 0.0
  %371 = vmatprep.subr.mxu0 0.0
  %372 = vmatpush1.msra.mxu0 0.0
  %373 = vmatprep.subr.mxu0 0.0
  %374 = vmatpush1.msra.mxu0 0.0
  %375 = vmatprep.subr.mxu0 0.0
  %376 = vmatpush1.msra.mxu0 0.0
  %377 = vmatprep.subr.mxu0 0.0
  %378 = vmatpush1.msra.mxu0 0.0
  %379 = vmatprep.subr.mxu0 0.0
  %380 = vmatpush1.msra.mxu0 0.0
  %381 = vmatprep.subr.mxu0 0.0
  %382 = vmatpush1.msra.mxu0 0.0
  %383 = vmatprep.subr.mxu0 0.0
  %384 = vmatpush1.msra.mxu0 0.0
  %385 = vmatprep.subr.mxu0 0.0
  %386 = vmatpush1.msra.mxu0 0.0
  %387 = vmatprep.subr.mxu0 0.0
  %388 = vmatpush1.msra.mxu0 0.0
  %389 = vmatprep.subr.mxu0 0.0
  %390 = vmatpush1.msra.mxu0 0.0
  %391 = vmatprep.subr.mxu0 0.0
  %392 = vmatpush1.msra.mxu0 0.0
  %393 = vmatprep.subr.mxu0 0.0
  %394 = vmatpush1.msra.mxu0 0.0
  %395 = vmatprep.subr.mxu0 0.0
  %396 = vmatpush1.msra.mxu0 0.0
  %397 = vmatprep.subr.mxu0 0.0
  %398 = vmatpush1.msra.mxu0 0.0
  %399 = vmatprep.subr.mxu0 0.0
  %400 = vmatpush1.msra.mxu0 0.0
  %401 = vmatprep.subr.mxu0 0.0
  %402 = vmatpush1.msra.mxu0 0.0
  %403 = vmatprep.subr.mxu0 0.0
  %404 = vmatpush1.msra.mxu0 0.0
  %405 = vmatprep.subr.mxu0 0.0
  %406 = vmatpush1.msra.mxu0 0.0
  %407 = vmatprep.subr.mxu0 0.0
  %408 = vmatpush1.msra.mxu0 0.0
  %409 = vmatprep.subr.mxu0 0.0
  %410 = vmatpush1.msra.mxu0 0.0
  %411 = vmatprep.subr.mxu0 0.0
  %412 = vmatpush1.msra.mxu0 0.0
  %413 = vmatprep.subr.mxu0 0.0
  %414 = vmatpush1.msra.mxu0 0.0
  %415 = vmatprep.subr.mxu0 0.0
  %416 = vmatpush1.msra.mxu0 0.0
  %417 = vmatprep.subr.mxu0 0.0
  %418 = vmatpush1.msra.mxu0 0.0
  %419 = vmatprep.subr.mxu0 0.0
  %420 = vmatpush1.msra.mxu0 0.0
  %421 = vmatprep.mubr.f32.mxu0 0.0
  %422 = vmatmul.mubr.f32.gmra.mrb[0].mxu0 %v352
  %v423 = vpop.f32.mrb[0].mxu0
  %v424 = vadd.f32 0.0, %v423
  %v425 = vpop.f32.mrb[0].mxu0
  %426 = vmatprep.mubr.f32.mxu0 0.0
  %427 = vmatmul.mubr.f32.gmra.mrb[0].mxu0 %v355
  %v428 = vpop.f32.mrb[0].mxu0
  %v429 = vadd.f32 0.0, %v428
  %v430 = vpop.f32.mrb[0].mxu0
  %431 = vdwg.mxu0
  %v433 = vsel %vm107, %v19, 0
  %v436 = vsel %vm107, %v20, 0
  %438 = vmatprep.subr.mxu0 0.0
  %439 = vmatpush1.msra.mxu0 %v79
  %440 = vmatprep.subr.mxu0 0.0
  %441 = vmatpush1.msra.mxu0 0.0
  %442 = vmatprep.subr.mxu0 0.0
  %443 = vmatpush1.msra.mxu0 0.0
  %444 = vmatprep.subr.mxu0 0.0
  %445 = vmatpush1.msra.mxu0 0.0
  %446 = vmatprep.subr.mxu0 0.0
  %447 = vmatpush1.msra.mxu0 0.0
  %448 = vmatprep.subr.mxu0 0.0
  %449 = vmatpush1.msra.mxu0 0.0
  %450 = vmatprep.subr.mxu0 0.0
  %451 = vmatpush1.msra.mxu0 0.0
  %452 = vmatprep.subr.mxu0 0.0
  %453 = vmatpush1.msra.mxu0 0.0
  %454 = vmatprep.subr.mxu0 0.0
  %455 = vmatpush1.msra.mxu0 0.0
  %456 = vmatprep.subr.mxu0 0.0
  %457 = vmatpush1.msra.mxu0 0.0
  %458 = vmatprep.subr.mxu0 0.0
  %459 = vmatpush1.msra.mxu0 0.0
  %460 = vmatprep.subr.mxu0 0.0
  %461 = vmatpush1.msra.mxu0 0.0
  %462 = vmatprep.subr.mxu0 0.0
  %463 = vmatpush1.msra.mxu0 0.0
  %464 = vmatprep.subr.mxu0 0.0
  %465 = vmatpush1.msra.mxu0 0.0
  %466 = vmatprep.subr.mxu0 0.0
  %467 = vmatpush1.msra.mxu0 0.0
  %468 = vmatprep.subr.mxu0 0.0
  %469 = vmatpush1.msra.mxu0 0.0
  %470 = vmatprep.subr.mxu0 0.0
  %471 = vmatpush1.msra.mxu0 0.0
  %472 = vmatprep.subr.mxu0 0.0
  %473 = vmatpush1.msra.mxu0 0.0
  %474 = vmatprep.subr.mxu0 0.0
  %475 = vmatpush1.msra.mxu0 0.0
  %476 = vmatprep.subr.mxu0 0.0
  %477 = vmatpush1.msra.mxu0 0.0
  %478 = vmatprep.subr.mxu0 0.0
  %479 = vmatpush1.msra.mxu0 0.0
  %480 = vmatprep.subr.mxu0 0.0
  %481 = vmatpush1.msra.mxu0 0.0
  %482 = vmatprep.subr.mxu0 0.0
  %483 = vmatpush1.msra.mxu0 0.0
  %484 = vmatprep.subr.mxu0 0.0
  %485 = vmatpush1.msra.mxu0 0.0
  %486 = vmatprep.subr.mxu0 0.0
  %487 = vmatpush1.msra.mxu0 0.0
  %488 = vmatprep.subr.mxu0 0.0
  %489 = vmatpush1.msra.mxu0 0.0
  %490 = vmatprep.subr.mxu0 0.0
  %491 = vmatpush1.msra.mxu0 0.0
  %492 = vmatprep.subr.mxu0 0.0
  %493 = vmatpush1.msra.mxu0 0.0
  %494 = vmatprep.subr.mxu0 0.0
  %495 = vmatpush1.msra.mxu0 0.0
  %496 = vmatprep.subr.mxu0 0.0
  %497 = vmatpush1.msra.mxu0 0.0
  %498 = vmatprep.subr.mxu0 0.0
  %499 = vmatpush1.msra.mxu0 0.0
  %500 = vmatprep.subr.mxu0 0.0
  %501 = vmatpush1.msra.mxu0 0.0
  %502 = vmatprep.mubr.f32.mxu0 0.0
  %503 = vmatmul.mubr.f32.gmra.mrb[0].mxu0 %v433
  %v504 = vpop.f32.mrb[0].mxu0
  %v505 = vadd.f32 0.0, %v504
  %v506 = vpop.f32.mrb[0].mxu0
  %507 = vmatprep.mubr.f32.mxu0 0.0
  %508 = vmatmul.mubr.f32.gmra.mrb[0].mxu0 %v436
  %v509 = vpop.f32.mrb[0].mxu0
  %v510 = vadd.f32 0.0, %v509
  %v511 = vpop.f32.mrb[0].mxu0
  %512 = vdwg.mxu0
  %v514 = vsel %vm107, %v21, 0
  %v517 = vsel %vm107, %v22, 0
  %519 = vmatprep.subr.mxu0 0.0
  %520 = vmatpush1.msra.mxu0 %v80
  %521 = vmatprep.subr.mxu0 0.0
  %522 = vmatpush1.msra.mxu0 0.0
  %523 = vmatprep.subr.mxu0 0.0
  %524 = vmatpush1.msra.mxu0 0.0
  %525 = vmatprep.subr.mxu0 0.0
  %526 = vmatpush1.msra.mxu0 0.0
  %527 = vmatprep.subr.mxu0 0.0
  %528 = vmatpush1.msra.mxu0 0.0
  %529 = vmatprep.subr.mxu0 0.0
  %530 = vmatpush1.msra.mxu0 0.0
  %531 = vmatprep.subr.mxu0 0.0
  %532 = vmatpush1.msra.mxu0 0.0
  %533 = vmatprep.subr.mxu0 0.0
  %534 = vmatpush1.msra.mxu0 0.0
  %535 = vmatprep.subr.mxu0 0.0
  %536 = vmatpush1.msra.mxu0 0.0
  %537 = vmatprep.subr.mxu0 0.0
  %538 = vmatpush1.msra.mxu0 0.0
  %539 = vmatprep.subr.mxu0 0.0
  %540 = vmatpush1.msra.mxu0 0.0
  %541 = vmatprep.subr.mxu0 0.0
  %542 = vmatpush1.msra.mxu0 0.0
  %543 = vmatprep.subr.mxu0 0.0
  %544 = vmatpush1.msra.mxu0 0.0
  %545 = vmatprep.subr.mxu0 0.0
  %546 = vmatpush1.msra.mxu0 0.0
  %547 = vmatprep.subr.mxu0 0.0
  %548 = vmatpush1.msra.mxu0 0.0
  %549 = vmatprep.subr.mxu0 0.0
  %550 = vmatpush1.msra.mxu0 0.0
  %551 = vmatprep.subr.mxu0 0.0
  %552 = vmatpush1.msra.mxu0 0.0
  %553 = vmatprep.subr.mxu0 0.0
  %554 = vmatpush1.msra.mxu0 0.0
  %555 = vmatprep.subr.mxu0 0.0
  %556 = vmatpush1.msra.mxu0 0.0
  %557 = vmatprep.subr.mxu0 0.0
  %558 = vmatpush1.msra.mxu0 0.0
  %559 = vmatprep.subr.mxu0 0.0
  %560 = vmatpush1.msra.mxu0 0.0
  %561 = vmatprep.subr.mxu0 0.0
  %562 = vmatpush1.msra.mxu0 0.0
  %563 = vmatprep.subr.mxu0 0.0
  %564 = vmatpush1.msra.mxu0 0.0
  %565 = vmatprep.subr.mxu0 0.0
  %566 = vmatpush1.msra.mxu0 0.0
  %567 = vmatprep.subr.mxu0 0.0
  %568 = vmatpush1.msra.mxu0 0.0
  %569 = vmatprep.subr.mxu0 0.0
  %570 = vmatpush1.msra.mxu0 0.0
  %571 = vmatprep.subr.mxu0 0.0
  %572 = vmatpush1.msra.mxu0 0.0
  %573 = vmatprep.subr.mxu0 0.0
  %574 = vmatpush1.msra.mxu0 0.0
  %575 = vmatprep.subr.mxu0 0.0
  %576 = vmatpush1.msra.mxu0 0.0
  %577 = vmatprep.subr.mxu0 0.0
  %578 = vmatpush1.msra.mxu0 0.0
  %579 = vmatprep.subr.mxu0 0.0
  %580 = vmatpush1.msra.mxu0 0.0
  %581 = vmatprep.subr.mxu0 0.0
  %582 = vmatpush1.msra.mxu0 0.0
  %583 = vmatprep.mubr.f32.mxu0 0.0
  %584 = vmatmul.mubr.f32.gmra.mrb[0].mxu0 %v514
  %v585 = vpop.f32.mrb[0].mxu0
  %v586 = vadd.f32 0.0, %v585
  %v587 = vpop.f32.mrb[0].mxu0
  %588 = vmatprep.mubr.f32.mxu0 0.0
  %589 = vmatmul.mubr.f32.gmra.mrb[0].mxu0 %v517
  %v590 = vpop.f32.mrb[0].mxu0
  %v591 = vadd.f32 0.0, %v590
  %v592 = vpop.f32.mrb[0].mxu0
  %593 = vdwg.mxu0
  %v595 = vsel %vm107, %v23, 0
  %v598 = vsel %vm107, %v24, 0
  %600 = vmatprep.subr.mxu0 0.0
  %601 = vmatpush1.msra.mxu0 %v81
  %602 = vmatprep.subr.mxu0 0.0
  %603 = vmatpush1.msra.mxu0 0.0
  %604 = vmatprep.subr.mxu0 0.0
  %605 = vmatpush1.msra.mxu0 0.0
  %606 = vmatprep.subr.mxu0 0.0
  %607 = vmatpush1.msra.mxu0 0.0
  %608 = vmatprep.subr.mxu0 0.0
  %609 = vmatpush1.msra.mxu0 0.0
  %610 = vmatprep.subr.mxu0 0.0
  %611 = vmatpush1.msra.mxu0 0.0
  %612 = vmatprep.subr.mxu0 0.0
  %613 = vmatpush1.msra.mxu0 0.0
  %614 = vmatprep.subr.mxu0 0.0
  %615 = vmatpush1.msra.mxu0 0.0
  %616 = vmatprep.subr.mxu0 0.0
  %617 = vmatpush1.msra.mxu0 0.0
  %618 = vmatprep.subr.mxu0 0.0
  %619 = vmatpush1.msra.mxu0 0.0
  %620 = vmatprep.subr.mxu0 0.0
  %621 = vmatpush1.msra.mxu0 0.0
  %622 = vmatprep.subr.mxu0 0.0
  %623 = vmatpush1.msra.mxu0 0.0
  %624 = vmatprep.subr.mxu0 0.0
  %625 = vmatpush1.msra.mxu0 0.0
  %626 = vmatprep.subr.mxu0 0.0
  %627 = vmatpush1.msra.mxu0 0.0
  %628 = vmatprep.subr.mxu0 0.0
  %629 = vmatpush1.msra.mxu0 0.0
  %630 = vmatprep.subr.mxu0 0.0
  %631 = vmatpush1.msra.mxu0 0.0
  %632 = vmatprep.subr.mxu0 0.0
  %633 = vmatpush1.msra.mxu0 0.0
  %634 = vmatprep.subr.mxu0 0.0
  %635 = vmatpush1.msra.mxu0 0.0
  %636 = vmatprep.subr.mxu0 0.0
  %637 = vmatpush1.msra.mxu0 0.0
  %638 = vmatprep.subr.mxu0 0.0
  %639 = vmatpush1.msra.mxu0 0.0
  %640 = vmatprep.subr.mxu0 0.0
  %641 = vmatpush1.msra.mxu0 0.0
  %642 = vmatprep.subr.mxu0 0.0
  %643 = vmatpush1.msra.mxu0 0.0
  %644 = vmatprep.subr.mxu0 0.0
  %645 = vmatpush1.msra.mxu0 0.0
  %646 = vmatprep.subr.mxu0 0.0
  %647 = vmatpush1.msra.mxu0 0.0
  %648 = vmatprep.subr.mxu0 0.0
  %649 = vmatpush1.msra.mxu0 0.0
  %650 = vmatprep.subr.mxu0 0.0
  %651 = vmatpush1.msra.mxu0 0.0
  %652 = vmatprep.subr.mxu0 0.0
  %653 = vmatpush1.msra.mxu0 0.0
  %654 = vmatprep.subr.mxu0 0.0
  %655 = vmatpush1.msra.mxu0 0.0
  %656 = vmatprep.subr.mxu0 0.0
  %657 = vmatpush1.msra.mxu0 0.0
  %658 = vmatprep.subr.mxu0 0.0
  %659 = vmatpush1.msra.mxu0 0.0
  %660 = vmatprep.subr.mxu0 0.0
  %661 = vmatpush1.msra.mxu0 0.0
  %662 = vmatprep.subr.mxu0 0.0
  %663 = vmatpush1.msra.mxu0 0.0
  %664 = vmatprep.mubr.f32.mxu0 0.0
  %665 = vmatmul.mubr.f32.gmra.mrb[0].mxu0 %v595
  %v666 = vpop.f32.mrb[0].mxu0
  %v667 = vadd.f32 0.0, %v666
  %v668 = vpop.f32.mrb[0].mxu0
  %669 = vmatprep.mubr.f32.mxu0 0.0
  %670 = vmatmul.mubr.f32.gmra.mrb[0].mxu0 %v598
  %v671 = vpop.f32.mrb[0].mxu0
  %v672 = vadd.f32 0.0, %v671
  %v673 = vpop.f32.mrb[0].mxu0
  %674 = vdwg.mxu0
  %v676 = vsel %vm107, %v25, 0
  %v679 = vsel %vm107, %v26, 0
  %681 = vmatprep.subr.mxu0 0.0
  %682 = vmatpush1.msra.mxu0 %v82
  %683 = vmatprep.subr.mxu0 0.0
  %684 = vmatpush1.msra.mxu0 0.0
  %685 = vmatprep.subr.mxu0 0.0
  %686 = vmatpush1.msra.mxu0 0.0
  %687 = vmatprep.subr.mxu0 0.0
  %688 = vmatpush1.msra.mxu0 0.0
  %689 = vmatprep.subr.mxu0 0.0
  %690 = vmatpush1.msra.mxu0 0.0
  %691 = vmatprep.subr.mxu0 0.0
  %692 = vmatpush1.msra.mxu0 0.0
  %693 = vmatprep.subr.mxu0 0.0
  %694 = vmatpush1.msra.mxu0 0.0
  %695 = vmatprep.subr.mxu0 0.0
  %696 = vmatpush1.msra.mxu0 0.0
  %697 = vmatprep.subr.mxu0 0.0
  %698 = vmatpush1.msra.mxu0 0.0
  %699 = vmatprep.subr.mxu0 0.0
  %700 = vmatpush1.msra.mxu0 0.0
  %701 = vmatprep.subr.mxu0 0.0
  %702 = vmatpush1.msra.mxu0 0.0
  %703 = vmatprep.subr.mxu0 0.0
  %704 = vmatpush1.msra.mxu0 0.0
  %705 = vmatprep.subr.mxu0 0.0
  %706 = vmatpush1.msra.mxu0 0.0
  %707 = vmatprep.subr.mxu0 0.0
  %708 = vmatpush1.msra.mxu0 0.0
  %709 = vmatprep.subr.mxu0 0.0
  %710 = vmatpush1.msra.mxu0 0.0
  %711 = vmatprep.subr.mxu0 0.0
  %712 = vmatpush1.msra.mxu0 0.0
  %713 = vmatprep.subr.mxu0 0.0
  %714 = vmatpush1.msra.mxu0 0.0
  %715 = vmatprep.subr.mxu0 0.0
  %716 = vmatpush1.msra.mxu0 0.0
  %717 = vmatprep.subr.mxu0 0.0
  %718 = vmatpush1.msra.mxu0 0.0
  %719 = vmatprep.subr.mxu0 0.0
  %720 = vmatpush1.msra.mxu0 0.0
  %721 = vmatprep.subr.mxu0 0.0
  %722 = vmatpush1.msra.mxu0 0.0
  %723 = vmatprep.subr.mxu0 0.0
  %724 = vmatpush1.msra.mxu0 0.0
  %725 = vmatprep.subr.mxu0 0.0
  %726 = vmatpush1.msra.mxu0 0.0
  %727 = vmatprep.subr.mxu0 0.0
  %728 = vmatpush1.msra.mxu0 0.0
  %729 = vmatprep.subr.mxu0 0.0
  %730 = vmatpush1.msra.mxu0 0.0
  %731 = vmatprep.subr.mxu0 0.0
  %732 = vmatpush1.msra.mxu0 0.0
  %733 = vmatprep.subr.mxu0 0.0
  %734 = vmatpush1.msra.mxu0 0.0
  %735 = vmatprep.subr.mxu0 0.0
  %736 = vmatpush1.msra.mxu0 0.0
  %737 = vmatprep.subr.mxu0 0.0
  %738 = vmatpush1.msra.mxu0 0.0
  %739 = vmatprep.subr.mxu0 0.0
  %740 = vmatpush1.msra.mxu0 0.0
  %741 = vmatprep.subr.mxu0 0.0
  %742 = vmatpush1.msra.mxu0 0.0
  %743 = vmatprep.subr.mxu0 0.0
  %744 = vmatpush1.msra.mxu0 0.0
  %745 = vmatprep.mubr.f32.mxu0 0.0
  %746 = vmatmul.mubr.f32.gmra.mrb[0].mxu0 %v676
  %v747 = vpop.f32.mrb[0].mxu0
  %v748 = vadd.f32 0.0, %v747
  %v749 = vpop.f32.mrb[0].mxu0
  %750 = vmatprep.mubr.f32.mxu0 0.0
  %751 = vmatmul.mubr.f32.gmra.mrb[0].mxu0 %v679
  %v752 = vpop.f32.mrb[0].mxu0
  %v753 = vadd.f32 0.0, %v752
  %v754 = vpop.f32.mrb[0].mxu0
  %755 = vdwg.mxu0
  %v757 = vsel %vm107, %v27, 0
  %v760 = vsel %vm107, %v28, 0
  %762 = vmatprep.subr.mxu0 0.0
  %763 = vmatpush1.msra.mxu0 %v83
  %764 = vmatprep.subr.mxu0 0.0
  %765 = vmatpush1.msra.mxu0 0.0
  %766 = vmatprep.subr.mxu0 0.0
  %767 = vmatpush1.msra.mxu0 0.0
  %768 = vmatprep.subr.mxu0 0.0
  %769 = vmatpush1.msra.mxu0 0.0
  %770 = vmatprep.subr.mxu0 0.0
  %771 = vmatpush1.msra.mxu0 0.0
  %772 = vmatprep.subr.mxu0 0.0
  %773 = vmatpush1.msra.mxu0 0.0
  %774 = vmatprep.subr.mxu0 0.0
  %775 = vmatpush1.msra.mxu0 0.0
  %776 = vmatprep.subr.mxu0 0.0
  %777 = vmatpush1.msra.mxu0 0.0
  %778 = vmatprep.subr.mxu0 0.0
  %779 = vmatpush1.msra.mxu0 0.0
  %780 = vmatprep.subr.mxu0 0.0
  %781 = vmatpush1.msra.mxu0 0.0
  %782 = vmatprep.subr.mxu0 0.0
  %783 = vmatpush1.msra.mxu0 0.0
  %784 = vmatprep.subr.mxu0 0.0
  %785 = vmatpush1.msra.mxu0 0.0
  %786 = vmatprep.subr.mxu0 0.0
  %787 = vmatpush1.msra.mxu0 0.0
  %788 = vmatprep.subr.mxu0 0.0
  %789 = vmatpush1.msra.mxu0 0.0
  %790 = vmatprep.subr.mxu0 0.0
  %791 = vmatpush1.msra.mxu0 0.0
  %792 = vmatprep.subr.mxu0 0.0
  %793 = vmatpush1.msra.mxu0 0.0
  %794 = vmatprep.subr.mxu0 0.0
  %795 = vmatpush1.msra.mxu0 0.0
  %796 = vmatprep.subr.mxu0 0.0
  %797 = vmatpush1.msra.mxu0 0.0
  %798 = vmatprep.subr.mxu0 0.0
  %799 = vmatpush1.msra.mxu0 0.0
  %800 = vmatprep.subr.mxu0 0.0
  %801 = vmatpush1.msra.mxu0 0.0
  %802 = vmatprep.subr.mxu0 0.0
  %803 = vmatpush1.msra.mxu0 0.0
  %804 = vmatprep.subr.mxu0 0.0
  %805 = vmatpush1.msra.mxu0 0.0
  %806 = vmatprep.subr.mxu0 0.0
  %807 = vmatpush1.msra.mxu0 0.0
  %808 = vmatprep.subr.mxu0 0.0
  %809 = vmatpush1.msra.mxu0 0.0
  %810 = vmatprep.subr.mxu0 0.0
  %811 = vmatpush1.msra.mxu0 0.0
  %812 = vmatprep.subr.mxu0 0.0
  %813 = vmatpush1.msra.mxu0 0.0
  %814 = vmatprep.subr.mxu0 0.0
  %815 = vmatpush1.msra.mxu0 0.0
  %816 = vmatprep.subr.mxu0 0.0
  %817 = vmatpush1.msra.mxu0 0.0
  %818 = vmatprep.subr.mxu0 0.0
  %819 = vmatpush1.msra.mxu0 0.0
  %820 = vmatprep.subr.mxu0 0.0
  %821 = vmatpush1.msra.mxu0 0.0
  %822 = vmatprep.subr.mxu0 0.0
  %823 = vmatpush1.msra.mxu0 0.0
  %824 = vmatprep.subr.mxu0 0.0
  %825 = vmatpush1.msra.mxu0 0.0
  %826 = vmatprep.mubr.f32.mxu0 0.0
  %827 = vmatmul.mubr.f32.gmra.mrb[0].mxu0 %v757
  %v828 = vpop.f32.mrb[0].mxu0
  %v829 = vadd.f32 0.0, %v828
  %v830 = vpop.f32.mrb[0].mxu0
  %831 = vmatprep.mubr.f32.mxu0 0.0
  %832 = vmatmul.mubr.f32.gmra.mrb[0].mxu0 %v760
  %v833 = vpop.f32.mrb[0].mxu0
  %v834 = vadd.f32 0.0, %v833
  %v835 = vpop.f32.mrb[0].mxu0
  %836 = vdwg.mxu0
  %v838 = vsel %vm107, %v29, 0
  %v841 = vsel %vm107, %v30, 0
  %843 = vmatprep.subr.mxu0 0.0
  %844 = vmatpush1.msra.mxu0 %v84
  %845 = vmatprep.subr.mxu0 0.0
  %846 = vmatpush1.msra.mxu0 0.0
  %847 = vmatprep.subr.mxu0 0.0
  %848 = vmatpush1.msra.mxu0 0.0
  %849 = vmatprep.subr.mxu0 0.0
  %850 = vmatpush1.msra.mxu0 0.0
  %851 = vmatprep.subr.mxu0 0.0
  %852 = vmatpush1.msra.mxu0 0.0
  %853 = vmatprep.subr.mxu0 0.0
  %854 = vmatpush1.msra.mxu0 0.0
  %855 = vmatprep.subr.mxu0 0.0
  %856 = vmatpush1.msra.mxu0 0.0
  %857 = vmatprep.subr.mxu0 0.0
  %858 = vmatpush1.msra.mxu0 0.0
  %859 = vmatprep.subr.mxu0 0.0
  %860 = vmatpush1.msra.mxu0 0.0
  %861 = vmatprep.subr.mxu0 0.0
  %862 = vmatpush1.msra.mxu0 0.0
  %863 = vmatprep.subr.mxu0 0.0
  %864 = vmatpush1.msra.mxu0 0.0
  %865 = vmatprep.subr.mxu0 0.0
  %866 = vmatpush1.msra.mxu0 0.0
  %867 = vmatprep.subr.mxu0 0.0
  %868 = vmatpush1.msra.mxu0 0.0
  %869 = vmatprep.subr.mxu0 0.0
  %870 = vmatpush1.msra.mxu0 0.0
  %871 = vmatprep.subr.mxu0 0.0
  %872 = vmatpush1.msra.mxu0 0.0
  %873 = vmatprep.subr.mxu0 0.0
  %874 = vmatpush1.msra.mxu0 0.0
  %875 = vmatprep.subr.mxu0 0.0
  %876 = vmatpush1.msra.mxu0 0.0
  %877 = vmatprep.subr.mxu0 0.0
  %878 = vmatpush1.msra.mxu0 0.0
  %879 = vmatprep.subr.mxu0 0.0
  %880 = vmatpush1.msra.mxu0 0.0
  %881 = vmatprep.subr.mxu0 0.0
  %882 = vmatpush1.msra.mxu0 0.0
  %883 = vmatprep.subr.mxu0 0.0
  %884 = vmatpush1.msra.mxu0 0.0
  %885 = vmatprep.subr.mxu0 0.0
  %886 = vmatpush1.msra.mxu0 0.0
  %887 = vmatprep.subr.mxu0 0.0
  %888 = vmatpush1.msra.mxu0 0.0
  %889 = vmatprep.subr.mxu0 0.0
  %890 = vmatpush1.msra.mxu0 0.0
  %891 = vmatprep.subr.mxu0 0.0
  %892 = vmatpush1.msra.mxu0 0.0
  %893 = vmatprep.subr.mxu0 0.0
  %894 = vmatpush1.msra.mxu0 0.0
  %895 = vmatprep.subr.mxu0 0.0
  %896 = vmatpush1.msra.mxu0 0.0
  %897 = vmatprep.subr.mxu0 0.0
  %898 = vmatpush1.msra.mxu0 0.0
  %899 = vmatprep.subr.mxu0 0.0
  %900 = vmatpush1.msra.mxu0 0.0
  %901 = vmatprep.subr.mxu0 0.0
  %902 = vmatpush1.msra.mxu0 0.0
  %903 = vmatprep.subr.mxu0 0.0
  %904 = vmatpush1.msra.mxu0 0.0
  %905 = vmatprep.subr.mxu0 0.0
  %906 = vmatpush1.msra.mxu0 0.0
  %907 = vmatprep.mubr.f32.mxu0 0.0
  %908 = vmatmul.mubr.f32.gmra.mrb[0].mxu0 %v838
  %v909 = vpop.f32.mrb[0].mxu0
  %v910 = vadd.f32 0.0, %v909
  %v911 = vpop.f32.mrb[0].mxu0
  %912 = vmatprep.mubr.f32.mxu0 0.0
  %913 = vmatmul.mubr.f32.gmra.mrb[0].mxu0 %v841
  %v914 = vpop.f32.mrb[0].mxu0
  %v915 = vadd.f32 0.0, %v914
  %v916 = vpop.f32.mrb[0].mxu0
  %917 = vdwg.mxu0
  %v919 = vsel %vm107, %v31, 0
  %v922 = vsel %vm107, %v32, 0
  %924 = vmatprep.subr.mxu0 0.0
  %925 = vmatpush1.msra.mxu0 %v85
  %926 = vmatprep.subr.mxu0 0.0
  %927 = vmatpush1.msra.mxu0 0.0
  %928 = vmatprep.subr.mxu0 0.0
  %929 = vmatpush1.msra.mxu0 0.0
  %930 = vmatprep.subr.mxu0 0.0
  %931 = vmatpush1.msra.mxu0 0.0
  %932 = vmatprep.subr.mxu0 0.0
  %933 = vmatpush1.msra.mxu0 0.0
  %934 = vmatprep.subr.mxu0 0.0
  %935 = vmatpush1.msra.mxu0 0.0
  %936 = vmatprep.subr.mxu0 0.0
  %937 = vmatpush1.msra.mxu0 0.0
  %938 = vmatprep.subr.mxu0 0.0
  %939 = vmatpush1.msra.mxu0 0.0
  %940 = vmatprep.subr.mxu0 0.0
  %941 = vmatpush1.msra.mxu0 0.0
  %942 = vmatprep.subr.mxu0 0.0
  %943 = vmatpush1.msra.mxu0 0.0
  %944 = vmatprep.subr.mxu0 0.0
  %945 = vmatpush1.msra.mxu0 0.0
  %946 = vmatprep.subr.mxu0 0.0
  %947 = vmatpush1.msra.mxu0 0.0
  %948 = vmatprep.subr.mxu0 0.0
  %949 = vmatpush1.msra.mxu0 0.0
  %950 = vmatprep.subr.mxu0 0.0
  %951 = vmatpush1.msra.mxu0 0.0
  %952 = vmatprep.subr.mxu0 0.0
  %953 = vmatpush1.msra.mxu0 0.0
  %954 = vmatprep.subr.mxu0 0.0
  %955 = vmatpush1.msra.mxu0 0.0
  %956 = vmatprep.subr.mxu0 0.0
  %957 = vmatpush1.msra.mxu0 0.0
  %958 = vmatprep.subr.mxu0 0.0
  %959 = vmatpush1.msra.mxu0 0.0
  %960 = vmatprep.subr.mxu0 0.0
  %961 = vmatpush1.msra.mxu0 0.0
  %962 = vmatprep.subr.mxu0 0.0
  %963 = vmatpush1.msra.mxu0 0.0
  %964 = vmatprep.subr.mxu0 0.0
  %965 = vmatpush1.msra.mxu0 0.0
  %966 = vmatprep.subr.mxu0 0.0
  %967 = vmatpush1.msra.mxu0 0.0
  %968 = vmatprep.subr.mxu0 0.0
  %969 = vmatpush1.msra.mxu0 0.0
  %970 = vmatprep.subr.mxu0 0.0
  %971 = vmatpush1.msra.mxu0 0.0
  %972 = vmatprep.subr.mxu0 0.0
  %973 = vmatpush1.msra.mxu0 0.0
  %974 = vmatprep.subr.mxu0 0.0
  %975 = vmatpush1.msra.mxu0 0.0
  %976 = vmatprep.subr.mxu0 0.0
  %977 = vmatpush1.msra.mxu0 0.0
  %978 = vmatprep.subr.mxu0 0.0
  %979 = vmatpush1.msra.mxu0 0.0
  %980 = vmatprep.subr.mxu0 0.0
  %981 = vmatpush1.msra.mxu0 0.0
  %982 = vmatprep.subr.mxu0 0.0
  %983 = vmatpush1.msra.mxu0 0.0
  %984 = vmatprep.subr.mxu0 0.0
  %985 = vmatpush1.msra.mxu0 0.0
  %986 = vmatprep.subr.mxu0 0.0
  %987 = vmatpush1.msra.mxu0 0.0
  %988 = vmatprep.mubr.f32.mxu0 0.0
  %989 = vmatmul.mubr.f32.gmra.mrb[0].mxu0 %v919
  %v990 = vpop.f32.mrb[0].mxu0
  %v991 = vadd.f32 0.0, %v990
  %v992 = vpop.f32.mrb[0].mxu0
  %993 = vmatprep.mubr.f32.mxu0 0.0
  %994 = vmatmul.mubr.f32.gmra.mrb[0].mxu0 %v922
  %v995 = vpop.f32.mrb[0].mxu0
  %v996 = vadd.f32 0.0, %v995
  %v997 = vpop.f32.mrb[0].mxu0
  %998 = vdwg.mxu0
  %v1000 = vsel %vm107, %v33, 0
  %v1003 = vsel %vm107, %v34, 0
  %1005 = vmatprep.subr.mxu0 0.0
  %1006 = vmatpush1.msra.mxu0 %v86
  %1007 = vmatprep.subr.mxu0 0.0
  %1008 = vmatpush1.msra.mxu0 0.0
  %1009 = vmatprep.subr.mxu0 0.0
  %1010 = vmatpush1.msra.mxu0 0.0
  %1011 = vmatprep.subr.mxu0 0.0
  %1012 = vmatpush1.msra.mxu0 0.0
  %1013 = vmatprep.subr.mxu0 0.0
  %1014 = vmatpush1.msra.mxu0 0.0
  %1015 = vmatprep.subr.mxu0 0.0
  %1016 = vmatpush1.msra.mxu0 0.0
  %1017 = vmatprep.subr.mxu0 0.0
  %1018 = vmatpush1.msra.mxu0 0.0
  %1019 = vmatprep.subr.mxu0 0.0
  %1020 = vmatpush1.msra.mxu0 0.0
  %1021 = vmatprep.subr.mxu0 0.0
  %1022 = vmatpush1.msra.mxu0 0.0
  %1023 = vmatprep.subr.mxu0 0.0
  %1024 = vmatpush1.msra.mxu0 0.0
  %1025 = vmatprep.subr.mxu0 0.0
  %1026 = vmatpush1.msra.mxu0 0.0
  %1027 = vmatprep.subr.mxu0 0.0
  %1028 = vmatpush1.msra.mxu0 0.0
  %1029 = vmatprep.subr.mxu0 0.0
  %1030 = vmatpush1.msra.mxu0 0.0
  %1031 = vmatprep.subr.mxu0 0.0
  %1032 = vmatpush1.msra.mxu0 0.0
  %1033 = vmatprep.subr.mxu0 0.0
  %1034 = vmatpush1.msra.mxu0 0.0
  %1035 = vmatprep.subr.mxu0 0.0
  %1036 = vmatpush1.msra.mxu0 0.0
  %1037 = vmatprep.subr.mxu0 0.0
  %1038 = vmatpush1.msra.mxu0 0.0
  %1039 = vmatprep.subr.mxu0 0.0
  %1040 = vmatpush1.msra.mxu0 0.0
  %1041 = vmatprep.subr.mxu0 0.0
  %1042 = vmatpush1.msra.mxu0 0.0
  %1043 = vmatprep.subr.mxu0 0.0
  %1044 = vmatpush1.msra.mxu0 0.0
  %1045 = vmatprep.subr.mxu0 0.0
  %1046 = vmatpush1.msra.mxu0 0.0
  %1047 = vmatprep.subr.mxu0 0.0
  %1048 = vmatpush1.msra.mxu0 0.0
  %1049 = vmatprep.subr.mxu0 0.0
  %1050 = vmatpush1.msra.mxu0 0.0
  %1051 = vmatprep.subr.mxu0 0.0
  %1052 = vmatpush1.msra.mxu0 0.0
  %1053 = vmatprep.subr.mxu0 0.0
  %1054 = vmatpush1.msra.mxu0 0.0
  %1055 = vmatprep.subr.mxu0 0.0
  %1056 = vmatpush1.msra.mxu0 0.0
  %1057 = vmatprep.subr.mxu0 0.0
  %1058 = vmatpush1.msra.mxu0 0.0
  %1059 = vmatprep.subr.mxu0 0.0
  %1060 = vmatpush1.msra.mxu0 0.0
  %1061 = vmatprep.subr.mxu0 0.0
  %1062 = vmatpush1.msra.mxu0 0.0
  %1063 = vmatprep.subr.mxu0 0.0
  %1064 = vmatpush1.msra.mxu0 0.0
  %1065 = vmatprep.subr.mxu0 0.0
  %1066 = vmatpush1.msra.mxu0 0.0
  %1067 = vmatprep.subr.mxu0 0.0
  %1068 = vmatpush1.msra.mxu0 0.0
  %1069 = vmatprep.mubr.f32.mxu0 0.0
  %1070 = vmatmul.mubr.f32.gmra.mrb[0].mxu0 %v1000
  %v1071 = vpop.f32.mrb[0].mxu0
  %v1072 = vadd.f32 0.0, %v1071
  %v1073 = vpop.f32.mrb[0].mxu0
  %1074 = vmatprep.mubr.f32.mxu0 0.0
  %1075 = vmatmul.mubr.f32.gmra.mrb[0].mxu0 %v1003
  %v1076 = vpop.f32.mrb[0].mxu0
  %v1077 = vadd.f32 0.0, %v1076
  %v1078 = vpop.f32.mrb[0].mxu0
  %1079 = vdwg.mxu0
  %v1081 = vsel %vm107, %v35, 0
  %v1084 = vsel %vm107, %v36, 0
  %1086 = vmatprep.subr.mxu0 0.0
  %1087 = vmatpush1.msra.mxu0 %v87
  %1088 = vmatprep.subr.mxu0 0.0
  %1089 = vmatpush1.msra.mxu0 0.0
  %1090 = vmatprep.subr.mxu0 0.0
  %1091 = vmatpush1.msra.mxu0 0.0
  %1092 = vmatprep.subr.mxu0 0.0
  %1093 = vmatpush1.msra.mxu0 0.0
  %1094 = vmatprep.subr.mxu0 0.0
  %1095 = vmatpush1.msra.mxu0 0.0
  %1096 = vmatprep.subr.mxu0 0.0
  %1097 = vmatpush1.msra.mxu0 0.0
  %1098 = vmatprep.subr.mxu0 0.0
  %1099 = vmatpush1.msra.mxu0 0.0
  %1100 = vmatprep.subr.mxu0 0.0
  %1101 = vmatpush1.msra.mxu0 0.0
  %1102 = vmatprep.subr.mxu0 0.0
  %1103 = vmatpush1.msra.mxu0 0.0
  %1104 = vmatprep.subr.mxu0 0.0
  %1105 = vmatpush1.msra.mxu0 0.0
  %1106 = vmatprep.subr.mxu0 0.0
  %1107 = vmatpush1.msra.mxu0 0.0
  %1108 = vmatprep.subr.mxu0 0.0
  %1109 = vmatpush1.msra.mxu0 0.0
  %1110 = vmatprep.subr.mxu0 0.0
  %1111 = vmatpush1.msra.mxu0 0.0
  %1112 = vmatprep.subr.mxu0 0.0
  %1113 = vmatpush1.msra.mxu0 0.0
  %1114 = vmatprep.subr.mxu0 0.0
  %1115 = vmatpush1.msra.mxu0 0.0
  %1116 = vmatprep.subr.mxu0 0.0
  %1117 = vmatpush1.msra.mxu0 0.0
  %1118 = vmatprep.subr.mxu0 0.0
  %1119 = vmatpush1.msra.mxu0 0.0
  %1120 = vmatprep.subr.mxu0 0.0
  %1121 = vmatpush1.msra.mxu0 0.0
  %1122 = vmatprep.subr.mxu0 0.0
  %1123 = vmatpush1.msra.mxu0 0.0
  %1124 = vmatprep.subr.mxu0 0.0
  %1125 = vmatpush1.msra.mxu0 0.0
  %1126 = vmatprep.subr.mxu0 0.0
  %1127 = vmatpush1.msra.mxu0 0.0
  %1128 = vmatprep.subr.mxu0 0.0
  %1129 = vmatpush1.msra.mxu0 0.0
  %1130 = vmatprep.subr.mxu0 0.0
  %1131 = vmatpush1.msra.mxu0 0.0
  %1132 = vmatprep.subr.mxu0 0.0
  %1133 = vmatpush1.msra.mxu0 0.0
  %1134 = vmatprep.subr.mxu0 0.0
  %1135 = vmatpush1.msra.mxu0 0.0
  %1136 = vmatprep.subr.mxu0 0.0
  %1137 = vmatpush1.msra.mxu0 0.0
  %1138 = vmatprep.subr.mxu0 0.0
  %1139 = vmatpush1.msra.mxu0 0.0
  %1140 = vmatprep.subr.mxu0 0.0
  %1141 = vmatpush1.msra.mxu0 0.0
  %1142 = vmatprep.subr.mxu0 0.0
  %1143 = vmatpush1.msra.mxu0 0.0
  %1144 = vmatprep.subr.mxu0 0.0
  %1145 = vmatpush1.msra.mxu0 0.0
  %1146 = vmatprep.subr.mxu0 0.0
  %1147 = vmatpush1.msra.mxu0 0.0
  %1148 = vmatprep.subr.mxu0 0.0
  %1149 = vmatpush1.msra.mxu0 0.0
  %1150 = vmatprep.mubr.f32.mxu0 0.0
  %1151 = vmatmul.mubr.f32.gmra.mrb[0].mxu0 %v1081
  %v1152 = vpop.f32.mrb[0].mxu0
  %v1153 = vadd.f32 0.0, %v1152
  %v1154 = vpop.f32.mrb[0].mxu0
  %1155 = vmatprep.mubr.f32.mxu0 0.0
  %1156 = vmatmul.mubr.f32.gmra.mrb[0].mxu0 %v1084
  %v1157 = vpop.f32.mrb[0].mxu0
  %v1158 = vadd.f32 0.0, %v1157
  %v1159 = vpop.f32.mrb[0].mxu0
  %1160 = vdwg.mxu0
  %v1162 = vsel %vm107, %v37, 0
  %v1165 = vsel %vm107, %v38, 0
  %1167 = vmatprep.subr.mxu0 0.0
  %1168 = vmatpush1.msra.mxu0 %v88
  %1169 = vmatprep.subr.mxu0 0.0
  %1170 = vmatpush1.msra.mxu0 0.0
  %1171 = vmatprep.subr.mxu0 0.0
  %1172 = vmatpush1.msra.mxu0 0.0
  %1173 = vmatprep.subr.mxu0 0.0
  %1174 = vmatpush1.msra.mxu0 0.0
  %1175 = vmatprep.subr.mxu0 0.0
  %1176 = vmatpush1.msra.mxu0 0.0
  %1177 = vmatprep.subr.mxu0 0.0
  %1178 = vmatpush1.msra.mxu0 0.0
  %1179 = vmatprep.subr.mxu0 0.0
  %1180 = vmatpush1.msra.mxu0 0.0
  %1181 = vmatprep.subr.mxu0 0.0
  %1182 = vmatpush1.msra.mxu0 0.0
  %1183 = vmatprep.subr.mxu0 0.0
  %1184 = vmatpush1.msra.mxu0 0.0
  %1185 = vmatprep.subr.mxu0 0.0
  %1186 = vmatpush1.msra.mxu0 0.0
  %1187 = vmatprep.subr.mxu0 0.0
  %1188 = vmatpush1.msra.mxu0 0.0
  %1189 = vmatprep.subr.mxu0 0.0
  %1190 = vmatpush1.msra.mxu0 0.0
  %1191 = vmatprep.subr.mxu0 0.0
  %1192 = vmatpush1.msra.mxu0 0.0
  %1193 = vmatprep.subr.mxu0 0.0
  %1194 = vmatpush1.msra.mxu0 0.0
  %1195 = vmatprep.subr.mxu0 0.0
  %1196 = vmatpush1.msra.mxu0 0.0
  %1197 = vmatprep.subr.mxu0 0.0
  %1198 = vmatpush1.msra.mxu0 0.0
  %1199 = vmatprep.subr.mxu0 0.0
  %1200 = vmatpush1.msra.mxu0 0.0
  %1201 = vmatprep.subr.mxu0 0.0
  %1202 = vmatpush1.msra.mxu0 0.0
  %1203 = vmatprep.subr.mxu0 0.0
  %1204 = vmatpush1.msra.mxu0 0.0
  %1205 = vmatprep.subr.mxu0 0.0
  %1206 = vmatpush1.msra.mxu0 0.0
  %1207 = vmatprep.subr.mxu0 0.0
  %1208 = vmatpush1.msra.mxu0 0.0
  %1209 = vmatprep.subr.mxu0 0.0
  %1210 = vmatpush1.msra.mxu0 0.0
  %1211 = vmatprep.subr.mxu0 0.0
  %1212 = vmatpush1.msra.mxu0 0.0
  %1213 = vmatprep.subr.mxu0 0.0
  %1214 = vmatpush1.msra.mxu0 0.0
  %1215 = vmatprep.subr.mxu0 0.0
  %1216 = vmatpush1.msra.mxu0 0.0
  %1217 = vmatprep.subr.mxu0 0.0
  %1218 = vmatpush1.msra.mxu0 0.0
  %1219 = vmatprep.subr.mxu0 0.0
  %1220 = vmatpush1.msra.mxu0 0.0
  %1221 = vmatprep.subr.mxu0 0.0
  %1222 = vmatpush1.msra.mxu0 0.0
  %1223 = vmatprep.subr.mxu0 0.0
  %1224 = vmatpush1.msra.mxu0 0.0
  %1225 = vmatprep.subr.mxu0 0.0
  %1226 = vmatpush1.msra.mxu0 0.0
  %1227 = vmatprep.subr.mxu0 0.0
  %1228 = vmatpush1.msra.mxu0 0.0
  %1229 = vmatprep.subr.mxu0 0.0
  %1230 = vmatpush1.msra.mxu0 0.0
  %1231 = vmatprep.mubr.f32.mxu0 0.0
  %1232 = vmatmul.mubr.f32.gmra.mrb[0].mxu0 %v1162
  %v1233 = vpop.f32.mrb[0].mxu0
  %v1234 = vadd.f32 0.0, %v1233
  %v1235 = vpop.f32.mrb[0].mxu0
  %1236 = vmatprep.mubr.f32.mxu0 0.0
  %1237 = vmatmul.mubr.f32.gmra.mrb[0].mxu0 %v1165
  %v1238 = vpop.f32.mrb[0].mxu0
  %v1239 = vadd.f32 0.0, %v1238
  %v1240 = vpop.f32.mrb[0].mxu0
  %1241 = vdwg.mxu0
  %v1243 = vsel %vm107, %v39, 0
  %v1246 = vsel %vm107, %v40, 0
  %1248 = vmatprep.subr.mxu0 0.0
  %1249 = vmatpush1.msra.mxu0 %v89
  %1250 = vmatprep.subr.mxu0 0.0
  %1251 = vmatpush1.msra.mxu0 0.0
  %1252 = vmatprep.subr.mxu0 0.0
  %1253 = vmatpush1.msra.mxu0 0.0
  %1254 = vmatprep.subr.mxu0 0.0
  %1255 = vmatpush1.msra.mxu0 0.0
  %1256 = vmatprep.subr.mxu0 0.0
  %1257 = vmatpush1.msra.mxu0 0.0
  %1258 = vmatprep.subr.mxu0 0.0
  %1259 = vmatpush1.msra.mxu0 0.0
  %1260 = vmatprep.subr.mxu0 0.0
  %1261 = vmatpush1.msra.mxu0 0.0
  %1262 = vmatprep.subr.mxu0 0.0
  %1263 = vmatpush1.msra.mxu0 0.0
  %1264 = vmatprep.subr.mxu0 0.0
  %1265 = vmatpush1.msra.mxu0 0.0
  %1266 = vmatprep.subr.mxu0 0.0
  %1267 = vmatpush1.msra.mxu0 0.0
  %1268 = vmatprep.subr.mxu0 0.0
  %1269 = vmatpush1.msra.mxu0 0.0
  %1270 = vmatprep.subr.mxu0 0.0
  %1271 = vmatpush1.msra.mxu0 0.0
  %1272 = vmatprep.subr.mxu0 0.0
  %1273 = vmatpush1.msra.mxu0 0.0
  %1274 = vmatprep.subr.mxu0 0.0
  %1275 = vmatpush1.msra.mxu0 0.0
  %1276 = vmatprep.subr.mxu0 0.0
  %1277 = vmatpush1.msra.mxu0 0.0
  %1278 = vmatprep.subr.mxu0 0.0
  %1279 = vmatpush1.msra.mxu0 0.0
  %1280 = vmatprep.subr.mxu0 0.0
  %1281 = vmatpush1.msra.mxu0 0.0
  %1282 = vmatprep.subr.mxu0 0.0
  %1283 = vmatpush1.msra.mxu0 0.0
  %1284 = vmatprep.subr.mxu0 0.0
  %1285 = vmatpush1.msra.mxu0 0.0
  %1286 = vmatprep.subr.mxu0 0.0
  %1287 = vmatpush1.msra.mxu0 0.0
  %1288 = vmatprep.subr.mxu0 0.0
  %1289 = vmatpush1.msra.mxu0 0.0
  %1290 = vmatprep.subr.mxu0 0.0
  %1291 = vmatpush1.msra.mxu0 0.0
  %1292 = vmatprep.subr.mxu0 0.0
  %1293 = vmatpush1.msra.mxu0 0.0
  %1294 = vmatprep.subr.mxu0 0.0
  %1295 = vmatpush1.msra.mxu0 0.0
  %1296 = vmatprep.subr.mxu0 0.0
  %1297 = vmatpush1.msra.mxu0 0.0
  %1298 = vmatprep.subr.mxu0 0.0
  %1299 = vmatpush1.msra.mxu0 0.0
  %1300 = vmatprep.subr.mxu0 0.0
  %1301 = vmatpush1.msra.mxu0 0.0
  %1302 = vmatprep.subr.mxu0 0.0
  %1303 = vmatpush1.msra.mxu0 0.0
  %1304 = vmatprep.subr.mxu0 0.0
  %1305 = vmatpush1.msra.mxu0 0.0
  %1306 = vmatprep.subr.mxu0 0.0
  %1307 = vmatpush1.msra.mxu0 0.0
  %1308 = vmatprep.subr.mxu0 0.0
  %1309 = vmatpush1.msra.mxu0 0.0
  %1310 = vmatprep.subr.mxu0 0.0
  %1311 = vmatpush1.msra.mxu0 0.0
  %1312 = vmatprep.mubr.f32.mxu0 0.0
  %1313 = vmatmul.mubr.f32.gmra.mrb[0].mxu0 %v1243
  %v1314 = vpop.f32.mrb[0].mxu0
  %v1315 = vadd.f32 0.0, %v1314
  %v1316 = vpop.f32.mrb[0].mxu0
  %1317 = vmatprep.mubr.f32.mxu0 0.0
  %1318 = vmatmul.mubr.f32.gmra.mrb[0].mxu0 %v1246
  %v1319 = vpop.f32.mrb[0].mxu0
  %v1320 = vadd.f32 0.0, %v1319
  %v1321 = vpop.f32.mrb[0].mxu0
  %1322 = vdwg.mxu0
  %v1324 = vsel %vm107, %v41, 0
  %v1327 = vsel %vm107, %v42, 0
  %1329 = vmatprep.subr.mxu0 0.0
  %1330 = vmatpush1.msra.mxu0 %v90
  %1331 = vmatprep.subr.mxu0 0.0
  %1332 = vmatpush1.msra.mxu0 0.0
  %1333 = vmatprep.subr.mxu0 0.0
  %1334 = vmatpush1.msra.mxu0 0.0
  %1335 = vmatprep.subr.mxu0 0.0
  %1336 = vmatpush1.msra.mxu0 0.0
  %1337 = vmatprep.subr.mxu0 0.0
  %1338 = vmatpush1.msra.mxu0 0.0
  %1339 = vmatprep.subr.mxu0 0.0
  %1340 = vmatpush1.msra.mxu0 0.0
  %1341 = vmatprep.subr.mxu0 0.0
  %1342 = vmatpush1.msra.mxu0 0.0
  %1343 = vmatprep.subr.mxu0 0.0
  %1344 = vmatpush1.msra.mxu0 0.0
  %1345 = vmatprep.subr.mxu0 0.0
  %1346 = vmatpush1.msra.mxu0 0.0
  %1347 = vmatprep.subr.mxu0 0.0
  %1348 = vmatpush1.msra.mxu0 0.0
  %1349 = vmatprep.subr.mxu0 0.0
  %1350 = vmatpush1.msra.mxu0 0.0
  %1351 = vmatprep.subr.mxu0 0.0
  %1352 = vmatpush1.msra.mxu0 0.0
  %1353 = vmatprep.subr.mxu0 0.0
  %1354 = vmatpush1.msra.mxu0 0.0
  %1355 = vmatprep.subr.mxu0 0.0
  %1356 = vmatpush1.msra.mxu0 0.0
  %1357 = vmatprep.subr.mxu0 0.0
  %1358 = vmatpush1.msra.mxu0 0.0
  %1359 = vmatprep.subr.mxu0 0.0
  %1360 = vmatpush1.msra.mxu0 0.0
  %1361 = vmatprep.subr.mxu0 0.0
  %1362 = vmatpush1.msra.mxu0 0.0
  %1363 = vmatprep.subr.mxu0 0.0
  %1364 = vmatpush1.msra.mxu0 0.0
  %1365 = vmatprep.subr.mxu0 0.0
  %1366 = vmatpush1.msra.mxu0 0.0
  %1367 = vmatprep.subr.mxu0 0.0
  %1368 = vmatpush1.msra.mxu0 0.0
  %1369 = vmatprep.subr.mxu0 0.0
  %1370 = vmatpush1.msra.mxu0 0.0
  %1371 = vmatprep.subr.mxu0 0.0
  %1372 = vmatpush1.msra.mxu0 0.0
  %1373 = vmatprep.subr.mxu0 0.0
  %1374 = vmatpush1.msra.mxu0 0.0
  %1375 = vmatprep.subr.mxu0 0.0
  %1376 = vmatpush1.msra.mxu0 0.0
  %1377 = vmatprep.subr.mxu0 0.0
  %1378 = vmatpush1.msra.mxu0 0.0
  %1379 = vmatprep.subr.mxu0 0.0
  %1380 = vmatpush1.msra.mxu0 0.0
  %1381 = vmatprep.subr.mxu0 0.0
  %1382 = vmatpush1.msra.mxu0 0.0
  %1383 = vmatprep.subr.mxu0 0.0
  %1384 = vmatpush1.msra.mxu0 0.0
  %1385 = vmatprep.subr.mxu0 0.0
  %1386 = vmatpush1.msra.mxu0 0.0
  %1387 = vmatprep.subr.mxu0 0.0
  %1388 = vmatpush1.msra.mxu0 0.0
  %1389 = vmatprep.subr.mxu0 0.0
  %1390 = vmatpush1.msra.mxu0 0.0
  %1391 = vmatprep.subr.mxu0 0.0
  %1392 = vmatpush1.msra.mxu0 0.0
  %1393 = vmatprep.mubr.f32.mxu0 0.0
  %1394 = vmatmul.mubr.f32.gmra.mrb[0].mxu0 %v1324
  %v1395 = vpop.f32.mrb[0].mxu0
  %v1396 = vadd.f32 0.0, %v1395
  %v1397 = vpop.f32.mrb[0].mxu0
  %1398 = vmatprep.mubr.f32.mxu0 0.0
  %1399 = vmatmul.mubr.f32.gmra.mrb[0].mxu0 %v1327
  %v1400 = vpop.f32.mrb[0].mxu0
  %v1401 = vadd.f32 0.0, %v1400
  %v1402 = vpop.f32.mrb[0].mxu0
  %1403 = vdwg.mxu0
  %v1405 = vsel %vm107, %v43, 0
  %v1408 = vsel %vm107, %v44, 0
  %1410 = vmatprep.subr.mxu0 0.0
  %1411 = vmatpush1.msra.mxu0 %v91
  %1412 = vmatprep.subr.mxu0 0.0
  %1413 = vmatpush1.msra.mxu0 0.0
  %1414 = vmatprep.subr.mxu0 0.0
  %1415 = vmatpush1.msra.mxu0 0.0
  %1416 = vmatprep.subr.mxu0 0.0
  %1417 = vmatpush1.msra.mxu0 0.0
  %1418 = vmatprep.subr.mxu0 0.0
  %1419 = vmatpush1.msra.mxu0 0.0
  %1420 = vmatprep.subr.mxu0 0.0
  %1421 = vmatpush1.msra.mxu0 0.0
  %1422 = vmatprep.subr.mxu0 0.0
  %1423 = vmatpush1.msra.mxu0 0.0
  %1424 = vmatprep.subr.mxu0 0.0
  %1425 = vmatpush1.msra.mxu0 0.0
  %1426 = vmatprep.subr.mxu0 0.0
  %1427 = vmatpush1.msra.mxu0 0.0
  %1428 = vmatprep.subr.mxu0 0.0
  %1429 = vmatpush1.msra.mxu0 0.0
  %1430 = vmatprep.subr.mxu0 0.0
  %1431 = vmatpush1.msra.mxu0 0.0
  %1432 = vmatprep.subr.mxu0 0.0
  %1433 = vmatpush1.msra.mxu0 0.0
  %1434 = vmatprep.subr.mxu0 0.0
  %1435 = vmatpush1.msra.mxu0 0.0
  %1436 = vmatprep.subr.mxu0 0.0
  %1437 = vmatpush1.msra.mxu0 0.0
  %1438 = vmatprep.subr.mxu0 0.0
  %1439 = vmatpush1.msra.mxu0 0.0
  %1440 = vmatprep.subr.mxu0 0.0
  %1441 = vmatpush1.msra.mxu0 0.0
  %1442 = vmatprep.subr.mxu0 0.0
  %1443 = vmatpush1.msra.mxu0 0.0
  %1444 = vmatprep.subr.mxu0 0.0
  %1445 = vmatpush1.msra.mxu0 0.0
  %1446 = vmatprep.subr.mxu0 0.0
  %1447 = vmatpush1.msra.mxu0 0.0
  %1448 = vmatprep.subr.mxu0 0.0
  %1449 = vmatpush1.msra.mxu0 0.0
  %1450 = vmatprep.subr.mxu0 0.0
  %1451 = vmatpush1.msra.mxu0 0.0
  %1452 = vmatprep.subr.mxu0 0.0
  %1453 = vmatpush1.msra.mxu0 0.0
  %1454 = vmatprep.subr.mxu0 0.0
  %1455 = vmatpush1.msra.mxu0 0.0
  %1456 = vmatprep.subr.mxu0 0.0
  %1457 = vmatpush1.msra.mxu0 0.0
  %1458 = vmatprep.subr.mxu0 0.0
  %1459 = vmatpush1.msra.mxu0 0.0
  %1460 = vmatprep.subr.mxu0 0.0
  %1461 = vmatpush1.msra.mxu0 0.0
  %1462 = vmatprep.subr.mxu0 0.0
  %1463 = vmatpush1.msra.mxu0 0.0
  %1464 = vmatprep.subr.mxu0 0.0
  %1465 = vmatpush1.msra.mxu0 0.0
  %1466 = vmatprep.subr.mxu0 0.0
  %1467 = vmatpush1.msra.mxu0 0.0
  %1468 = vmatprep.subr.mxu0 0.0
  %1469 = vmatpush1.msra.mxu0 0.0
  %1470 = vmatprep.subr.mxu0 0.0
  %1471 = vmatpush1.msra.mxu0 0.0
  %1472 = vmatprep.subr.mxu0 0.0
  %1473 = vmatpush1.msra.mxu0 0.0
  %1474 = vmatprep.mubr.f32.mxu0 0.0
  %1475 = vmatmul.mubr.f32.gmra.mrb[0].mxu0 %v1405
  %v1476 = vpop.f32.mrb[0].mxu0
  %v1477 = vadd.f32 0.0, %v1476
  %v1478 = vpop.f32.mrb[0].mxu0
  %1479 = vmatprep.mubr.f32.mxu0 0.0
  %1480 = vmatmul.mubr.f32.gmra.mrb[0].mxu0 %v1408
  %v1481 = vpop.f32.mrb[0].mxu0
  %v1482 = vadd.f32 0.0, %v1481
  %v1483 = vpop.f32.mrb[0].mxu0
  %1484 = vdwg.mxu0
  %v1486 = vsel %vm107, %v45, 0
  %v1489 = vsel %vm107, %v46, 0
  %1491 = vmatprep.subr.mxu0 0.0
  %1492 = vmatpush1.msra.mxu0 %v92
  %1493 = vmatprep.subr.mxu0 0.0
  %1494 = vmatpush1.msra.mxu0 0.0
  %1495 = vmatprep.subr.mxu0 0.0
  %1496 = vmatpush1.msra.mxu0 0.0
  %1497 = vmatprep.subr.mxu0 0.0
  %1498 = vmatpush1.msra.mxu0 0.0
  %1499 = vmatprep.subr.mxu0 0.0
  %1500 = vmatpush1.msra.mxu0 0.0
  %1501 = vmatprep.subr.mxu0 0.0
  %1502 = vmatpush1.msra.mxu0 0.0
  %1503 = vmatprep.subr.mxu0 0.0
  %1504 = vmatpush1.msra.mxu0 0.0
  %1505 = vmatprep.subr.mxu0 0.0
  %1506 = vmatpush1.msra.mxu0 0.0
  %1507 = vmatprep.subr.mxu0 0.0
  %1508 = vmatpush1.msra.mxu0 0.0
  %1509 = vmatprep.subr.mxu0 0.0
  %1510 = vmatpush1.msra.mxu0 0.0
  %1511 = vmatprep.subr.mxu0 0.0
  %1512 = vmatpush1.msra.mxu0 0.0
  %1513 = vmatprep.subr.mxu0 0.0
  %1514 = vmatpush1.msra.mxu0 0.0
  %1515 = vmatprep.subr.mxu0 0.0
  %1516 = vmatpush1.msra.mxu0 0.0
  %1517 = vmatprep.subr.mxu0 0.0
  %1518 = vmatpush1.msra.mxu0 0.0
  %1519 = vmatprep.subr.mxu0 0.0
  %1520 = vmatpush1.msra.mxu0 0.0
  %1521 = vmatprep.subr.mxu0 0.0
  %1522 = vmatpush1.msra.mxu0 0.0
  %1523 = vmatprep.subr.mxu0 0.0
  %1524 = vmatpush1.msra.mxu0 0.0
  %1525 = vmatprep.subr.mxu0 0.0
  %1526 = vmatpush1.msra.mxu0 0.0
  %1527 = vmatprep.subr.mxu0 0.0
  %1528 = vmatpush1.msra.mxu0 0.0
  %1529 = vmatprep.subr.mxu0 0.0
  %1530 = vmatpush1.msra.mxu0 0.0
  %1531 = vmatprep.subr.mxu0 0.0
  %1532 = vmatpush1.msra.mxu0 0.0
  %1533 = vmatprep.subr.mxu0 0.0
  %1534 = vmatpush1.msra.mxu0 0.0
  %1535 = vmatprep.subr.mxu0 0.0
  %1536 = vmatpush1.msra.mxu0 0.0
  %1537 = vmatprep.subr.mxu0 0.0
  %1538 = vmatpush1.msra.mxu0 0.0
  %1539 = vmatprep.subr.mxu0 0.0
  %1540 = vmatpush1.msra.mxu0 0.0
  %1541 = vmatprep.subr.mxu0 0.0
  %1542 = vmatpush1.msra.mxu0 0.0
  %1543 = vmatprep.subr.mxu0 0.0
  %1544 = vmatpush1.msra.mxu0 0.0
  %1545 = vmatprep.subr.mxu0 0.0
  %1546 = vmatpush1.msra.mxu0 0.0
  %1547 = vmatprep.subr.mxu0 0.0
  %1548 = vmatpush1.msra.mxu0 0.0
  %1549 = vmatprep.subr.mxu0 0.0
  %1550 = vmatpush1.msra.mxu0 0.0
  %1551 = vmatprep.subr.mxu0 0.0
  %1552 = vmatpush1.msra.mxu0 0.0
  %1553 = vmatprep.subr.mxu0 0.0
  %1554 = vmatpush1.msra.mxu0 0.0
  %1555 = vmatprep.mubr.f32.mxu0 0.0
  %1556 = vmatmul.mubr.f32.gmra.mrb[0].mxu0 %v1486
  %v1557 = vpop.f32.mrb[0].mxu0
  %v1558 = vadd.f32 0.0, %v1557
  %v1559 = vpop.f32.mrb[0].mxu0
  %1560 = vmatprep.mubr.f32.mxu0 0.0
  %1561 = vmatmul.mubr.f32.gmra.mrb[0].mxu0 %v1489
  %v1562 = vpop.f32.mrb[0].mxu0
  %v1563 = vadd.f32 0.0, %v1562
  %v1564 = vpop.f32.mrb[0].mxu0
  %1565 = vdwg.mxu0
  %v1567 = vsel %vm107, %v47, 0
  %v1570 = vsel %vm107, %v48, 0
  %1572 = vmatprep.subr.mxu0 0.0
  %1573 = vmatpush1.msra.mxu0 %v93
  %1574 = vmatprep.subr.mxu0 0.0
  %1575 = vmatpush1.msra.mxu0 0.0
  %1576 = vmatprep.subr.mxu0 0.0
  %1577 = vmatpush1.msra.mxu0 0.0
  %1578 = vmatprep.subr.mxu0 0.0
  %1579 = vmatpush1.msra.mxu0 0.0
  %1580 = vmatprep.subr.mxu0 0.0
  %1581 = vmatpush1.msra.mxu0 0.0
  %1582 = vmatprep.subr.mxu0 0.0
  %1583 = vmatpush1.msra.mxu0 0.0
  %1584 = vmatprep.subr.mxu0 0.0
  %1585 = vmatpush1.msra.mxu0 0.0
  %1586 = vmatprep.subr.mxu0 0.0
  %1587 = vmatpush1.msra.mxu0 0.0
  %1588 = vmatprep.subr.mxu0 0.0
  %1589 = vmatpush1.msra.mxu0 0.0
  %1590 = vmatprep.subr.mxu0 0.0
  %1591 = vmatpush1.msra.mxu0 0.0
  %1592 = vmatprep.subr.mxu0 0.0
  %1593 = vmatpush1.msra.mxu0 0.0
  %1594 = vmatprep.subr.mxu0 0.0
  %1595 = vmatpush1.msra.mxu0 0.0
  %1596 = vmatprep.subr.mxu0 0.0
  %1597 = vmatpush1.msra.mxu0 0.0
  %1598 = vmatprep.subr.mxu0 0.0
  %1599 = vmatpush1.msra.mxu0 0.0
  %1600 = vmatprep.subr.mxu0 0.0
  %1601 = vmatpush1.msra.mxu0 0.0
  %1602 = vmatprep.subr.mxu0 0.0
  %1603 = vmatpush1.msra.mxu0 0.0
  %1604 = vmatprep.subr.mxu0 0.0
  %1605 = vmatpush1.msra.mxu0 0.0
  %1606 = vmatprep.subr.mxu0 0.0
  %1607 = vmatpush1.msra.mxu0 0.0
  %1608 = vmatprep.subr.mxu0 0.0
  %1609 = vmatpush1.msra.mxu0 0.0
  %1610 = vmatprep.subr.mxu0 0.0
  %1611 = vmatpush1.msra.mxu0 0.0
  %1612 = vmatprep.subr.mxu0 0.0
  %1613 = vmatpush1.msra.mxu0 0.0
  %1614 = vmatprep.subr.mxu0 0.0
  %1615 = vmatpush1.msra.mxu0 0.0
  %1616 = vmatprep.subr.mxu0 0.0
  %1617 = vmatpush1.msra.mxu0 0.0
  %1618 = vmatprep.subr.mxu0 0.0
  %1619 = vmatpush1.msra.mxu0 0.0
  %1620 = vmatprep.subr.mxu0 0.0
  %1621 = vmatpush1.msra.mxu0 0.0
  %1622 = vmatprep.subr.mxu0 0.0
  %1623 = vmatpush1.msra.mxu0 0.0
  %1624 = vmatprep.subr.mxu0 0.0
  %1625 = vmatpush1.msra.mxu0 0.0
  %1626 = vmatprep.subr.mxu0 0.0
  %1627 = vmatpush1.msra.mxu0 0.0
  %1628 = vmatprep.subr.mxu0 0.0
  %1629 = vmatpush1.msra.mxu0 0.0
  %1630 = vmatprep.subr.mxu0 0.0
  %1631 = vmatpush1.msra.mxu0 0.0
  %1632 = vmatprep.subr.mxu0 0.0
  %1633 = vmatpush1.msra.mxu0 0.0
  %1634 = vmatprep.subr.mxu0 0.0
  %1635 = vmatpush1.msra.mxu0 0.0
  %1636 = vmatprep.mubr.f32.mxu0 0.0
  %1637 = vmatmul.mubr.f32.gmra.mrb[0].mxu0 %v1567
  %v1638 = vpop.f32.mrb[0].mxu0
  %v1639 = vadd.f32 0.0, %v1638
  %v1640 = vpop.f32.mrb[0].mxu0
  %1641 = vmatprep.mubr.f32.mxu0 0.0
  %1642 = vmatmul.mubr.f32.gmra.mrb[0].mxu0 %v1570
  %v1643 = vpop.f32.mrb[0].mxu0
  %v1644 = vadd.f32 0.0, %v1643
  %v1645 = vpop.f32.mrb[0].mxu0
  %1646 = vdwg.mxu0
  %v1648 = vsel %vm107, %v49, 0
  %v1651 = vsel %vm107, %v50, 0
  %1653 = vmatprep.subr.mxu0 0.0
  %1654 = vmatpush1.msra.mxu0 %v94
  %1655 = vmatprep.subr.mxu0 0.0
  %1656 = vmatpush1.msra.mxu0 0.0
  %1657 = vmatprep.subr.mxu0 0.0
  %1658 = vmatpush1.msra.mxu0 0.0
  %1659 = vmatprep.subr.mxu0 0.0
  %1660 = vmatpush1.msra.mxu0 0.0
  %1661 = vmatprep.subr.mxu0 0.0
  %1662 = vmatpush1.msra.mxu0 0.0
  %1663 = vmatprep.subr.mxu0 0.0
  %1664 = vmatpush1.msra.mxu0 0.0
  %1665 = vmatprep.subr.mxu0 0.0
  %1666 = vmatpush1.msra.mxu0 0.0
  %1667 = vmatprep.subr.mxu0 0.0
  %1668 = vmatpush1.msra.mxu0 0.0
  %1669 = vmatprep.subr.mxu0 0.0
  %1670 = vmatpush1.msra.mxu0 0.0
  %1671 = vmatprep.subr.mxu0 0.0
  %1672 = vmatpush1.msra.mxu0 0.0
  %1673 = vmatprep.subr.mxu0 0.0
  %1674 = vmatpush1.msra.mxu0 0.0
  %1675 = vmatprep.subr.mxu0 0.0
  %1676 = vmatpush1.msra.mxu0 0.0
  %1677 = vmatprep.subr.mxu0 0.0
  %1678 = vmatpush1.msra.mxu0 0.0
  %1679 = vmatprep.subr.mxu0 0.0
  %1680 = vmatpush1.msra.mxu0 0.0
  %1681 = vmatprep.subr.mxu0 0.0
  %1682 = vmatpush1.msra.mxu0 0.0
  %1683 = vmatprep.subr.mxu0 0.0
  %1684 = vmatpush1.msra.mxu0 0.0
  %1685 = vmatprep.subr.mxu0 0.0
  %1686 = vmatpush1.msra.mxu0 0.0
  %1687 = vmatprep.subr.mxu0 0.0
  %1688 = vmatpush1.msra.mxu0 0.0
  %1689 = vmatprep.subr.mxu0 0.0
  %1690 = vmatpush1.msra.mxu0 0.0
  %1691 = vmatprep.subr.mxu0 0.0
  %1692 = vmatpush1.msra.mxu0 0.0
  %1693 = vmatprep.subr.mxu0 0.0
  %1694 = vmatpush1.msra.mxu0 0.0
  %1695 = vmatprep.subr.mxu0 0.0
  %1696 = vmatpush1.msra.mxu0 0.0
  %1697 = vmatprep.subr.mxu0 0.0
  %1698 = vmatpush1.msra.mxu0 0.0
  %1699 = vmatprep.subr.mxu0 0.0
  %1700 = vmatpush1.msra.mxu0 0.0
  %1701 = vmatprep.subr.mxu0 0.0
  %1702 = vmatpush1.msra.mxu0 0.0
  %1703 = vmatprep.subr.mxu0 0.0
  %1704 = vmatpush1.msra.mxu0 0.0
  %1705 = vmatprep.subr.mxu0 0.0
  %1706 = vmatpush1.msra.mxu0 0.0
  %1707 = vmatprep.subr.mxu0 0.0
  %1708 = vmatpush1.msra.mxu0 0.0
  %1709 = vmatprep.subr.mxu0 0.0
  %1710 = vmatpush1.msra.mxu0 0.0
  %1711 = vmatprep.subr.mxu0 0.0
  %1712 = vmatpush1.msra.mxu0 0.0
  %1713 = vmatprep.subr.mxu0 0.0
  %1714 = vmatpush1.msra.mxu0 0.0
  %1715 = vmatprep.subr.mxu0 0.0
  %1716 = vmatpush1.msra.mxu0 0.0
  %1717 = vmatprep.mubr.f32.mxu0 0.0
  %1718 = vmatmul.mubr.f32.gmra.mrb[0].mxu0 %v1648
  %v1719 = vpop.f32.mrb[0].mxu0
  %v1720 = vadd.f32 0.0, %v1719
  %v1721 = vpop.f32.mrb[0].mxu0
  %1722 = vmatprep.mubr.f32.mxu0 0.0
  %1723 = vmatmul.mubr.f32.gmra.mrb[0].mxu0 %v1651
  %v1724 = vpop.f32.mrb[0].mxu0
  %v1725 = vadd.f32 0.0, %v1724
  %v1726 = vpop.f32.mrb[0].mxu0
  %1727 = vdwg.mxu0
  %v1729 = vsel %vm107, %v51, 0
  %v1732 = vsel %vm107, %v52, 0
  %1734 = vmatprep.subr.mxu0 0.0
  %1735 = vmatpush1.msra.mxu0 %v95
  %1736 = vmatprep.subr.mxu0 0.0
  %1737 = vmatpush1.msra.mxu0 0.0
  %1738 = vmatprep.subr.mxu0 0.0
  %1739 = vmatpush1.msra.mxu0 0.0
  %1740 = vmatprep.subr.mxu0 0.0
  %1741 = vmatpush1.msra.mxu0 0.0
  %1742 = vmatprep.subr.mxu0 0.0
  %1743 = vmatpush1.msra.mxu0 0.0
  %1744 = vmatprep.subr.mxu0 0.0
  %1745 = vmatpush1.msra.mxu0 0.0
  %1746 = vmatprep.subr.mxu0 0.0
  %1747 = vmatpush1.msra.mxu0 0.0
  %1748 = vmatprep.subr.mxu0 0.0
  %1749 = vmatpush1.msra.mxu0 0.0
  %1750 = vmatprep.subr.mxu0 0.0
  %1751 = vmatpush1.msra.mxu0 0.0
  %1752 = vmatprep.subr.mxu0 0.0
  %1753 = vmatpush1.msra.mxu0 0.0
  %1754 = vmatprep.subr.mxu0 0.0
  %1755 = vmatpush1.msra.mxu0 0.0
  %1756 = vmatprep.subr.mxu0 0.0
  %1757 = vmatpush1.msra.mxu0 0.0
  %1758 = vmatprep.subr.mxu0 0.0
  %1759 = vmatpush1.msra.mxu0 0.0
  %1760 = vmatprep.subr.mxu0 0.0
  %1761 = vmatpush1.msra.mxu0 0.0
  %1762 = vmatprep.subr.mxu0 0.0
  %1763 = vmatpush1.msra.mxu0 0.0
  %1764 = vmatprep.subr.mxu0 0.0
  %1765 = vmatpush1.msra.mxu0 0.0
  %1766 = vmatprep.subr.mxu0 0.0
  %1767 = vmatpush1.msra.mxu0 0.0
  %1768 = vmatprep.subr.mxu0 0.0
  %1769 = vmatpush1.msra.mxu0 0.0
  %1770 = vmatprep.subr.mxu0 0.0
  %1771 = vmatpush1.msra.mxu0 0.0
  %1772 = vmatprep.subr.mxu0 0.0
  %1773 = vmatpush1.msra.mxu0 0.0
  %1774 = vmatprep.subr.mxu0 0.0
  %1775 = vmatpush1.msra.mxu0 0.0
  %1776 = vmatprep.subr.mxu0 0.0
  %1777 = vmatpush1.msra.mxu0 0.0
  %1778 = vmatprep.subr.mxu0 0.0
  %1779 = vmatpush1.msra.mxu0 0.0
  %1780 = vmatprep.subr.mxu0 0.0
  %1781 = vmatpush1.msra.mxu0 0.0
  %1782 = vmatprep.subr.mxu0 0.0
  %1783 = vmatpush1.msra.mxu0 0.0
  %1784 = vmatprep.subr.mxu0 0.0
  %1785 = vmatpush1.msra.mxu0 0.0
  %1786 = vmatprep.subr.mxu0 0.0
  %1787 = vmatpush1.msra.mxu0 0.0
  %1788 = vmatprep.subr.mxu0 0.0
  %1789 = vmatpush1.msra.mxu0 0.0
  %1790 = vmatprep.subr.mxu0 0.0
  %1791 = vmatpush1.msra.mxu0 0.0
  %1792 = vmatprep.subr.mxu0 0.0
  %1793 = vmatpush1.msra.mxu0 0.0
  %1794 = vmatprep.subr.mxu0 0.0
  %1795 = vmatpush1.msra.mxu0 0.0
  %1796 = vmatprep.subr.mxu0 0.0
  %1797 = vmatpush1.msra.mxu0 0.0
  %1798 = vmatprep.mubr.f32.mxu0 0.0
  %1799 = vmatmul.mubr.f32.gmra.mrb[0].mxu0 %v1729
  %v1800 = vpop.f32.mrb[0].mxu0
  %v1801 = vadd.f32 0.0, %v1800
  %v1802 = vpop.f32.mrb[0].mxu0
  %1803 = vmatprep.mubr.f32.mxu0 0.0
  %1804 = vmatmul.mubr.f32.gmra.mrb[0].mxu0 %v1732
  %v1805 = vpop.f32.mrb[0].mxu0
  %v1806 = vadd.f32 0.0, %v1805
  %v1807 = vpop.f32.mrb[0].mxu0
  %1808 = vdwg.mxu0
  %v1810 = vsel %vm107, %v53, 0
  %v1813 = vsel %vm107, %v54, 0
  %1815 = vmatprep.subr.mxu0 0.0
  %1816 = vmatpush1.msra.mxu0 %v96
  %1817 = vmatprep.subr.mxu0 0.0
  %1818 = vmatpush1.msra.mxu0 0.0
  %1819 = vmatprep.subr.mxu0 0.0
  %1820 = vmatpush1.msra.mxu0 0.0
  %1821 = vmatprep.subr.mxu0 0.0
  %1822 = vmatpush1.msra.mxu0 0.0
  %1823 = vmatprep.subr.mxu0 0.0
  %1824 = vmatpush1.msra.mxu0 0.0
  %1825 = vmatprep.subr.mxu0 0.0
  %1826 = vmatpush1.msra.mxu0 0.0
  %1827 = vmatprep.subr.mxu0 0.0
  %1828 = vmatpush1.msra.mxu0 0.0
  %1829 = vmatprep.subr.mxu0 0.0
  %1830 = vmatpush1.msra.mxu0 0.0
  %1831 = vmatprep.subr.mxu0 0.0
  %1832 = vmatpush1.msra.mxu0 0.0
  %1833 = vmatprep.subr.mxu0 0.0
  %1834 = vmatpush1.msra.mxu0 0.0
  %1835 = vmatprep.subr.mxu0 0.0
  %1836 = vmatpush1.msra.mxu0 0.0
  %1837 = vmatprep.subr.mxu0 0.0
  %1838 = vmatpush1.msra.mxu0 0.0
  %1839 = vmatprep.subr.mxu0 0.0
  %1840 = vmatpush1.msra.mxu0 0.0
  %1841 = vmatprep.subr.mxu0 0.0
  %1842 = vmatpush1.msra.mxu0 0.0
  %1843 = vmatprep.subr.mxu0 0.0
  %1844 = vmatpush1.msra.mxu0 0.0
  %1845 = vmatprep.subr.mxu0 0.0
  %1846 = vmatpush1.msra.mxu0 0.0
  %1847 = vmatprep.subr.mxu0 0.0
  %1848 = vmatpush1.msra.mxu0 0.0
  %1849 = vmatprep.subr.mxu0 0.0
  %1850 = vmatpush1.msra.mxu0 0.0
  %1851 = vmatprep.subr.mxu0 0.0
  %1852 = vmatpush1.msra.mxu0 0.0
  %1853 = vmatprep.subr.mxu0 0.0
  %1854 = vmatpush1.msra.mxu0 0.0
  %1855 = vmatprep.subr.mxu0 0.0
  %1856 = vmatpush1.msra.mxu0 0.0
  %1857 = vmatprep.subr.mxu0 0.0
  %1858 = vmatpush1.msra.mxu0 0.0
  %1859 = vmatprep.subr.mxu0 0.0
  %1860 = vmatpush1.msra.mxu0 0.0
  %1861 = vmatprep.subr.mxu0 0.0
  %1862 = vmatpush1.msra.mxu0 0.0
  %1863 = vmatprep.subr.mxu0 0.0
  %1864 = vmatpush1.msra.mxu0 0.0
  %1865 = vmatprep.subr.mxu0 0.0
  %1866 = vmatpush1.msra.mxu0 0.0
  %1867 = vmatprep.subr.mxu0 0.0
  %1868 = vmatpush1.msra.mxu0 0.0
  %1869 = vmatprep.subr.mxu0 0.0
  %1870 = vmatpush1.msra.mxu0 0.0
  %1871 = vmatprep.subr.mxu0 0.0
  %1872 = vmatpush1.msra.mxu0 0.0
  %1873 = vmatprep.subr.mxu0 0.0
  %1874 = vmatpush1.msra.mxu0 0.0
  %1875 = vmatprep.subr.mxu0 0.0
  %1876 = vmatpush1.msra.mxu0 0.0
  %1877 = vmatprep.subr.mxu0 0.0
  %1878 = vmatpush1.msra.mxu0 0.0
  %1879 = vmatprep.mubr.f32.mxu0 0.0
  %1880 = vmatmul.mubr.f32.gmra.mrb[0].mxu0 %v1810
  %v1881 = vpop.f32.mrb[0].mxu0
  %v1882 = vadd.f32 0.0, %v1881
  %v1883 = vpop.f32.mrb[0].mxu0
  %1884 = vmatprep.mubr.f32.mxu0 0.0
  %1885 = vmatmul.mubr.f32.gmra.mrb[0].mxu0 %v1813
  %v1886 = vpop.f32.mrb[0].mxu0
  %v1887 = vadd.f32 0.0, %v1886
  %v1888 = vpop.f32.mrb[0].mxu0
  %1889 = vdwg.mxu0
  %v1891 = vsel %vm107, %v55, 0
  %v1894 = vsel %vm107, %v56, 0
  %1896 = vmatprep.subr.mxu0 0.0
  %1897 = vmatpush1.msra.mxu0 %v97
  %1898 = vmatprep.subr.mxu0 0.0
  %1899 = vmatpush1.msra.mxu0 0.0
  %1900 = vmatprep.subr.mxu0 0.0
  %1901 = vmatpush1.msra.mxu0 0.0
  %1902 = vmatprep.subr.mxu0 0.0
  %1903 = vmatpush1.msra.mxu0 0.0
  %1904 = vmatprep.subr.mxu0 0.0
  %1905 = vmatpush1.msra.mxu0 0.0
  %1906 = vmatprep.subr.mxu0 0.0
  %1907 = vmatpush1.msra.mxu0 0.0
  %1908 = vmatprep.subr.mxu0 0.0
  %1909 = vmatpush1.msra.mxu0 0.0
  %1910 = vmatprep.subr.mxu0 0.0
  %1911 = vmatpush1.msra.mxu0 0.0
  %1912 = vmatprep.subr.mxu0 0.0
  %1913 = vmatpush1.msra.mxu0 0.0
  %1914 = vmatprep.subr.mxu0 0.0
  %1915 = vmatpush1.msra.mxu0 0.0
  %1916 = vmatprep.subr.mxu0 0.0
  %1917 = vmatpush1.msra.mxu0 0.0
  %1918 = vmatprep.subr.mxu0 0.0
  %1919 = vmatpush1.msra.mxu0 0.0
  %1920 = vmatprep.subr.mxu0 0.0
  %1921 = vmatpush1.msra.mxu0 0.0
  %1922 = vmatprep.subr.mxu0 0.0
  %1923 = vmatpush1.msra.mxu0 0.0
  %1924 = vmatprep.subr.mxu0 0.0
  %1925 = vmatpush1.msra.mxu0 0.0
  %1926 = vmatprep.subr.mxu0 0.0
  %1927 = vmatpush1.msra.mxu0 0.0
  %1928 = vmatprep.subr.mxu0 0.0
  %1929 = vmatpush1.msra.mxu0 0.0
  %1930 = vmatprep.subr.mxu0 0.0
  %1931 = vmatpush1.msra.mxu0 0.0
  %1932 = vmatprep.subr.mxu0 0.0
  %1933 = vmatpush1.msra.mxu0 0.0
  %1934 = vmatprep.subr.mxu0 0.0
  %1935 = vmatpush1.msra.mxu0 0.0
  %1936 = vmatprep.subr.mxu0 0.0
  %1937 = vmatpush1.msra.mxu0 0.0
  %1938 = vmatprep.subr.mxu0 0.0
  %1939 = vmatpush1.msra.mxu0 0.0
  %1940 = vmatprep.subr.mxu0 0.0
  %1941 = vmatpush1.msra.mxu0 0.0
  %1942 = vmatprep.subr.mxu0 0.0
  %1943 = vmatpush1.msra.mxu0 0.0
  %1944 = vmatprep.subr.mxu0 0.0
  %1945 = vmatpush1.msra.mxu0 0.0
  %1946 = vmatprep.subr.mxu0 0.0
  %1947 = vmatpush1.msra.mxu0 0.0
  %1948 = vmatprep.subr.mxu0 0.0
  %1949 = vmatpush1.msra.mxu0 0.0
  %1950 = vmatprep.subr.mxu0 0.0
  %1951 = vmatpush1.msra.mxu0 0.0
  %1952 = vmatprep.subr.mxu0 0.0
  %1953 = vmatpush1.msra.mxu0 0.0
  %1954 = vmatprep.subr.mxu0 0.0
  %1955 = vmatpush1.msra.mxu0 0.0
  %1956 = vmatprep.subr.mxu0 0.0
  %1957 = vmatpush1.msra.mxu0 0.0
  %1958 = vmatprep.subr.mxu0 0.0
  %1959 = vmatpush1.msra.mxu0 0.0
  %1960 = vmatprep.mubr.f32.mxu0 0.0
  %1961 = vmatmul.mubr.f32.gmra.mrb[0].mxu0 %v1891
  %v1962 = vpop.f32.mrb[0].mxu0
  %v1963 = vadd.f32 0.0, %v1962
  %v1964 = vpop.f32.mrb[0].mxu0
  %1965 = vmatprep.mubr.f32.mxu0 0.0
  %1966 = vmatmul.mubr.f32.gmra.mrb[0].mxu0 %v1894
  %v1967 = vpop.f32.mrb[0].mxu0
  %v1968 = vadd.f32 0.0, %v1967
  %v1969 = vpop.f32.mrb[0].mxu0
  %1970 = vdwg.mxu0
  %v1972 = vsel %vm107, %v57, 0
  %v1975 = vsel %vm107, %v58, 0
  %1977 = vmatprep.subr.mxu0 0.0
  %1978 = vmatpush1.msra.mxu0 %v98
  %1979 = vmatprep.subr.mxu0 0.0
  %1980 = vmatpush1.msra.mxu0 0.0
  %1981 = vmatprep.subr.mxu0 0.0
  %1982 = vmatpush1.msra.mxu0 0.0
  %1983 = vmatprep.subr.mxu0 0.0
  %1984 = vmatpush1.msra.mxu0 0.0
  %1985 = vmatprep.subr.mxu0 0.0
  %1986 = vmatpush1.msra.mxu0 0.0
  %1987 = vmatprep.subr.mxu0 0.0
  %1988 = vmatpush1.msra.mxu0 0.0
  %1989 = vmatprep.subr.mxu0 0.0
  %1990 = vmatpush1.msra.mxu0 0.0
  %1991 = vmatprep.subr.mxu0 0.0
  %1992 = vmatpush1.msra.mxu0 0.0
  %1993 = vmatprep.subr.mxu0 0.0
  %1994 = vmatpush1.msra.mxu0 0.0
  %1995 = vmatprep.subr.mxu0 0.0
  %1996 = vmatpush1.msra.mxu0 0.0
  %1997 = vmatprep.subr.mxu0 0.0
  %1998 = vmatpush1.msra.mxu0 0.0
  %1999 = vmatprep.subr.mxu0 0.0
  %2000 = vmatpush1.msra.mxu0 0.0
  %2001 = vmatprep.subr.mxu0 0.0
  %2002 = vmatpush1.msra.mxu0 0.0
  %2003 = vmatprep.subr.mxu0 0.0
  %2004 = vmatpush1.msra.mxu0 0.0
  %2005 = vmatprep.subr.mxu0 0.0
  %2006 = vmatpush1.msra.mxu0 0.0
  %2007 = vmatprep.subr.mxu0 0.0
  %2008 = vmatpush1.msra.mxu0 0.0
  %2009 = vmatprep.subr.mxu0 0.0
  %2010 = vmatpush1.msra.mxu0 0.0
  %2011 = vmatprep.subr.mxu0 0.0
  %2012 = vmatpush1.msra.mxu0 0.0
  %2013 = vmatprep.subr.mxu0 0.0
  %2014 = vmatpush1.msra.mxu0 0.0
  %2015 = vmatprep.subr.mxu0 0.0
  %2016 = vmatpush1.msra.mxu0 0.0
  %2017 = vmatprep.subr.mxu0 0.0
  %2018 = vmatpush1.msra.mxu0 0.0
  %2019 = vmatprep.subr.mxu0 0.0
  %2020 = vmatpush1.msra.mxu0 0.0
  %2021 = vmatprep.subr.mxu0 0.0
  %2022 = vmatpush1.msra.mxu0 0.0
  %2023 = vmatprep.subr.mxu0 0.0
  %2024 = vmatpush1.msra.mxu0 0.0
  %2025 = vmatprep.subr.mxu0 0.0
  %2026 = vmatpush1.msra.mxu0 0.0
  %2027 = vmatprep.subr.mxu0 0.0
  %2028 = vmatpush1.msra.mxu0 0.0
  %2029 = vmatprep.subr.mxu0 0.0
  %2030 = vmatpush1.msra.mxu0 0.0
  %2031 = vmatprep.subr.mxu0 0.0
  %2032 = vmatpush1.msra.mxu0 0.0
  %2033 = vmatprep.subr.mxu0 0.0
  %2034 = vmatpush1.msra.mxu0 0.0
  %2035 = vmatprep.subr.mxu0 0.0
  %2036 = vmatpush1.msra.mxu0 0.0
  %2037 = vmatprep.subr.mxu0 0.0
  %2038 = vmatpush1.msra.mxu0 0.0
  %2039 = vmatprep.subr.mxu0 0.0
  %2040 = vmatpush1.msra.mxu0 0.0
  %2041 = vmatprep.mubr.f32.mxu0 0.0
  %2042 = vmatmul.mubr.f32.gmra.mrb[0].mxu0 %v1972
  %v2043 = vpop.f32.mrb[0].mxu0
  %v2044 = vadd.f32 0.0, %v2043
  %v2045 = vpop.f32.mrb[0].mxu0
  %2046 = vmatprep.mubr.f32.mxu0 0.0
  %2047 = vmatmul.mubr.f32.gmra.mrb[0].mxu0 %v1975
  %v2048 = vpop.f32.mrb[0].mxu0
  %v2049 = vadd.f32 0.0, %v2048
  %v2050 = vpop.f32.mrb[0].mxu0
  %2051 = vdwg.mxu0
  %v2053 = vsel %vm107, %v59, 0
  %v2056 = vsel %vm107, %v60, 0
  %2058 = vmatprep.subr.mxu0 0.0
  %2059 = vmatpush1.msra.mxu0 %v99
  %2060 = vmatprep.subr.mxu0 0.0
  %2061 = vmatpush1.msra.mxu0 0.0
  %2062 = vmatprep.subr.mxu0 0.0
  %2063 = vmatpush1.msra.mxu0 0.0
  %2064 = vmatprep.subr.mxu0 0.0
  %2065 = vmatpush1.msra.mxu0 0.0
  %2066 = vmatprep.subr.mxu0 0.0
  %2067 = vmatpush1.msra.mxu0 0.0
  %2068 = vmatprep.subr.mxu0 0.0
  %2069 = vmatpush1.msra.mxu0 0.0
  %2070 = vmatprep.subr.mxu0 0.0
  %2071 = vmatpush1.msra.mxu0 0.0
  %2072 = vmatprep.subr.mxu0 0.0
  %2073 = vmatpush1.msra.mxu0 0.0
  %2074 = vmatprep.subr.mxu0 0.0
  %2075 = vmatpush1.msra.mxu0 0.0
  %2076 = vmatprep.subr.mxu0 0.0
  %2077 = vmatpush1.msra.mxu0 0.0
  %2078 = vmatprep.subr.mxu0 0.0
  %2079 = vmatpush1.msra.mxu0 0.0
  %2080 = vmatprep.subr.mxu0 0.0
  %2081 = vmatpush1.msra.mxu0 0.0
  %2082 = vmatprep.subr.mxu0 0.0
  %2083 = vmatpush1.msra.mxu0 0.0
  %2084 = vmatprep.subr.mxu0 0.0
  %2085 = vmatpush1.msra.mxu0 0.0
  %2086 = vmatprep.subr.mxu0 0.0
  %2087 = vmatpush1.msra.mxu0 0.0
  %2088 = vmatprep.subr.mxu0 0.0
  %2089 = vmatpush1.msra.mxu0 0.0
  %2090 = vmatprep.subr.mxu0 0.0
  %2091 = vmatpush1.msra.mxu0 0.0
  %2092 = vmatprep.subr.mxu0 0.0
  %2093 = vmatpush1.msra.mxu0 0.0
  %2094 = vmatprep.subr.mxu0 0.0
  %2095 = vmatpush1.msra.mxu0 0.0
  %2096 = vmatprep.subr.mxu0 0.0
  %2097 = vmatpush1.msra.mxu0 0.0
  %2098 = vmatprep.subr.mxu0 0.0
  %2099 = vmatpush1.msra.mxu0 0.0
  %2100 = vmatprep.subr.mxu0 0.0
  %2101 = vmatpush1.msra.mxu0 0.0
  %2102 = vmatprep.subr.mxu0 0.0
  %2103 = vmatpush1.msra.mxu0 0.0
  %2104 = vmatprep.subr.mxu0 0.0
  %2105 = vmatpush1.msra.mxu0 0.0
  %2106 = vmatprep.subr.mxu0 0.0
  %2107 = vmatpush1.msra.mxu0 0.0
  %2108 = vmatprep.subr.mxu0 0.0
  %2109 = vmatpush1.msra.mxu0 0.0
  %2110 = vmatprep.subr.mxu0 0.0
  %2111 = vmatpush1.msra.mxu0 0.0
  %2112 = vmatprep.subr.mxu0 0.0
  %2113 = vmatpush1.msra.mxu0 0.0
  %2114 = vmatprep.subr.mxu0 0.0
  %2115 = vmatpush1.msra.mxu0 0.0
  %2116 = vmatprep.subr.mxu0 0.0
  %2117 = vmatpush1.msra.mxu0 0.0
  %2118 = vmatprep.subr.mxu0 0.0
  %2119 = vmatpush1.msra.mxu0 0.0
  %2120 = vmatprep.subr.mxu0 0.0
  %2121 = vmatpush1.msra.mxu0 0.0
  %2122 = vmatprep.mubr.f32.mxu0 0.0
  %2123 = vmatmul.mubr.f32.gmra.mrb[0].mxu0 %v2053
  %v2124 = vpop.f32.mrb[0].mxu0
  %v2125 = vadd.f32 0.0, %v2124
  %v2126 = vpop.f32.mrb[0].mxu0
  %2127 = vmatprep.mubr.f32.mxu0 0.0
  %2128 = vmatmul.mubr.f32.gmra.mrb[0].mxu0 %v2056
  %v2129 = vpop.f32.mrb[0].mxu0
  %v2130 = vadd.f32 0.0, %v2129
  %v2131 = vpop.f32.mrb[0].mxu0
  %2132 = vdwg.mxu0
  %v2134 = vsel %vm107, %v61, 0
  %v2137 = vsel %vm107, %v62, 0
  %2139 = vmatprep.subr.mxu0 0.0
  %2140 = vmatpush1.msra.mxu0 %v100
  %2141 = vmatprep.subr.mxu0 0.0
  %2142 = vmatpush1.msra.mxu0 0.0
  %2143 = vmatprep.subr.mxu0 0.0
  %2144 = vmatpush1.msra.mxu0 0.0
  %2145 = vmatprep.subr.mxu0 0.0
  %2146 = vmatpush1.msra.mxu0 0.0
  %2147 = vmatprep.subr.mxu0 0.0
  %2148 = vmatpush1.msra.mxu0 0.0
  %2149 = vmatprep.subr.mxu0 0.0
  %2150 = vmatpush1.msra.mxu0 0.0
  %2151 = vmatprep.subr.mxu0 0.0
  %2152 = vmatpush1.msra.mxu0 0.0
  %2153 = vmatprep.subr.mxu0 0.0
  %2154 = vmatpush1.msra.mxu0 0.0
  %2155 = vmatprep.subr.mxu0 0.0
  %2156 = vmatpush1.msra.mxu0 0.0
  %2157 = vmatprep.subr.mxu0 0.0
  %2158 = vmatpush1.msra.mxu0 0.0
  %2159 = vmatprep.subr.mxu0 0.0
  %2160 = vmatpush1.msra.mxu0 0.0
  %2161 = vmatprep.subr.mxu0 0.0
  %2162 = vmatpush1.msra.mxu0 0.0
  %2163 = vmatprep.subr.mxu0 0.0
  %2164 = vmatpush1.msra.mxu0 0.0
  %2165 = vmatprep.subr.mxu0 0.0
  %2166 = vmatpush1.msra.mxu0 0.0
  %2167 = vmatprep.subr.mxu0 0.0
  %2168 = vmatpush1.msra.mxu0 0.0
  %2169 = vmatprep.subr.mxu0 0.0
  %2170 = vmatpush1.msra.mxu0 0.0
  %2171 = vmatprep.subr.mxu0 0.0
  %2172 = vmatpush1.msra.mxu0 0.0
  %2173 = vmatprep.subr.mxu0 0.0
  %2174 = vmatpush1.msra.mxu0 0.0
  %2175 = vmatprep.subr.mxu0 0.0
  %2176 = vmatpush1.msra.mxu0 0.0
  %2177 = vmatprep.subr.mxu0 0.0
  %2178 = vmatpush1.msra.mxu0 0.0
  %2179 = vmatprep.subr.mxu0 0.0
  %2180 = vmatpush1.msra.mxu0 0.0
  %2181 = vmatprep.subr.mxu0 0.0
  %2182 = vmatpush1.msra.mxu0 0.0
  %2183 = vmatprep.subr.mxu0 0.0
  %2184 = vmatpush1.msra.mxu0 0.0
  %2185 = vmatprep.subr.mxu0 0.0
  %2186 = vmatpush1.msra.mxu0 0.0
  %2187 = vmatprep.subr.mxu0 0.0
  %2188 = vmatpush1.msra.mxu0 0.0
  %2189 = vmatprep.subr.mxu0 0.0
  %2190 = vmatpush1.msra.mxu0 0.0
  %2191 = vmatprep.subr.mxu0 0.0
  %2192 = vmatpush1.msra.mxu0 0.0
  %2193 = vmatprep.subr.mxu0 0.0
  %2194 = vmatpush1.msra.mxu0 0.0
  %2195 = vmatprep.subr.mxu0 0.0
  %2196 = vmatpush1.msra.mxu0 0.0
  %2197 = vmatprep.subr.mxu0 0.0
  %2198 = vmatpush1.msra.mxu0 0.0
  %2199 = vmatprep.subr.mxu0 0.0
  %2200 = vmatpush1.msra.mxu0 0.0
  %2201 = vmatprep.subr.mxu0 0.0
  %2202 = vmatpush1.msra.mxu0 0.0
  %2203 = vmatprep.mubr.f32.mxu0 0.0
  %2204 = vmatmul.mubr.f32.gmra.mrb[0].mxu0 %v2134
  %v2205 = vpop.f32.mrb[0].mxu0
  %v2206 = vadd.f32 0.0, %v2205
  %v2207 = vpop.f32.mrb[0].mxu0
  %2208 = vmatprep.mubr.f32.mxu0 0.0
  %2209 = vmatmul.mubr.f32.gmra.mrb[0].mxu0 %v2137
  %v2210 = vpop.f32.mrb[0].mxu0
  %v2211 = vadd.f32 0.0, %v2210
  %v2212 = vpop.f32.mrb[0].mxu0
  %2213 = vdwg.mxu0
  %v2215 = vsel %vm107, %v63, 0
  %v2218 = vsel %vm107, %v64, 0
  %2220 = vmatprep.subr.mxu0 0.0
  %2221 = vmatpush1.msra.mxu0 %v101
  %2222 = vmatprep.subr.mxu0 0.0
  %2223 = vmatpush1.msra.mxu0 0.0
  %2224 = vmatprep.subr.mxu0 0.0
  %2225 = vmatpush1.msra.mxu0 0.0
  %2226 = vmatprep.subr.mxu0 0.0
  %2227 = vmatpush1.msra.mxu0 0.0
  %2228 = vmatprep.subr.mxu0 0.0
  %2229 = vmatpush1.msra.mxu0 0.0
  %2230 = vmatprep.subr.mxu0 0.0
  %2231 = vmatpush1.msra.mxu0 0.0
  %2232 = vmatprep.subr.mxu0 0.0
  %2233 = vmatpush1.msra.mxu0 0.0
  %2234 = vmatprep.subr.mxu0 0.0
  %2235 = vmatpush1.msra.mxu0 0.0
  %2236 = vmatprep.subr.mxu0 0.0
  %2237 = vmatpush1.msra.mxu0 0.0
  %2238 = vmatprep.subr.mxu0 0.0
  %2239 = vmatpush1.msra.mxu0 0.0
  %2240 = vmatprep.subr.mxu0 0.0
  %2241 = vmatpush1.msra.mxu0 0.0
  %2242 = vmatprep.subr.mxu0 0.0
  %2243 = vmatpush1.msra.mxu0 0.0
  %2244 = vmatprep.subr.mxu0 0.0
  %2245 = vmatpush1.msra.mxu0 0.0
  %2246 = vmatprep.subr.mxu0 0.0
  %2247 = vmatpush1.msra.mxu0 0.0
  %2248 = vmatprep.subr.mxu0 0.0
  %2249 = vmatpush1.msra.mxu0 0.0
  %2250 = vmatprep.subr.mxu0 0.0
  %2251 = vmatpush1.msra.mxu0 0.0
  %2252 = vmatprep.subr.mxu0 0.0
  %2253 = vmatpush1.msra.mxu0 0.0
  %2254 = vmatprep.subr.mxu0 0.0
  %2255 = vmatpush1.msra.mxu0 0.0
  %2256 = vmatprep.subr.mxu0 0.0
  %2257 = vmatpush1.msra.mxu0 0.0
  %2258 = vmatprep.subr.mxu0 0.0
  %2259 = vmatpush1.msra.mxu0 0.0
  %2260 = vmatprep.subr.mxu0 0.0
  %2261 = vmatpush1.msra.mxu0 0.0
  %2262 = vmatprep.subr.mxu0 0.0
  %2263 = vmatpush1.msra.mxu0 0.0
  %2264 = vmatprep.subr.mxu0 0.0
  %2265 = vmatpush1.msra.mxu0 0.0
  %2266 = vmatprep.subr.mxu0 0.0
  %2267 = vmatpush1.msra.mxu0 0.0
  %2268 = vmatprep.subr.mxu0 0.0
  %2269 = vmatpush1.msra.mxu0 0.0
  %2270 = vmatprep.subr.mxu0 0.0
  %2271 = vmatpush1.msra.mxu0 0.0
  %2272 = vmatprep.subr.mxu0 0.0
  %2273 = vmatpush1.msra.mxu0 0.0
  %2274 = vmatprep.subr.mxu0 0.0
  %2275 = vmatpush1.msra.mxu0 0.0
  %2276 = vmatprep.subr.mxu0 0.0
  %2277 = vmatpush1.msra.mxu0 0.0
  %2278 = vmatprep.subr.mxu0 0.0
  %2279 = vmatpush1.msra.mxu0 0.0
  %2280 = vmatprep.subr.mxu0 0.0
  %2281 = vmatpush1.msra.mxu0 0.0
  %2282 = vmatprep.subr.mxu0 0.0
  %2283 = vmatpush1.msra.mxu0 0.0
  %2284 = vmatprep.mubr.f32.mxu0 0.0
  %2285 = vmatmul.mubr.f32.gmra.mrb[0].mxu0 %v2215
  %v2286 = vpop.f32.mrb[0].mxu0
  %v2287 = vadd.f32 0.0, %v2286
  %v2288 = vpop.f32.mrb[0].mxu0
  %2289 = vmatprep.mubr.f32.mxu0 0.0
  %2290 = vmatmul.mubr.f32.gmra.mrb[0].mxu0 %v2218
  %v2291 = vpop.f32.mrb[0].mxu0
  %v2292 = vadd.f32 0.0, %v2291
  %v2293 = vpop.f32.mrb[0].mxu0
  %2294 = vdwg.mxu0
  %v2296 = vsel %vm107, %v65, 0
  %v2299 = vsel %vm107, %v66, 0
  %2301 = vmatprep.subr.mxu0 0.0
  %2302 = vmatpush1.msra.mxu0 %v102
  %2303 = vmatprep.subr.mxu0 0.0
  %2304 = vmatpush1.msra.mxu0 0.0
  %2305 = vmatprep.subr.mxu0 0.0
  %2306 = vmatpush1.msra.mxu0 0.0
  %2307 = vmatprep.subr.mxu0 0.0
  %2308 = vmatpush1.msra.mxu0 0.0
  %2309 = vmatprep.subr.mxu0 0.0
  %2310 = vmatpush1.msra.mxu0 0.0
  %2311 = vmatprep.subr.mxu0 0.0
  %2312 = vmatpush1.msra.mxu0 0.0
  %2313 = vmatprep.subr.mxu0 0.0
  %2314 = vmatpush1.msra.mxu0 0.0
  %2315 = vmatprep.subr.mxu0 0.0
  %2316 = vmatpush1.msra.mxu0 0.0
  %2317 = vmatprep.subr.mxu0 0.0
  %2318 = vmatpush1.msra.mxu0 0.0
  %2319 = vmatprep.subr.mxu0 0.0
  %2320 = vmatpush1.msra.mxu0 0.0
  %2321 = vmatprep.subr.mxu0 0.0
  %2322 = vmatpush1.msra.mxu0 0.0
  %2323 = vmatprep.subr.mxu0 0.0
  %2324 = vmatpush1.msra.mxu0 0.0
  %2325 = vmatprep.subr.mxu0 0.0
  %2326 = vmatpush1.msra.mxu0 0.0
  %2327 = vmatprep.subr.mxu0 0.0
  %2328 = vmatpush1.msra.mxu0 0.0
  %2329 = vmatprep.subr.mxu0 0.0
  %2330 = vmatpush1.msra.mxu0 0.0
  %2331 = vmatprep.subr.mxu0 0.0
  %2332 = vmatpush1.msra.mxu0 0.0
  %2333 = vmatprep.subr.mxu0 0.0
  %2334 = vmatpush1.msra.mxu0 0.0
  %2335 = vmatprep.subr.mxu0 0.0
  %2336 = vmatpush1.msra.mxu0 0.0
  %2337 = vmatprep.subr.mxu0 0.0
  %2338 = vmatpush1.msra.mxu0 0.0
  %2339 = vmatprep.subr.mxu0 0.0
  %2340 = vmatpush1.msra.mxu0 0.0
  %2341 = vmatprep.subr.mxu0 0.0
  %2342 = vmatpush1.msra.mxu0 0.0
  %2343 = vmatprep.subr.mxu0 0.0
  %2344 = vmatpush1.msra.mxu0 0.0
  %2345 = vmatprep.subr.mxu0 0.0
  %2346 = vmatpush1.msra.mxu0 0.0
  %2347 = vmatprep.subr.mxu0 0.0
  %2348 = vmatpush1.msra.mxu0 0.0
  %2349 = vmatprep.subr.mxu0 0.0
  %2350 = vmatpush1.msra.mxu0 0.0
  %2351 = vmatprep.subr.mxu0 0.0
  %2352 = vmatpush1.msra.mxu0 0.0
  %2353 = vmatprep.subr.mxu0 0.0
  %2354 = vmatpush1.msra.mxu0 0.0
  %2355 = vmatprep.subr.mxu0 0.0
  %2356 = vmatpush1.msra.mxu0 0.0
  %2357 = vmatprep.subr.mxu0 0.0
  %2358 = vmatpush1.msra.mxu0 0.0
  %2359 = vmatprep.subr.mxu0 0.0
  %2360 = vmatpush1.msra.mxu0 0.0
  %2361 = vmatprep.subr.mxu0 0.0
  %2362 = vmatpush1.msra.mxu0 0.0
  %2363 = vmatprep.subr.mxu0 0.0
  %2364 = vmatpush1.msra.mxu0 0.0
  %2365 = vmatprep.mubr.f32.mxu0 0.0
  %2366 = vmatmul.mubr.f32.gmra.mrb[0].mxu0 %v2296
  %v2367 = vpop.f32.mrb[0].mxu0
  %v2368 = vadd.f32 0.0, %v2367
  %v2369 = vpop.f32.mrb[0].mxu0
  %2370 = vmatprep.mubr.f32.mxu0 0.0
  %2371 = vmatmul.mubr.f32.gmra.mrb[0].mxu0 %v2299
  %v2372 = vpop.f32.mrb[0].mxu0
  %v2373 = vadd.f32 0.0, %v2372
  %v2374 = vpop.f32.mrb[0].mxu0
  %2375 = vdwg.mxu0
  %v2377 = vsel %vm107, %v67, 0
  %v2380 = vsel %vm107, %v68, 0
  %2382 = vmatprep.subr.mxu0 0.0
  %2383 = vmatpush1.msra.mxu0 %v103
  %2384 = vmatprep.subr.mxu0 0.0
  %2385 = vmatpush1.msra.mxu0 0.0
  %2386 = vmatprep.subr.mxu0 0.0
  %2387 = vmatpush1.msra.mxu0 0.0
  %2388 = vmatprep.subr.mxu0 0.0
  %2389 = vmatpush1.msra.mxu0 0.0
  %2390 = vmatprep.subr.mxu0 0.0
  %2391 = vmatpush1.msra.mxu0 0.0
  %2392 = vmatprep.subr.mxu0 0.0
  %2393 = vmatpush1.msra.mxu0 0.0
  %2394 = vmatprep.subr.mxu0 0.0
  %2395 = vmatpush1.msra.mxu0 0.0
  %2396 = vmatprep.subr.mxu0 0.0
  %2397 = vmatpush1.msra.mxu0 0.0
  %2398 = vmatprep.subr.mxu0 0.0
  %2399 = vmatpush1.msra.mxu0 0.0
  %2400 = vmatprep.subr.mxu0 0.0
  %2401 = vmatpush1.msra.mxu0 0.0
  %2402 = vmatprep.subr.mxu0 0.0
  %2403 = vmatpush1.msra.mxu0 0.0
  %2404 = vmatprep.subr.mxu0 0.0
  %2405 = vmatpush1.msra.mxu0 0.0
  %2406 = vmatprep.subr.mxu0 0.0
  %2407 = vmatpush1.msra.mxu0 0.0
  %2408 = vmatprep.subr.mxu0 0.0
  %2409 = vmatpush1.msra.mxu0 0.0
  %2410 = vmatprep.subr.mxu0 0.0
  %2411 = vmatpush1.msra.mxu0 0.0
  %2412 = vmatprep.subr.mxu0 0.0
  %2413 = vmatpush1.msra.mxu0 0.0
  %2414 = vmatprep.subr.mxu0 0.0
  %2415 = vmatpush1.msra.mxu0 0.0
  %2416 = vmatprep.subr.mxu0 0.0
  %2417 = vmatpush1.msra.mxu0 0.0
  %2418 = vmatprep.subr.mxu0 0.0
  %2419 = vmatpush1.msra.mxu0 0.0
  %2420 = vmatprep.subr.mxu0 0.0
  %2421 = vmatpush1.msra.mxu0 0.0
  %2422 = vmatprep.subr.mxu0 0.0
  %2423 = vmatpush1.msra.mxu0 0.0
  %2424 = vmatprep.subr.mxu0 0.0
  %2425 = vmatpush1.msra.mxu0 0.0
  %2426 = vmatprep.subr.mxu0 0.0
  %2427 = vmatpush1.msra.mxu0 0.0
  %2428 = vmatprep.subr.mxu0 0.0
  %2429 = vmatpush1.msra.mxu0 0.0
  %2430 = vmatprep.subr.mxu0 0.0
  %2431 = vmatpush1.msra.mxu0 0.0
  %2432 = vmatprep.subr.mxu0 0.0
  %2433 = vmatpush1.msra.mxu0 0.0
  %2434 = vmatprep.subr.mxu0 0.0
  %2435 = vmatpush1.msra.mxu0 0.0
  %2436 = vmatprep.subr.mxu0 0.0
  %2437 = vmatpush1.msra.mxu0 0.0
  %2438 = vmatprep.subr.mxu0 0.0
  %2439 = vmatpush1.msra.mxu0 0.0
  %2440 = vmatprep.subr.mxu0 0.0
  %2441 = vmatpush1.msra.mxu0 0.0
  %2442 = vmatprep.subr.mxu0 0.0
  %2443 = vmatpush1.msra.mxu0 0.0
  %2444 = vmatprep.subr.mxu0 0.0
  %2445 = vmatpush1.msra.mxu0 0.0
  %2446 = vmatprep.mubr.f32.mxu0 0.0
  %2447 = vmatmul.mubr.f32.gmra.mrb[0].mxu0 %v2377
  %v2448 = vpop.f32.mrb[0].mxu0
  %v2449 = vadd.f32 0.0, %v2448
  %v2450 = vpop.f32.mrb[0].mxu0
  %2451 = vmatprep.mubr.f32.mxu0 0.0
  %2452 = vmatmul.mubr.f32.gmra.mrb[0].mxu0 %v2380
  %v2453 = vpop.f32.mrb[0].mxu0
  %v2454 = vadd.f32 0.0, %v2453
  %v2455 = vpop.f32.mrb[0].mxu0
  %2456 = vdwg.mxu0
  %v2458 = vsel %vm107, %v69, 0
  %v2461 = vsel %vm107, %v70, 0
  %2463 = vmatprep.subr.mxu0 0.0
  %2464 = vmatpush1.msra.mxu0 %v104
  %2465 = vmatprep.subr.mxu0 0.0
  %2466 = vmatpush1.msra.mxu0 0.0
  %2467 = vmatprep.subr.mxu0 0.0
  %2468 = vmatpush1.msra.mxu0 0.0
  %2469 = vmatprep.subr.mxu0 0.0
  %2470 = vmatpush1.msra.mxu0 0.0
  %2471 = vmatprep.subr.mxu0 0.0
  %2472 = vmatpush1.msra.mxu0 0.0
  %2473 = vmatprep.subr.mxu0 0.0
  %2474 = vmatpush1.msra.mxu0 0.0
  %2475 = vmatprep.subr.mxu0 0.0
  %2476 = vmatpush1.msra.mxu0 0.0
  %2477 = vmatprep.subr.mxu0 0.0
  %2478 = vmatpush1.msra.mxu0 0.0
  %2479 = vmatprep.subr.mxu0 0.0
  %2480 = vmatpush1.msra.mxu0 0.0
  %2481 = vmatprep.subr.mxu0 0.0
  %2482 = vmatpush1.msra.mxu0 0.0
  %2483 = vmatprep.subr.mxu0 0.0
  %2484 = vmatpush1.msra.mxu0 0.0
  %2485 = vmatprep.subr.mxu0 0.0
  %2486 = vmatpush1.msra.mxu0 0.0
  %2487 = vmatprep.subr.mxu0 0.0
  %2488 = vmatpush1.msra.mxu0 0.0
  %2489 = vmatprep.subr.mxu0 0.0
  %2490 = vmatpush1.msra.mxu0 0.0
  %2491 = vmatprep.subr.mxu0 0.0
  %2492 = vmatpush1.msra.mxu0 0.0
  %2493 = vmatprep.subr.mxu0 0.0
  %2494 = vmatpush1.msra.mxu0 0.0
  %2495 = vmatprep.subr.mxu0 0.0
  %2496 = vmatpush1.msra.mxu0 0.0
  %2497 = vmatprep.subr.mxu0 0.0
  %2498 = vmatpush1.msra.mxu0 0.0
  %2499 = vmatprep.subr.mxu0 0.0
  %2500 = vmatpush1.msra.mxu0 0.0
  %2501 = vmatprep.subr.mxu0 0.0
  %2502 = vmatpush1.msra.mxu0 0.0
  %2503 = vmatprep.subr.mxu0 0.0
  %2504 = vmatpush1.msra.mxu0 0.0
  %2505 = vmatprep.subr.mxu0 0.0
  %2506 = vmatpush1.msra.mxu0 0.0
  %2507 = vmatprep.subr.mxu0 0.0
  %2508 = vmatpush1.msra.mxu0 0.0
  %2509 = vmatprep.subr.mxu0 0.0
  %2510 = vmatpush1.msra.mxu0 0.0
  %2511 = vmatprep.subr.mxu0 0.0
  %2512 = vmatpush1.msra.mxu0 0.0
  %2513 = vmatprep.subr.mxu0 0.0
  %2514 = vmatpush1.msra.mxu0 0.0
  %2515 = vmatprep.subr.mxu0 0.0
  %2516 = vmatpush1.msra.mxu0 0.0
  %2517 = vmatprep.subr.mxu0 0.0
  %2518 = vmatpush1.msra.mxu0 0.0
  %2519 = vmatprep.subr.mxu0 0.0
  %2520 = vmatpush1.msra.mxu0 0.0
  %2521 = vmatprep.subr.mxu0 0.0
  %2522 = vmatpush1.msra.mxu0 0.0
  %2523 = vmatprep.subr.mxu0 0.0
  %2524 = vmatpush1.msra.mxu0 0.0
  %2525 = vmatprep.subr.mxu0 0.0
  %2526 = vmatpush1.msra.mxu0 0.0
  %2527 = vmatprep.mubr.f32.mxu0 0.0
  %2528 = vmatmul.mubr.f32.gmra.mrb[0].mxu0 %v2458
  %v2529 = vpop.f32.mrb[0].mxu0
  %v2530 = vadd.f32 0.0, %v2529
  %v2531 = vpop.f32.mrb[0].mxu0
  %2532 = vmatprep.mubr.f32.mxu0 0.0
  %2533 = vmatmul.mubr.f32.gmra.mrb[0].mxu0 %v2461
  %v2534 = vpop.f32.mrb[0].mxu0
  %v2535 = vadd.f32 0.0, %v2534
  %v2536 = vpop.f32.mrb[0].mxu0
  %2537 = vdwg.mxu0
  %v2539 = vsel %vm107, %v71, 0
  %v2542 = vsel %vm107, %v72, 0
  %2544 = vmatprep.subr.mxu0 0.0
  %2545 = vmatpush1.msra.mxu0 %v105
  %2546 = vmatprep.subr.mxu0 0.0
  %2547 = vmatpush1.msra.mxu0 0.0
  %2548 = vmatprep.subr.mxu0 0.0
  %2549 = vmatpush1.msra.mxu0 0.0
  %2550 = vmatprep.subr.mxu0 0.0
  %2551 = vmatpush1.msra.mxu0 0.0
  %2552 = vmatprep.subr.mxu0 0.0
  %2553 = vmatpush1.msra.mxu0 0.0
  %2554 = vmatprep.subr.mxu0 0.0
  %2555 = vmatpush1.msra.mxu0 0.0
  %2556 = vmatprep.subr.mxu0 0.0
  %2557 = vmatpush1.msra.mxu0 0.0
  %2558 = vmatprep.subr.mxu0 0.0
  %2559 = vmatpush1.msra.mxu0 0.0
  %2560 = vmatprep.subr.mxu0 0.0
  %2561 = vmatpush1.msra.mxu0 0.0
  %2562 = vmatprep.subr.mxu0 0.0
  %2563 = vmatpush1.msra.mxu0 0.0
  %2564 = vmatprep.subr.mxu0 0.0
  %2565 = vmatpush1.msra.mxu0 0.0
  %2566 = vmatprep.subr.mxu0 0.0
  %2567 = vmatpush1.msra.mxu0 0.0
  %2568 = vmatprep.subr.mxu0 0.0
  %2569 = vmatpush1.msra.mxu0 0.0
  %2570 = vmatprep.subr.mxu0 0.0
  %2571 = vmatpush1.msra.mxu0 0.0
  %2572 = vmatprep.subr.mxu0 0.0
  %2573 = vmatpush1.msra.mxu0 0.0
  %2574 = vmatprep.subr.mxu0 0.0
  %2575 = vmatpush1.msra.mxu0 0.0
  %2576 = vmatprep.subr.mxu0 0.0
  %2577 = vmatpush1.msra.mxu0 0.0
  %2578 = vmatprep.subr.mxu0 0.0
  %2579 = vmatpush1.msra.mxu0 0.0
  %2580 = vmatprep.subr.mxu0 0.0
  %2581 = vmatpush1.msra.mxu0 0.0
  %2582 = vmatprep.subr.mxu0 0.0
  %2583 = vmatpush1.msra.mxu0 0.0
  %2584 = vmatprep.subr.mxu0 0.0
  %2585 = vmatpush1.msra.mxu0 0.0
  %2586 = vmatprep.subr.mxu0 0.0
  %2587 = vmatpush1.msra.mxu0 0.0
  %2588 = vmatprep.subr.mxu0 0.0
  %2589 = vmatpush1.msra.mxu0 0.0
  %2590 = vmatprep.subr.mxu0 0.0
  %2591 = vmatpush1.msra.mxu0 0.0
  %2592 = vmatprep.subr.mxu0 0.0
  %2593 = vmatpush1.msra.mxu0 0.0
  %2594 = vmatprep.subr.mxu0 0.0
  %2595 = vmatpush1.msra.mxu0 0.0
  %2596 = vmatprep.subr.mxu0 0.0
  %2597 = vmatpush1.msra.mxu0 0.0
  %2598 = vmatprep.subr.mxu0 0.0
  %2599 = vmatpush1.msra.mxu0 0.0
  %2600 = vmatprep.subr.mxu0 0.0
  %2601 = vmatpush1.msra.mxu0 0.0
  %2602 = vmatprep.subr.mxu0 0.0
  %2603 = vmatpush1.msra.mxu0 0.0
  %2604 = vmatprep.subr.mxu0 0.0
  %2605 = vmatpush1.msra.mxu0 0.0
  %2606 = vmatprep.subr.mxu0 0.0
  %2607 = vmatpush1.msra.mxu0 0.0
  %2608 = vmatprep.mubr.f32.mxu0 0.0
  %2609 = vmatmul.mubr.f32.gmra.mrb[0].mxu0 %v2539
  %v2610 = vpop.f32.mrb[0].mxu0
  %v2611 = vadd.f32 0.0, %v2610
  %v2612 = vpop.f32.mrb[0].mxu0
  %2613 = vmatprep.mubr.f32.mxu0 0.0
  %2614 = vmatmul.mubr.f32.gmra.mrb[0].mxu0 %v2542
  %v2615 = vpop.f32.mrb[0].mxu0
  %v2616 = vadd.f32 0.0, %v2615
  %v2617 = vpop.f32.mrb[0].mxu0
  %2618 = vdwg.mxu0
  %v2620 = vsel %vm107, %v73, 0
  %v2623 = vsel %vm107, %v74, 0
  %2625 = vmatprep.subr.mxu0 0.0
  %2626 = vmatpush1.msra.mxu0 %v106
  %2627 = vmatprep.subr.mxu0 0.0
  %2628 = vmatpush1.msra.mxu0 0.0
  %2629 = vmatprep.subr.mxu0 0.0
  %2630 = vmatpush1.msra.mxu0 0.0
  %2631 = vmatprep.subr.mxu0 0.0
  %2632 = vmatpush1.msra.mxu0 0.0
  %2633 = vmatprep.subr.mxu0 0.0
  %2634 = vmatpush1.msra.mxu0 0.0
  %2635 = vmatprep.subr.mxu0 0.0
  %2636 = vmatpush1.msra.mxu0 0.0
  %2637 = vmatprep.subr.mxu0 0.0
  %2638 = vmatpush1.msra.mxu0 0.0
  %2639 = vmatprep.subr.mxu0 0.0
  %2640 = vmatpush1.msra.mxu0 0.0
  %2641 = vmatprep.subr.mxu0 0.0
  %2642 = vmatpush1.msra.mxu0 0.0
  %2643 = vmatprep.subr.mxu0 0.0
  %2644 = vmatpush1.msra.mxu0 0.0
  %2645 = vmatprep.subr.mxu0 0.0
  %2646 = vmatpush1.msra.mxu0 0.0
  %2647 = vmatprep.subr.mxu0 0.0
  %2648 = vmatpush1.msra.mxu0 0.0
  %2649 = vmatprep.subr.mxu0 0.0
  %2650 = vmatpush1.msra.mxu0 0.0
  %2651 = vmatprep.subr.mxu0 0.0
  %2652 = vmatpush1.msra.mxu0 0.0
  %2653 = vmatprep.subr.mxu0 0.0
  %2654 = vmatpush1.msra.mxu0 0.0
  %2655 = vmatprep.subr.mxu0 0.0
  %2656 = vmatpush1.msra.mxu0 0.0
  %2657 = vmatprep.subr.mxu0 0.0
  %2658 = vmatpush1.msra.mxu0 0.0
  %2659 = vmatprep.subr.mxu0 0.0
  %2660 = vmatpush1.msra.mxu0 0.0
  %2661 = vmatprep.subr.mxu0 0.0
  %2662 = vmatpush1.msra.mxu0 0.0
  %2663 = vmatprep.subr.mxu0 0.0
  %2664 = vmatpush1.msra.mxu0 0.0
  %2665 = vmatprep.subr.mxu0 0.0
  %2666 = vmatpush1.msra.mxu0 0.0
  %2667 = vmatprep.subr.mxu0 0.0
  %2668 = vmatpush1.msra.mxu0 0.0
  %2669 = vmatprep.subr.mxu0 0.0
  %2670 = vmatpush1.msra.mxu0 0.0
  %2671 = vmatprep.subr.mxu0 0.0
  %2672 = vmatpush1.msra.mxu0 0.0
  %2673 = vmatprep.subr.mxu0 0.0
  %2674 = vmatpush1.msra.mxu0 0.0
  %2675 = vmatprep.subr.mxu0 0.0
  %2676 = vmatpush1.msra.mxu0 0.0
  %2677 = vmatprep.subr.mxu0 0.0
  %2678 = vmatpush1.msra.mxu0 0.0
  %2679 = vmatprep.subr.mxu0 0.0
  %2680 = vmatpush1.msra.mxu0 0.0
  %2681 = vmatprep.subr.mxu0 0.0
  %2682 = vmatpush1.msra.mxu0 0.0
  %2683 = vmatprep.subr.mxu0 0.0
  %2684 = vmatpush1.msra.mxu0 0.0
  %2685 = vmatprep.subr.mxu0 0.0
  %2686 = vmatpush1.msra.mxu0 0.0
  %2687 = vmatprep.subr.mxu0 0.0
  %2688 = vmatpush1.msra.mxu0 0.0
  %2689 = vmatprep.mubr.f32.mxu0 0.0
  %2690 = vmatmul.mubr.f32.gmra.mrb[0].mxu0 %v2620
  %v2691 = vpop.f32.mrb[0].mxu0
  %v2692 = vadd.f32 0.0, %v2691
  %v2693 = vpop.f32.mrb[0].mxu0
  %2694 = vmatprep.mubr.f32.mxu0 0.0
  %2695 = vmatmul.mubr.f32.gmra.mrb[0].mxu0 %v2623
  %v2696 = vpop.f32.mrb[0].mxu0
  %v2697 = vadd.f32 0.0, %v2696
  %v2698 = vpop.f32.mrb[0].mxu0
  %2699 = vdwg.mxu0
  %vm2700 = vcmask 326656
  %2701 = vst.msk [vmem:[%s2] sm:$0xff] %vm2700, %v181
  %2702 = vst.msk [vmem:[%s2 + $0x8] sm:$0xff] %vm2700, %v186
  %2703 = vst.msk [vmem:[%s2 + $0x10] sm:$0xff] %vm2700, %v262
  %2704 = vst.msk [vmem:[%s2 + $0x18] sm:$0xff] %vm2700, %v267
  %2705 = vst.msk [vmem:[%s2 + $0x20] sm:$0xff] %vm2700, %v343
  %2706 = vst.msk [vmem:[%s2 + $0x28] sm:$0xff] %vm2700, %v348
  %2707 = vst.msk [vmem:[%s2 + $0x30] sm:$0xff] %vm2700, %v424
  %2708 = vst.msk [vmem:[%s2 + $0x38] sm:$0xff] %vm2700, %v429
  %2709 = vst.msk [vmem:[%s2 + $0x40] sm:$0xff] %vm2700, %v505
  %2710 = vst.msk [vmem:[%s2 + $0x48] sm:$0xff] %vm2700, %v510
  %2711 = vst.msk [vmem:[%s2 + $0x50] sm:$0xff] %vm2700, %v586
  %2712 = vst.msk [vmem:[%s2 + $0x58] sm:$0xff] %vm2700, %v591
  %2713 = vst.msk [vmem:[%s2 + $0x60] sm:$0xff] %vm2700, %v667
  %2714 = vst.msk [vmem:[%s2 + $0x68] sm:$0xff] %vm2700, %v672
  %2715 = vst.msk [vmem:[%s2 + $0x70] sm:$0xff] %vm2700, %v748
  %2716 = vst.msk [vmem:[%s2 + $0x78] sm:$0xff] %vm2700, %v753
  %2717 = vst.msk [vmem:[%s2 + $0x80] sm:$0xff] %vm2700, %v829
  %2718 = vst.msk [vmem:[%s2 + $0x88] sm:$0xff] %vm2700, %v834
  %2719 = vst.msk [vmem:[%s2 + $0x90] sm:$0xff] %vm2700, %v910
  %2720 = vst.msk [vmem:[%s2 + $0x98] sm:$0xff] %vm2700, %v915
  %2721 = vst.msk [vmem:[%s2 + $0xa0] sm:$0xff] %vm2700, %v991
  %2722 = vst.msk [vmem:[%s2 + $0xa8] sm:$0xff] %vm2700, %v996
  %2723 = vst.msk [vmem:[%s2 + $0xb0] sm:$0xff] %vm2700, %v1072
  %2724 = vst.msk [vmem:[%s2 + $0xb8] sm:$0xff] %vm2700, %v1077
  %2725 = vst.msk [vmem:[%s2 + $0xc0] sm:$0xff] %vm2700, %v1153
  %2726 = vst.msk [vmem:[%s2 + $0xc8] sm:$0xff] %vm2700, %v1158
  %2727 = vst.msk [vmem:[%s2 + $0xd0] sm:$0xff] %vm2700, %v1234
  %2728 = vst.msk [vmem:[%s2 + $0xd8] sm:$0xff] %vm2700, %v1239
  %2729 = vst.msk [vmem:[%s2 + $0xe0] sm:$0xff] %vm2700, %v1315
  %2730 = vst.msk [vmem:[%s2 + $0xe8] sm:$0xff] %vm2700, %v1320
  %2731 = vst.msk [vmem:[%s2 + $0xf0] sm:$0xff] %vm2700, %v1396
  %2732 = vst.msk [vmem:[%s2 + $0xf8] sm:$0xff] %vm2700, %v1401
  %2733 = vst.msk [vmem:[%s2 + $0x100] sm:$0xff] %vm2700, %v1477
  %2734 = vst.msk [vmem:[%s2 + $0x108] sm:$0xff] %vm2700, %v1482
  %2735 = vst.msk [vmem:[%s2 + $0x110] sm:$0xff] %vm2700, %v1558
  %2736 = vst.msk [vmem:[%s2 + $0x118] sm:$0xff] %vm2700, %v1563
  %2737 = vst.msk [vmem:[%s2 + $0x120] sm:$0xff] %vm2700, %v1639
  %2738 = vst.msk [vmem:[%s2 + $0x128] sm:$0xff] %vm2700, %v1644
  %2739 = vst.msk [vmem:[%s2 + $0x130] sm:$0xff] %vm2700, %v1720
  %2740 = vst.msk [vmem:[%s2 + $0x138] sm:$0xff] %vm2700, %v1725
  %2741 = vst.msk [vmem:[%s2 + $0x140] sm:$0xff] %vm2700, %v1801
  %2742 = vst.msk [vmem:[%s2 + $0x148] sm:$0xff] %vm2700, %v1806
  %2743 = vst.msk [vmem:[%s2 + $0x150] sm:$0xff] %vm2700, %v1882
  %2744 = vst.msk [vmem:[%s2 + $0x158] sm:$0xff] %vm2700, %v1887
  %2745 = vst.msk [vmem:[%s2 + $0x160] sm:$0xff] %vm2700, %v1963
  %2746 = vst.msk [vmem:[%s2 + $0x168] sm:$0xff] %vm2700, %v1968
  %2747 = vst.msk [vmem:[%s2 + $0x170] sm:$0xff] %vm2700, %v2044
  %2748 = vst.msk [vmem:[%s2 + $0x178] sm:$0xff] %vm2700, %v2049
  %2749 = vst.msk [vmem:[%s2 + $0x180] sm:$0xff] %vm2700, %v2125
  %2750 = vst.msk [vmem:[%s2 + $0x188] sm:$0xff] %vm2700, %v2130
  %2751 = vst.msk [vmem:[%s2 + $0x190] sm:$0xff] %vm2700, %v2206
  %2752 = vst.msk [vmem:[%s2 + $0x198] sm:$0xff] %vm2700, %v2211
  %2753 = vst.msk [vmem:[%s2 + $0x1a0] sm:$0xff] %vm2700, %v2287
  %2754 = vst.msk [vmem:[%s2 + $0x1a8] sm:$0xff] %vm2700, %v2292
  %2755 = vst.msk [vmem:[%s2 + $0x1b0] sm:$0xff] %vm2700, %v2368
  %2756 = vst.msk [vmem:[%s2 + $0x1b8] sm:$0xff] %vm2700, %v2373
  %2757 = vst.msk [vmem:[%s2 + $0x1c0] sm:$0xff] %vm2700, %v2449
  %2758 = vst.msk [vmem:[%s2 + $0x1c8] sm:$0xff] %vm2700, %v2454
  %2759 = vst.msk [vmem:[%s2 + $0x1d0] sm:$0xff] %vm2700, %v2530
  %2760 = vst.msk [vmem:[%s2 + $0x1d8] sm:$0xff] %vm2700, %v2535
  %2761 = vst.msk [vmem:[%s2 + $0x1e0] sm:$0xff] %vm2700, %v2611
  %2762 = vst.msk [vmem:[%s2 + $0x1e8] sm:$0xff] %vm2700, %v2616
  %2763 = vst.msk [vmem:[%s2 + $0x1f0] sm:$0xff] %vm2700, %v2692
  %2764 = vst.msk [vmem:[%s2 + $0x1f8] sm:$0xff] %vm2700, %v2697
  // Predicated region
  $region10: #{y_net_forward.2} parent=0 // pred_check
    _
  $region11: #{y_net_forward.2} parent=0 // pred_check_branch
    %2766 = sbr.rel (0) target = $region13
  $region12: #{y_net_forward.2} parent=0 // pred_region
    _
  $region13: #{y_net_forward.2} parent=0 // pred_fallthru
    _
  // Predicated region
  $region14: #{y_net_forward.2} parent=0 // pred_check
    _
  $region15: #{y_net_forward.2} parent=0 // pred_check_branch
    %2768 = sbr.rel (0) target = $region17
  $region16: #{y_net_forward.2} parent=0 // pred_region
    _
  $region17: #{y_net_forward.2} parent=0 // pred_fallthru
    _

</llo_original>
